<compile_context>
chip_gen: v7x
topology: tpu7x:2x2x1
jax: 0.10.0
libtpu: 0.0.40
codegen_flags: <defaults>
</compile_context>

<pallas_src>
from functools import partial

import jax
import jax.numpy as jnp
import numpy as np
from jax.experimental import pallas as pl
from jax.experimental.pallas import tpu as pltpu

BN_EPS = 1e-5
OUT_PAD = 128  # lane-dense head output width (sliced to 2*z_dim in the wrapper)


# ---------------------------------------------------------------------------
# Fused Pallas kernel: conv1+BN1+ReLU -> conv2+BN2+ReLU -> mean-pool -> 1x1 head
# ---------------------------------------------------------------------------
def priori_fused_kernel(p1_ref, w1_ref, g1_ref, bt1_ref,
                        sel2_ref, w2s_ref, g2_ref, bt2_ref,
                        pool_ref, w3_ref, b3_ref, o_ref):
    f32 = jnp.float32

    # ---- stage 1: (B*Ho1*Wo1, K1) @ (K1, C1), BatchNorm (training) + ReLU --
    y1 = jnp.dot(p1_ref[...], w1_ref[...], preferred_element_type=f32)
    mu1 = jnp.mean(y1, axis=0, keepdims=True)
    var1 = jnp.mean((y1 - mu1) ** 2, axis=0, keepdims=True)
    h1 = jnp.maximum(
        (y1 - mu1) * jax.lax.rsqrt(var1 + BN_EPS) * g1_ref[...] + bt1_ref[...],
        0.0)                                                # (M1, C1)

    # ---- stage 2: stride-2 4x4 conv as sum over 16 kernel positions --------
    # y2 = sum_blk  sel2[blk] @ h1 @ w2s[blk]   (sel2[blk] is a constant 0/1
    # gather matrix encoding the stride-2 window + zero padding).
    n_blk = sel2_ref.shape[0]
    y2 = jnp.zeros((sel2_ref.shape[1], w2s_ref.shape[2]), f32)
    for blk in range(n_blk):                                # static unroll (16)
        gathered = jnp.dot(sel2_ref[blk], h1, preferred_element_type=f32)
        y2 = y2 + jnp.dot(gathered, w2s_ref[blk], preferred_element_type=f32)
    mu2 = jnp.mean(y2, axis=0, keepdims=True)
    var2 = jnp.mean((y2 - mu2) ** 2, axis=0, keepdims=True)
    h2 = jnp.maximum(
        (y2 - mu2) * jax.lax.rsqrt(var2 + BN_EPS) * g2_ref[...] + bt2_ref[...],
        0.0)                                                # (M2, C2)

    # ---- head: mean over H,W (1/S folded into pool matrix) + 1x1 conv ------
    pooled = jnp.dot(pool_ref[...], h2, preferred_element_type=f32)   # (B, C2)
    o_ref[...] = (jnp.dot(pooled, w3_ref[...], preferred_element_type=f32)
                  + b3_ref[...])                            # (B, OUT_PAD)


# ---------------------------------------------------------------------------
# Trace-time helpers (all static-shape; run under jit once)
# ---------------------------------------------------------------------------
def _im2col_nhwc(x_nhwc, kh, kw, stride, pad):
    """NHWC -> (B*Ho*Wo, kh*kw*C); row order (b,ho,wo), col order (kh,kw,c)."""
    B, H, W, C = x_nhwc.shape
    xp = jnp.pad(x_nhwc, ((0, 0), (pad, pad), (pad, pad), (0, 0)))
    Ho = (H + 2 * pad - kh) // stride + 1
    Wo = (W + 2 * pad - kw) // stride + 1
    cols = []
    for i in range(kh):
        for j in range(kw):
            cols.append(xp[:, i:i + stride * Ho:stride,
                           j:j + stride * Wo:stride, :])
    p = jnp.stack(cols, axis=3)                             # (B,Ho,Wo,kh*kw,C)
    return p.reshape(B * Ho * Wo, kh * kw * C), Ho, Wo


def _conv2_selection(B, H1, W1, kh, kw, stride, pad):
    """0/1 gather matrices for an in-kernel stride-2 conv on a (B,H1,W1,C) map."""
    Ho = (H1 + 2 * pad - kh) // stride + 1
    Wo = (W1 + 2 * pad - kw) // stride + 1
    M2, M1 = B * Ho * Wo, B * H1 * W1
    sel = np.zeros((kh * kw, M2, M1), np.float32)
    for b in range(B):
        for ho in range(Ho):
            for wo in range(Wo):
                r2 = (b * Ho + ho) * Wo + wo
                for i in range(kh):
                    for j in range(kw):
                        h = stride * ho + i - pad
                        w = stride * wo + j - pad
                        if 0 <= h < H1 and 0 <= w < W1:
                            sel[i * kw + j, r2, (b * H1 + h) * W1 + w] = 1.0
    return sel, Ho, Wo


def _pool_matrix(B, S):
    pm = np.zeros((B, B * S), np.float32)
    for b in range(B):
        pm[b, b * S:(b + 1) * S] = 1.0 / S
    return pm


# ---------------------------------------------------------------------------
# Parameters (kaiming conv weights, normal head bias — matches the module init)
# ---------------------------------------------------------------------------
def init_params(key, input_channels, filters, z_dim):
    ks = jax.random.split(key, 6)
    f32 = jnp.float32

    def kaiming(k, shape, fan_in):
        return jax.random.normal(k, shape, f32) * np.sqrt(2.0 / fan_in)

    return {
        # Conv2d(Cin, filters, 4, stride=2, padding=1) + BatchNorm2d(filters)
        "w1": kaiming(ks[0], (filters, input_channels, 4, 4), input_channels * 16),
        "b1": 0.1 * jax.random.normal(ks[3], (filters,), f32),
        "g1": jnp.ones((filters,), f32),
        "bt1": jnp.zeros((filters,), f32),
        # Conv2d(filters, 2*filters, 4, stride=2, padding=1) + BatchNorm2d
        "w2": kaiming(ks[1], (2 * filters, filters, 4, 4), filters * 16),
        "b2": 0.1 * jax.random.normal(ks[4], (2 * filters,), f32),
        "g2": jnp.ones((2 * filters,), f32),
        "bt2": jnp.zeros((2 * filters,), f32),
        # conv_layer: Conv2d(2*filters, 2*z_dim, 1); kaiming weight, normal bias
        "w3": kaiming(ks[2], (2 * z_dim, 2 * filters, 1, 1), 2 * filters),
        "b3": jax.random.normal(ks[5], (2 * z_dim,), f32),
    }


# ---------------------------------------------------------------------------
# Forward (jitted; exactly one pallas_call)
# ---------------------------------------------------------------------------
@partial(jax.jit, static_argnames=("filters", "z_dim"))
def priori_forward(params, x, filters, z_dim):
    B, Cin, H, W = x.shape
    c1, c2, zout = filters, 2 * filters, 2 * z_dim
    f32 = jnp.float32

    # channels-last once, never transpose back
    x_nhwc = jnp.transpose(x, (0, 2, 3, 1))
    p1, Ho1, Wo1 = _im2col_nhwc(x_nhwc, 4, 4, 2, 1)          # (B*Ho1*Wo1, 16*Cin)

    # weights in channels-last matmul layout
    w1m = jnp.transpose(params["w1"], (2, 3, 1, 0)).reshape(16 * Cin, c1)
    w2s = jnp.transpose(params["w2"], (2, 3, 1, 0)).reshape(16, c1, c2)

    # constant gather / pooling matrices (built once at trace time)
    sel_np, Ho2, Wo2 = _conv2_selection(B, Ho1, Wo1, 4, 4, 2, 1)
    sel = jnp.asarray(sel_np)
    pool = jnp.asarray(_pool_matrix(B, Ho2 * Wo2))

    # lane-dense head weights: pad 2*z_dim -> 128 output lanes
    w3m = jnp.zeros((c2, OUT_PAD), f32).at[:, :zout].set(
        params["w3"].reshape(zout, c2).T)
    b3m = jnp.zeros((1, OUT_PAD), f32).at[:, :zout].set(
        params["b3"].reshape(1, zout))

    out = pl.pallas_call(
        priori_fused_kernel,
        out_shape=jax.ShapeDtypeStruct((B, OUT_PAD), f32),
        in_specs=[pl.BlockSpec(memory_space=pltpu.MemorySpace.VMEM)] * 11,
        out_specs=pl.BlockSpec(memory_space=pltpu.MemorySpace.VMEM),
    )(p1, w1m,
      params["g1"].reshape(1, c1), params["bt1"].reshape(1, c1),
      sel, w2s,
      params["g2"].reshape(1, c2), params["bt2"].reshape(1, c2),
      pool, w3m, b3m)

    mls = out[:, :zout]
    mu = mls[:, :z_dim]
    log_sigma = mls[:, z_dim:]
    sigma = jnp.exp(log_sigma)
    # TODO(synk): torch.distributions.Independent(Normal(mu, exp(log_sigma)), 1)
    # has no Pallas/JAX-array equivalent; return (mu, log_sigma, sigma) instead.
    return mu, log_sigma, sigma


# ---------------------------------------------------------------------------
# Pure-JAX reference (faithful: conv bias + BN affine), HIGHEST precision
# ---------------------------------------------------------------------------
def reference_forward(params, x, filters, z_dim):
    hi = jax.lax.Precision.HIGHEST

    def conv_bn_relu(inp, w, b, g, bt):
        y = jax.lax.conv_general_dilated(
            inp, w, window_strides=(2, 2), padding=((1, 1), (1, 1)),
            dimension_numbers=("NCHW", "OIHW", "NCHW"), precision=hi)
        y = y + b.reshape(1, -1, 1, 1)
        mu = jnp.mean(y, axis=(0, 2, 3), keepdims=True)
        var = jnp.mean((y - mu) ** 2, axis=(0, 2, 3), keepdims=True)
        yhat = (y - mu) / jnp.sqrt(var + BN_EPS)
        return jnp.maximum(yhat * g.reshape(1, -1, 1, 1) + bt.reshape(1, -1, 1, 1),
                           0.0)

    h1 = conv_bn_relu(x, params["w1"], params["b1"], params["g1"], params["bt1"])
    h2 = conv_bn_relu(h1, params["w2"], params["b2"], params["g2"], params["bt2"])
    pz = jnp.mean(h2, axis=(2, 3))                           # (B, 2*filters)
    w3 = params["w3"].reshape(2 * z_dim, -1)
    mls = jnp.dot(pz, w3.T, precision=hi) + params["b3"]
    return mls[:, :z_dim], mls[:, z_dim:]


if __name__ == "__main__":
    # Module hyper-parameters (featureDim is unused in priori.forward).
    input_channels, filters, z_dim, featureDim = 4, 8, 6, 32

    key = jax.random.PRNGKey(0)
    kx, kp = jax.random.split(key)
    x = jax.random.normal(kx, (2, input_channels, 16, 16), jnp.float32)
    params = init_params(kp, input_channels, filters, z_dim)

    mu, log_sigma, sigma = jax.block_until_ready(
        priori_forward(params, x, filters, z_dim))

    mu_ref, ls_ref = reference_forward(params, x, filters, z_dim)
    # kernel matmuls use default (fast MXU) precision -> compare loosely
    np.testing.assert_allclose(np.asarray(mu), np.asarray(mu_ref),
                               rtol=2e-2, atol=3e-2)
    np.testing.assert_allclose(np.asarray(log_sigma), np.asarray(ls_ref),
                               rtol=2e-2, atol=3e-2)
    assert mu.shape == (2, z_dim) and log_sigma.shape == (2, z_dim)
    assert sigma.shape == (2, z_dim)
    print("KERNEL_OK")
</pallas_src>

<mosaic_0001>
module attributes {stable_mosaic.version = 11 : i64} {
  func.func @priori_fused_kernel(%arg0: memref<128x64xf32, #tpu.memory_space<vmem>>, %arg1: memref<64x8xf32, #tpu.memory_space<vmem>>, %arg2: memref<1x8xf32, #tpu.memory_space<vmem>>, %arg3: memref<1x8xf32, #tpu.memory_space<vmem>>, %arg4: memref<16x32x128xf32, #tpu.memory_space<vmem>>, %arg5: memref<16x8x16xf32, #tpu.memory_space<vmem>>, %arg6: memref<1x16xf32, #tpu.memory_space<vmem>>, %arg7: memref<1x16xf32, #tpu.memory_space<vmem>>, %arg8: memref<2x32xf32, #tpu.memory_space<vmem>>, %arg9: memref<16x128xf32, #tpu.memory_space<vmem>>, %arg10: memref<1x128xf32, #tpu.memory_space<vmem>>, %arg11: memref<2x128xf32, #tpu.memory_space<vmem>>) attributes {dimension_semantics = [], scalar_prefetch = 0 : i64, scratch_operands = 0 : i64, tpu.core_type = #tpu.core_type<tc>} {
    %c0 = arith.constant 0 : index
    %c0_0 = arith.constant 0 : index
    %0 = vector.load %arg0[%c0, %c0_0] : memref<128x64xf32, #tpu.memory_space<vmem>>, vector<128x64xf32>
    %c0_1 = arith.constant 0 : index
    %c0_2 = arith.constant 0 : index
    %1 = vector.load %arg1[%c0_1, %c0_2] : memref<64x8xf32, #tpu.memory_space<vmem>>, vector<64x8xf32>
    %cst = arith.constant dense<0.000000e+00> : vector<128x8xf32>
    %2 = tpu.matmul %0, %1, %cst {dimension_numbers = #tpu.dot_dimension_numbers<[1], [0], [0], [1], [0, 0, 1, 1], [], []>} : vector<128x64xf32>, vector<64x8xf32>, vector<128x8xf32> -> vector<128x8xf32>
    %cst_3 = arith.constant dense<0.000000e+00> : vector<8xf32>
    %3 = vector.multi_reduction <add>, %2, %cst_3 [0] : vector<128x8xf32> to vector<8xf32>
    %4 = vector.shape_cast %3 : vector<8xf32> to vector<1x8xf32>
    %cst_4 = arith.constant 1.280000e+02 : f32
    %5 = vector.broadcast %cst_4 : f32 to vector<1x8xf32>
    %6 = arith.divf %4, %5 : vector<1x8xf32>
    %7 = vector.broadcast %6 : vector<1x8xf32> to vector<128x8xf32>
    %8 = arith.subf %2, %7 : vector<128x8xf32>
    %9 = arith.mulf %8, %8 : vector<128x8xf32>
    %cst_5 = arith.constant dense<0.000000e+00> : vector<8xf32>
    %10 = vector.multi_reduction <add>, %9, %cst_5 [0] : vector<128x8xf32> to vector<8xf32>
    %11 = vector.shape_cast %10 : vector<8xf32> to vector<1x8xf32>
    %cst_6 = arith.constant 1.280000e+02 : f32
    %12 = vector.broadcast %cst_6 : f32 to vector<1x8xf32>
    %13 = arith.divf %11, %12 : vector<1x8xf32>
    %14 = vector.broadcast %6 : vector<1x8xf32> to vector<128x8xf32>
    %15 = arith.subf %2, %14 : vector<128x8xf32>
    %cst_7 = arith.constant 9.99999974E-6 : f32
    %16 = vector.broadcast %cst_7 : f32 to vector<1x8xf32>
    %17 = arith.addf %13, %16 : vector<1x8xf32>
    %18 = math.rsqrt %17 : vector<1x8xf32>
    %19 = vector.broadcast %18 : vector<1x8xf32> to vector<128x8xf32>
    %20 = arith.mulf %15, %19 : vector<128x8xf32>
    %c0_8 = arith.constant 0 : index
    %c0_9 = arith.constant 0 : index
    %21 = vector.load %arg2[%c0_8, %c0_9] : memref<1x8xf32, #tpu.memory_space<vmem>>, vector<1x8xf32>
    %22 = vector.broadcast %21 : vector<1x8xf32> to vector<128x8xf32>
    %23 = arith.mulf %20, %22 : vector<128x8xf32>
    %c0_10 = arith.constant 0 : index
    %c0_11 = arith.constant 0 : index
    %24 = vector.load %arg3[%c0_10, %c0_11] : memref<1x8xf32, #tpu.memory_space<vmem>>, vector<1x8xf32>
    %25 = vector.broadcast %24 : vector<1x8xf32> to vector<128x8xf32>
    %26 = arith.addf %23, %25 : vector<128x8xf32>
    %cst_12 = arith.constant 0.000000e+00 : f32
    %27 = vector.broadcast %cst_12 : f32 to vector<128x8xf32>
    %28 = arith.maximumf %26, %27 : vector<128x8xf32>
    %cst_13 = arith.constant 0.000000e+00 : f32
    %29 = vector.broadcast %cst_13 : f32 to vector<32x16xf32>
    %c0_14 = arith.constant 0 : index
    %c0_15 = arith.constant 0 : index
    %c0_16 = arith.constant 0 : index
    %30 = vector.load %arg4[%c0_14, %c0_15, %c0_16] : memref<16x32x128xf32, #tpu.memory_space<vmem>>, vector<1x32x128xf32>
    %31 = vector.shape_cast %30 : vector<1x32x128xf32> to vector<32x128xf32>
    %cst_17 = arith.constant dense<0.000000e+00> : vector<32x8xf32>
    %32 = tpu.matmul %31, %28, %cst_17 {dimension_numbers = #tpu.dot_dimension_numbers<[1], [0], [0], [1], [0, 0, 1, 1], [], []>} : vector<32x128xf32>, vector<128x8xf32>, vector<32x8xf32> -> vector<32x8xf32>
    %c0_18 = arith.constant 0 : index
    %c0_19 = arith.constant 0 : index
    %c0_20 = arith.constant 0 : index
    %33 = vector.load %arg5[%c0_18, %c0_19, %c0_20] : memref<16x8x16xf32, #tpu.memory_space<vmem>>, vector<1x8x16xf32>
    %34 = vector.shape_cast %33 : vector<1x8x16xf32> to vector<8x16xf32>
    %cst_21 = arith.constant dense<0.000000e+00> : vector<32x16xf32>
    %35 = tpu.matmul %32, %34, %cst_21 {dimension_numbers = #tpu.dot_dimension_numbers<[1], [0], [0], [1], [0, 0, 1, 1], [], []>} : vector<32x8xf32>, vector<8x16xf32>, vector<32x16xf32> -> vector<32x16xf32>
    %36 = arith.addf %29, %35 : vector<32x16xf32>
    %c1 = arith.constant 1 : index
    %c0_22 = arith.constant 0 : index
    %c0_23 = arith.constant 0 : index
    %37 = vector.load %arg4[%c1, %c0_22, %c0_23] : memref<16x32x128xf32, #tpu.memory_space<vmem>>, vector<1x32x128xf32>
    %38 = vector.shape_cast %37 : vector<1x32x128xf32> to vector<32x128xf32>
    %cst_24 = arith.constant dense<0.000000e+00> : vector<32x8xf32>
    %39 = tpu.matmul %38, %28, %cst_24 {dimension_numbers = #tpu.dot_dimension_numbers<[1], [0], [0], [1], [0, 0, 1, 1], [], []>} : vector<32x128xf32>, vector<128x8xf32>, vector<32x8xf32> -> vector<32x8xf32>
    %c1_25 = arith.constant 1 : index
    %c0_26 = arith.constant 0 : index
    %c0_27 = arith.constant 0 : index
    %40 = vector.load %arg5[%c1_25, %c0_26, %c0_27] : memref<16x8x16xf32, #tpu.memory_space<vmem>>, vector<1x8x16xf32>
    %41 = vector.shape_cast %40 : vector<1x8x16xf32> to vector<8x16xf32>
    %cst_28 = arith.constant dense<0.000000e+00> : vector<32x16xf32>
    %42 = tpu.matmul %39, %41, %cst_28 {dimension_numbers = #tpu.dot_dimension_numbers<[1], [0], [0], [1], [0, 0, 1, 1], [], []>} : vector<32x8xf32>, vector<8x16xf32>, vector<32x16xf32> -> vector<32x16xf32>
    %43 = arith.addf %36, %42 : vector<32x16xf32>
    %c2 = arith.constant 2 : index
    %c0_29 = arith.constant 0 : index
    %c0_30 = arith.constant 0 : index
    %44 = vector.load %arg4[%c2, %c0_29, %c0_30] : memref<16x32x128xf32, #tpu.memory_space<vmem>>, vector<1x32x128xf32>
    %45 = vector.shape_cast %44 : vector<1x32x128xf32> to vector<32x128xf32>
    %cst_31 = arith.constant dense<0.000000e+00> : vector<32x8xf32>
    %46 = tpu.matmul %45, %28, %cst_31 {dimension_numbers = #tpu.dot_dimension_numbers<[1], [0], [0], [1], [0, 0, 1, 1], [], []>} : vector<32x128xf32>, vector<128x8xf32>, vector<32x8xf32> -> vector<32x8xf32>
    %c2_32 = arith.constant 2 : index
    %c0_33 = arith.constant 0 : index
    %c0_34 = arith.constant 0 : index
    %47 = vector.load %arg5[%c2_32, %c0_33, %c0_34] : memref<16x8x16xf32, #tpu.memory_space<vmem>>, vector<1x8x16xf32>
    %48 = vector.shape_cast %47 : vector<1x8x16xf32> to vector<8x16xf32>
    %cst_35 = arith.constant dense<0.000000e+00> : vector<32x16xf32>
    %49 = tpu.matmul %46, %48, %cst_35 {dimension_numbers = #tpu.dot_dimension_numbers<[1], [0], [0], [1], [0, 0, 1, 1], [], []>} : vector<32x8xf32>, vector<8x16xf32>, vector<32x16xf32> -> vector<32x16xf32>
    %50 = arith.addf %43, %49 : vector<32x16xf32>
    %c3 = arith.constant 3 : index
    %c0_36 = arith.constant 0 : index
    %c0_37 = arith.constant 0 : index
    %51 = vector.load %arg4[%c3, %c0_36, %c0_37] : memref<16x32x128xf32, #tpu.memory_space<vmem>>, vector<1x32x128xf32>
    %52 = vector.shape_cast %51 : vector<1x32x128xf32> to vector<32x128xf32>
    %cst_38 = arith.constant dense<0.000000e+00> : vector<32x8xf32>
    %53 = tpu.matmul %52, %28, %cst_38 {dimension_numbers = #tpu.dot_dimension_numbers<[1], [0], [0], [1], [0, 0, 1, 1], [], []>} : vector<32x128xf32>, vector<128x8xf32>, vector<32x8xf32> -> vector<32x8xf32>
    %c3_39 = arith.constant 3 : index
    %c0_40 = arith.constant 0 : index
    %c0_41 = arith.constant 0 : index
    %54 = vector.load %arg5[%c3_39, %c0_40, %c0_41] : memref<16x8x16xf32, #tpu.memory_space<vmem>>, vector<1x8x16xf32>
    %55 = vector.shape_cast %54 : vector<1x8x16xf32> to vector<8x16xf32>
    %cst_42 = arith.constant dense<0.000000e+00> : vector<32x16xf32>
    %56 = tpu.matmul %53, %55, %cst_42 {dimension_numbers = #tpu.dot_dimension_numbers<[1], [0], [0], [1], [0, 0, 1, 1], [], []>} : vector<32x8xf32>, vector<8x16xf32>, vector<32x16xf32> -> vector<32x16xf32>
    %57 = arith.addf %50, %56 : vector<32x16xf32>
    %c4 = arith.constant 4 : index
    %c0_43 = arith.constant 0 : index
    %c0_44 = arith.constant 0 : index
    %58 = vector.load %arg4[%c4, %c0_43, %c0_44] : memref<16x32x128xf32, #tpu.memory_space<vmem>>, vector<1x32x128xf32>
    %59 = vector.shape_cast %58 : vector<1x32x128xf32> to vector<32x128xf32>
    %cst_45 = arith.constant dense<0.000000e+00> : vector<32x8xf32>
    %60 = tpu.matmul %59, %28, %cst_45 {dimension_numbers = #tpu.dot_dimension_numbers<[1], [0], [0], [1], [0, 0, 1, 1], [], []>} : vector<32x128xf32>, vector<128x8xf32>, vector<32x8xf32> -> vector<32x8xf32>
    %c4_46 = arith.constant 4 : index
    %c0_47 = arith.constant 0 : index
    %c0_48 = arith.constant 0 : index
    %61 = vector.load %arg5[%c4_46, %c0_47, %c0_48] : memref<16x8x16xf32, #tpu.memory_space<vmem>>, vector<1x8x16xf32>
    %62 = vector.shape_cast %61 : vector<1x8x16xf32> to vector<8x16xf32>
    %cst_49 = arith.constant dense<0.000000e+00> : vector<32x16xf32>
    %63 = tpu.matmul %60, %62, %cst_49 {dimension_numbers = #tpu.dot_dimension_numbers<[1], [0], [0], [1], [0, 0, 1, 1], [], []>} : vector<32x8xf32>, vector<8x16xf32>, vector<32x16xf32> -> vector<32x16xf32>
    %64 = arith.addf %57, %63 : vector<32x16xf32>
    %c5 = arith.constant 5 : index
    %c0_50 = arith.constant 0 : index
    %c0_51 = arith.constant 0 : index
    %65 = vector.load %arg4[%c5, %c0_50, %c0_51] : memref<16x32x128xf32, #tpu.memory_space<vmem>>, vector<1x32x128xf32>
    %66 = vector.shape_cast %65 : vector<1x32x128xf32> to vector<32x128xf32>
    %cst_52 = arith.constant dense<0.000000e+00> : vector<32x8xf32>
    %67 = tpu.matmul %66, %28, %cst_52 {dimension_numbers = #tpu.dot_dimension_numbers<[1], [0], [0], [1], [0, 0, 1, 1], [], []>} : vector<32x128xf32>, vector<128x8xf32>, vector<32x8xf32> -> vector<32x8xf32>
    %c5_53 = arith.constant 5 : index
    %c0_54 = arith.constant 0 : index
    %c0_55 = arith.constant 0 : index
    %68 = vector.load %arg5[%c5_53, %c0_54, %c0_55] : memref<16x8x16xf32, #tpu.memory_space<vmem>>, vector<1x8x16xf32>
    %69 = vector.shape_cast %68 : vector<1x8x16xf32> to vector<8x16xf32>
    %cst_56 = arith.constant dense<0.000000e+00> : vector<32x16xf32>
    %70 = tpu.matmul %67, %69, %cst_56 {dimension_numbers = #tpu.dot_dimension_numbers<[1], [0], [0], [1], [0, 0, 1, 1], [], []>} : vector<32x8xf32>, vector<8x16xf32>, vector<32x16xf32> -> vector<32x16xf32>
    %71 = arith.addf %64, %70 : vector<32x16xf32>
    %c6 = arith.constant 6 : index
    %c0_57 = arith.constant 0 : index
    %c0_58 = arith.constant 0 : index
    %72 = vector.load %arg4[%c6, %c0_57, %c0_58] : memref<16x32x128xf32, #tpu.memory_space<vmem>>, vector<1x32x128xf32>
    %73 = vector.shape_cast %72 : vector<1x32x128xf32> to vector<32x128xf32>
    %cst_59 = arith.constant dense<0.000000e+00> : vector<32x8xf32>
    %74 = tpu.matmul %73, %28, %cst_59 {dimension_numbers = #tpu.dot_dimension_numbers<[1], [0], [0], [1], [0, 0, 1, 1], [], []>} : vector<32x128xf32>, vector<128x8xf32>, vector<32x8xf32> -> vector<32x8xf32>
    %c6_60 = arith.constant 6 : index
    %c0_61 = arith.constant 0 : index
    %c0_62 = arith.constant 0 : index
    %75 = vector.load %arg5[%c6_60, %c0_61, %c0_62] : memref<16x8x16xf32, #tpu.memory_space<vmem>>, vector<1x8x16xf32>
    %76 = vector.shape_cast %75 : vector<1x8x16xf32> to vector<8x16xf32>
    %cst_63 = arith.constant dense<0.000000e+00> : vector<32x16xf32>
    %77 = tpu.matmul %74, %76, %cst_63 {dimension_numbers = #tpu.dot_dimension_numbers<[1], [0], [0], [1], [0, 0, 1, 1], [], []>} : vector<32x8xf32>, vector<8x16xf32>, vector<32x16xf32> -> vector<32x16xf32>
    %78 = arith.addf %71, %77 : vector<32x16xf32>
    %c7 = arith.constant 7 : index
    %c0_64 = arith.constant 0 : index
    %c0_65 = arith.constant 0 : index
    %79 = vector.load %arg4[%c7, %c0_64, %c0_65] : memref<16x32x128xf32, #tpu.memory_space<vmem>>, vector<1x32x128xf32>
    %80 = vector.shape_cast %79 : vector<1x32x128xf32> to vector<32x128xf32>
    %cst_66 = arith.constant dense<0.000000e+00> : vector<32x8xf32>
    %81 = tpu.matmul %80, %28, %cst_66 {dimension_numbers = #tpu.dot_dimension_numbers<[1], [0], [0], [1], [0, 0, 1, 1], [], []>} : vector<32x128xf32>, vector<128x8xf32>, vector<32x8xf32> -> vector<32x8xf32>
    %c7_67 = arith.constant 7 : index
    %c0_68 = arith.constant 0 : index
    %c0_69 = arith.constant 0 : index
    %82 = vector.load %arg5[%c7_67, %c0_68, %c0_69] : memref<16x8x16xf32, #tpu.memory_space<vmem>>, vector<1x8x16xf32>
    %83 = vector.shape_cast %82 : vector<1x8x16xf32> to vector<8x16xf32>
    %cst_70 = arith.constant dense<0.000000e+00> : vector<32x16xf32>
    %84 = tpu.matmul %81, %83, %cst_70 {dimension_numbers = #tpu.dot_dimension_numbers<[1], [0], [0], [1], [0, 0, 1, 1], [], []>} : vector<32x8xf32>, vector<8x16xf32>, vector<32x16xf32> -> vector<32x16xf32>
    %85 = arith.addf %78, %84 : vector<32x16xf32>
    %c8 = arith.constant 8 : index
    %c0_71 = arith.constant 0 : index
    %c0_72 = arith.constant 0 : index
    %86 = vector.load %arg4[%c8, %c0_71, %c0_72] : memref<16x32x128xf32, #tpu.memory_space<vmem>>, vector<1x32x128xf32>
    %87 = vector.shape_cast %86 : vector<1x32x128xf32> to vector<32x128xf32>
    %cst_73 = arith.constant dense<0.000000e+00> : vector<32x8xf32>
    %88 = tpu.matmul %87, %28, %cst_73 {dimension_numbers = #tpu.dot_dimension_numbers<[1], [0], [0], [1], [0, 0, 1, 1], [], []>} : vector<32x128xf32>, vector<128x8xf32>, vector<32x8xf32> -> vector<32x8xf32>
    %c8_74 = arith.constant 8 : index
    %c0_75 = arith.constant 0 : index
    %c0_76 = arith.constant 0 : index
    %89 = vector.load %arg5[%c8_74, %c0_75, %c0_76] : memref<16x8x16xf32, #tpu.memory_space<vmem>>, vector<1x8x16xf32>
    %90 = vector.shape_cast %89 : vector<1x8x16xf32> to vector<8x16xf32>
    %cst_77 = arith.constant dense<0.000000e+00> : vector<32x16xf32>
    %91 = tpu.matmul %88, %90, %cst_77 {dimension_numbers = #tpu.dot_dimension_numbers<[1], [0], [0], [1], [0, 0, 1, 1], [], []>} : vector<32x8xf32>, vector<8x16xf32>, vector<32x16xf32> -> vector<32x16xf32>
    %92 = arith.addf %85, %91 : vector<32x16xf32>
    %c9 = arith.constant 9 : index
    %c0_78 = arith.constant 0 : index
    %c0_79 = arith.constant 0 : index
    %93 = vector.load %arg4[%c9, %c0_78, %c0_79] : memref<16x32x128xf32, #tpu.memory_space<vmem>>, vector<1x32x128xf32>
    %94 = vector.shape_cast %93 : vector<1x32x128xf32> to vector<32x128xf32>
    %cst_80 = arith.constant dense<0.000000e+00> : vector<32x8xf32>
    %95 = tpu.matmul %94, %28, %cst_80 {dimension_numbers = #tpu.dot_dimension_numbers<[1], [0], [0], [1], [0, 0, 1, 1], [], []>} : vector<32x128xf32>, vector<128x8xf32>, vector<32x8xf32> -> vector<32x8xf32>
    %c9_81 = arith.constant 9 : index
    %c0_82 = arith.constant 0 : index
    %c0_83 = arith.constant 0 : index
    %96 = vector.load %arg5[%c9_81, %c0_82, %c0_83] : memref<16x8x16xf32, #tpu.memory_space<vmem>>, vector<1x8x16xf32>
    %97 = vector.shape_cast %96 : vector<1x8x16xf32> to vector<8x16xf32>
    %cst_84 = arith.constant dense<0.000000e+00> : vector<32x16xf32>
    %98 = tpu.matmul %95, %97, %cst_84 {dimension_numbers = #tpu.dot_dimension_numbers<[1], [0], [0], [1], [0, 0, 1, 1], [], []>} : vector<32x8xf32>, vector<8x16xf32>, vector<32x16xf32> -> vector<32x16xf32>
    %99 = arith.addf %92, %98 : vector<32x16xf32>
    %c10 = arith.constant 10 : index
    %c0_85 = arith.constant 0 : index
    %c0_86 = arith.constant 0 : index
    %100 = vector.load %arg4[%c10, %c0_85, %c0_86] : memref<16x32x128xf32, #tpu.memory_space<vmem>>, vector<1x32x128xf32>
    %101 = vector.shape_cast %100 : vector<1x32x128xf32> to vector<32x128xf32>
    %cst_87 = arith.constant dense<0.000000e+00> : vector<32x8xf32>
    %102 = tpu.matmul %101, %28, %cst_87 {dimension_numbers = #tpu.dot_dimension_numbers<[1], [0], [0], [1], [0, 0, 1, 1], [], []>} : vector<32x128xf32>, vector<128x8xf32>, vector<32x8xf32> -> vector<32x8xf32>
    %c10_88 = arith.constant 10 : index
    %c0_89 = arith.constant 0 : index
    %c0_90 = arith.constant 0 : index
    %103 = vector.load %arg5[%c10_88, %c0_89, %c0_90] : memref<16x8x16xf32, #tpu.memory_space<vmem>>, vector<1x8x16xf32>
    %104 = vector.shape_cast %103 : vector<1x8x16xf32> to vector<8x16xf32>
    %cst_91 = arith.constant dense<0.000000e+00> : vector<32x16xf32>
    %105 = tpu.matmul %102, %104, %cst_91 {dimension_numbers = #tpu.dot_dimension_numbers<[1], [0], [0], [1], [0, 0, 1, 1], [], []>} : vector<32x8xf32>, vector<8x16xf32>, vector<32x16xf32> -> vector<32x16xf32>
    %106 = arith.addf %99, %105 : vector<32x16xf32>
    %c11 = arith.constant 11 : index
    %c0_92 = arith.constant 0 : index
    %c0_93 = arith.constant 0 : index
    %107 = vector.load %arg4[%c11, %c0_92, %c0_93] : memref<16x32x128xf32, #tpu.memory_space<vmem>>, vector<1x32x128xf32>
    %108 = vector.shape_cast %107 : vector<1x32x128xf32> to vector<32x128xf32>
    %cst_94 = arith.constant dense<0.000000e+00> : vector<32x8xf32>
    %109 = tpu.matmul %108, %28, %cst_94 {dimension_numbers = #tpu.dot_dimension_numbers<[1], [0], [0], [1], [0, 0, 1, 1], [], []>} : vector<32x128xf32>, vector<128x8xf32>, vector<32x8xf32> -> vector<32x8xf32>
    %c11_95 = arith.constant 11 : index
    %c0_96 = arith.constant 0 : index
    %c0_97 = arith.constant 0 : index
    %110 = vector.load %arg5[%c11_95, %c0_96, %c0_97] : memref<16x8x16xf32, #tpu.memory_space<vmem>>, vector<1x8x16xf32>
    %111 = vector.shape_cast %110 : vector<1x8x16xf32> to vector<8x16xf32>
    %cst_98 = arith.constant dense<0.000000e+00> : vector<32x16xf32>
    %112 = tpu.matmul %109, %111, %cst_98 {dimension_numbers = #tpu.dot_dimension_numbers<[1], [0], [0], [1], [0, 0, 1, 1], [], []>} : vector<32x8xf32>, vector<8x16xf32>, vector<32x16xf32> -> vector<32x16xf32>
    %113 = arith.addf %106, %112 : vector<32x16xf32>
    %c12 = arith.constant 12 : index
    %c0_99 = arith.constant 0 : index
    %c0_100 = arith.constant 0 : index
    %114 = vector.load %arg4[%c12, %c0_99, %c0_100] : memref<16x32x128xf32, #tpu.memory_space<vmem>>, vector<1x32x128xf32>
    %115 = vector.shape_cast %114 : vector<1x32x128xf32> to vector<32x128xf32>
    %cst_101 = arith.constant dense<0.000000e+00> : vector<32x8xf32>
    %116 = tpu.matmul %115, %28, %cst_101 {dimension_numbers = #tpu.dot_dimension_numbers<[1], [0], [0], [1], [0, 0, 1, 1], [], []>} : vector<32x128xf32>, vector<128x8xf32>, vector<32x8xf32> -> vector<32x8xf32>
    %c12_102 = arith.constant 12 : index
    %c0_103 = arith.constant 0 : index
    %c0_104 = arith.constant 0 : index
    %117 = vector.load %arg5[%c12_102, %c0_103, %c0_104] : memref<16x8x16xf32, #tpu.memory_space<vmem>>, vector<1x8x16xf32>
    %118 = vector.shape_cast %117 : vector<1x8x16xf32> to vector<8x16xf32>
    %cst_105 = arith.constant dense<0.000000e+00> : vector<32x16xf32>
    %119 = tpu.matmul %116, %118, %cst_105 {dimension_numbers = #tpu.dot_dimension_numbers<[1], [0], [0], [1], [0, 0, 1, 1], [], []>} : vector<32x8xf32>, vector<8x16xf32>, vector<32x16xf32> -> vector<32x16xf32>
    %120 = arith.addf %113, %119 : vector<32x16xf32>
    %c13 = arith.constant 13 : index
    %c0_106 = arith.constant 0 : index
    %c0_107 = arith.constant 0 : index
    %121 = vector.load %arg4[%c13, %c0_106, %c0_107] : memref<16x32x128xf32, #tpu.memory_space<vmem>>, vector<1x32x128xf32>
    %122 = vector.shape_cast %121 : vector<1x32x128xf32> to vector<32x128xf32>
    %cst_108 = arith.constant dense<0.000000e+00> : vector<32x8xf32>
    %123 = tpu.matmul %122, %28, %cst_108 {dimension_numbers = #tpu.dot_dimension_numbers<[1], [0], [0], [1], [0, 0, 1, 1], [], []>} : vector<32x128xf32>, vector<128x8xf32>, vector<32x8xf32> -> vector<32x8xf32>
    %c13_109 = arith.constant 13 : index
    %c0_110 = arith.constant 0 : index
    %c0_111 = arith.constant 0 : index
    %124 = vector.load %arg5[%c13_109, %c0_110, %c0_111] : memref<16x8x16xf32, #tpu.memory_space<vmem>>, vector<1x8x16xf32>
    %125 = vector.shape_cast %124 : vector<1x8x16xf32> to vector<8x16xf32>
    %cst_112 = arith.constant dense<0.000000e+00> : vector<32x16xf32>
    %126 = tpu.matmul %123, %125, %cst_112 {dimension_numbers = #tpu.dot_dimension_numbers<[1], [0], [0], [1], [0, 0, 1, 1], [], []>} : vector<32x8xf32>, vector<8x16xf32>, vector<32x16xf32> -> vector<32x16xf32>
    %127 = arith.addf %120, %126 : vector<32x16xf32>
    %c14 = arith.constant 14 : index
    %c0_113 = arith.constant 0 : index
    %c0_114 = arith.constant 0 : index
    %128 = vector.load %arg4[%c14, %c0_113, %c0_114] : memref<16x32x128xf32, #tpu.memory_space<vmem>>, vector<1x32x128xf32>
    %129 = vector.shape_cast %128 : vector<1x32x128xf32> to vector<32x128xf32>
    %cst_115 = arith.constant dense<0.000000e+00> : vector<32x8xf32>
    %130 = tpu.matmul %129, %28, %cst_115 {dimension_numbers = #tpu.dot_dimension_numbers<[1], [0], [0], [1], [0, 0, 1, 1], [], []>} : vector<32x128xf32>, vector<128x8xf32>, vector<32x8xf32> -> vector<32x8xf32>
    %c14_116 = arith.constant 14 : index
    %c0_117 = arith.constant 0 : index
    %c0_118 = arith.constant 0 : index
    %131 = vector.load %arg5[%c14_116, %c0_117, %c0_118] : memref<16x8x16xf32, #tpu.memory_space<vmem>>, vector<1x8x16xf32>
    %132 = vector.shape_cast %131 : vector<1x8x16xf32> to vector<8x16xf32>
    %cst_119 = arith.constant dense<0.000000e+00> : vector<32x16xf32>
    %133 = tpu.matmul %130, %132, %cst_119 {dimension_numbers = #tpu.dot_dimension_numbers<[1], [0], [0], [1], [0, 0, 1, 1], [], []>} : vector<32x8xf32>, vector<8x16xf32>, vector<32x16xf32> -> vector<32x16xf32>
    %134 = arith.addf %127, %133 : vector<32x16xf32>
    %c15 = arith.constant 15 : index
    %c0_120 = arith.constant 0 : index
    %c0_121 = arith.constant 0 : index
    %135 = vector.load %arg4[%c15, %c0_120, %c0_121] : memref<16x32x128xf32, #tpu.memory_space<vmem>>, vector<1x32x128xf32>
    %136 = vector.shape_cast %135 : vector<1x32x128xf32> to vector<32x128xf32>
    %cst_122 = arith.constant dense<0.000000e+00> : vector<32x8xf32>
    %137 = tpu.matmul %136, %28, %cst_122 {dimension_numbers = #tpu.dot_dimension_numbers<[1], [0], [0], [1], [0, 0, 1, 1], [], []>} : vector<32x128xf32>, vector<128x8xf32>, vector<32x8xf32> -> vector<32x8xf32>
    %c15_123 = arith.constant 15 : index
    %c0_124 = arith.constant 0 : index
    %c0_125 = arith.constant 0 : index
    %138 = vector.load %arg5[%c15_123, %c0_124, %c0_125] : memref<16x8x16xf32, #tpu.memory_space<vmem>>, vector<1x8x16xf32>
    %139 = vector.shape_cast %138 : vector<1x8x16xf32> to vector<8x16xf32>
    %cst_126 = arith.constant dense<0.000000e+00> : vector<32x16xf32>
    %140 = tpu.matmul %137, %139, %cst_126 {dimension_numbers = #tpu.dot_dimension_numbers<[1], [0], [0], [1], [0, 0, 1, 1], [], []>} : vector<32x8xf32>, vector<8x16xf32>, vector<32x16xf32> -> vector<32x16xf32>
    %141 = arith.addf %134, %140 : vector<32x16xf32>
    %cst_127 = arith.constant dense<0.000000e+00> : vector<16xf32>
    %142 = vector.multi_reduction <add>, %141, %cst_127 [0] : vector<32x16xf32> to vector<16xf32>
    %143 = vector.shape_cast %142 : vector<16xf32> to vector<1x16xf32>
    %cst_128 = arith.constant 3.200000e+01 : f32
    %144 = vector.broadcast %cst_128 : f32 to vector<1x16xf32>
    %145 = arith.divf %143, %144 : vector<1x16xf32>
    %146 = vector.broadcast %145 : vector<1x16xf32> to vector<32x16xf32>
    %147 = arith.subf %141, %146 : vector<32x16xf32>
    %148 = arith.mulf %147, %147 : vector<32x16xf32>
    %cst_129 = arith.constant dense<0.000000e+00> : vector<16xf32>
    %149 = vector.multi_reduction <add>, %148, %cst_129 [0] : vector<32x16xf32> to vector<16xf32>
    %150 = vector.shape_cast %149 : vector<16xf32> to vector<1x16xf32>
    %cst_130 = arith.constant 3.200000e+01 : f32
    %151 = vector.broadcast %cst_130 : f32 to vector<1x16xf32>
    %152 = arith.divf %150, %151 : vector<1x16xf32>
    %153 = vector.broadcast %145 : vector<1x16xf32> to vector<32x16xf32>
    %154 = arith.subf %141, %153 : vector<32x16xf32>
    %cst_131 = arith.constant 9.99999974E-6 : f32
    %155 = vector.broadcast %cst_131 : f32 to vector<1x16xf32>
    %156 = arith.addf %152, %155 : vector<1x16xf32>
    %157 = math.rsqrt %156 : vector<1x16xf32>
    %158 = vector.broadcast %157 : vector<1x16xf32> to vector<32x16xf32>
    %159 = arith.mulf %154, %158 : vector<32x16xf32>
    %c0_132 = arith.constant 0 : index
    %c0_133 = arith.constant 0 : index
    %160 = vector.load %arg6[%c0_132, %c0_133] : memref<1x16xf32, #tpu.memory_space<vmem>>, vector<1x16xf32>
    %161 = vector.broadcast %160 : vector<1x16xf32> to vector<32x16xf32>
    %162 = arith.mulf %159, %161 : vector<32x16xf32>
    %c0_134 = arith.constant 0 : index
    %c0_135 = arith.constant 0 : index
    %163 = vector.load %arg7[%c0_134, %c0_135] : memref<1x16xf32, #tpu.memory_space<vmem>>, vector<1x16xf32>
    %164 = vector.broadcast %163 : vector<1x16xf32> to vector<32x16xf32>
    %165 = arith.addf %162, %164 : vector<32x16xf32>
    %cst_136 = arith.constant 0.000000e+00 : f32
    %166 = vector.broadcast %cst_136 : f32 to vector<32x16xf32>
    %167 = arith.maximumf %165, %166 : vector<32x16xf32>
    %c0_137 = arith.constant 0 : index
    %c0_138 = arith.constant 0 : index
    %168 = vector.load %arg8[%c0_137, %c0_138] : memref<2x32xf32, #tpu.memory_space<vmem>>, vector<2x32xf32>
    %cst_139 = arith.constant dense<0.000000e+00> : vector<2x16xf32>
    %169 = tpu.matmul %168, %167, %cst_139 {dimension_numbers = #tpu.dot_dimension_numbers<[1], [0], [0], [1], [0, 0, 1, 1], [], []>} : vector<2x32xf32>, vector<32x16xf32>, vector<2x16xf32> -> vector<2x16xf32>
    %c0_140 = arith.constant 0 : index
    %c0_141 = arith.constant 0 : index
    %170 = vector.load %arg9[%c0_140, %c0_141] : memref<16x128xf32, #tpu.memory_space<vmem>>, vector<16x128xf32>
    %cst_142 = arith.constant dense<0.000000e+00> : vector<2x128xf32>
    %171 = tpu.matmul %169, %170, %cst_142 {dimension_numbers = #tpu.dot_dimension_numbers<[1], [0], [0], [1], [0, 0, 1, 1], [], []>} : vector<2x16xf32>, vector<16x128xf32>, vector<2x128xf32> -> vector<2x128xf32>
    %c0_143 = arith.constant 0 : index
    %c0_144 = arith.constant 0 : index
    %172 = vector.load %arg10[%c0_143, %c0_144] : memref<1x128xf32, #tpu.memory_space<vmem>>, vector<1x128xf32>
    %173 = vector.broadcast %172 : vector<1x128xf32> to vector<2x128xf32>
    %174 = arith.addf %171, %173 : vector<2x128xf32>
    %c0_145 = arith.constant 0 : index
    %c0_146 = arith.constant 0 : index
    %175 = vector.load %arg11[%c0_145, %c0_146] : memref<2x128xf32, #tpu.memory_space<vmem>>, vector<2x128xf32>
    tpu.vector_store %arg11[%c0_145, %c0_146], %174 {strides = array<i32>} : memref<2x128xf32, #tpu.memory_space<vmem>>, vector<2x128xf32>,
    return
  }
}

</mosaic_0001>

<llo_original>
// kernel: priori_forward.1
$region0: #{priori_forward.1}
  #allocation0 [shape = 'u32[]', space=smem, size = 0x4, offset = 0x4, fixed_abs, tag = 'smem constant byte address 0x4 - core index']
  #allocation1 [shape = 'u32[144,128]{1,0:T(1,128)}', space=vmem, size = 0x12000, scoped, tag = 'internal scratch']
  %s0 = inlined_call_operand.vmem [shape: f32[128,64], index: 0, kind: input, shape index: {}]
  %s1 = inlined_call_operand.vmem [shape: f32[64,8], index: 1, kind: input, shape index: {}]
  %s2 = inlined_call_operand.vmem [shape: f32[1,8], index: 2, kind: input, shape index: {}]
  %s3 = inlined_call_operand.vmem [shape: f32[1,8], index: 3, kind: input, shape index: {}]
  %s4 = inlined_call_operand.vmem [shape: f32[16,32,128], index: 4, kind: input, shape index: {}]
  %s5 = inlined_call_operand.vmem [shape: f32[16,8,16], index: 5, kind: input, shape index: {}]
  %s6 = inlined_call_operand.vmem [shape: f32[1,16], index: 6, kind: input, shape index: {}]
  %s7 = inlined_call_operand.vmem [shape: f32[1,16], index: 7, kind: input, shape index: {}]
  %s8 = inlined_call_operand.vmem [shape: f32[2,32], index: 8, kind: input, shape index: {}]
  %s9 = inlined_call_operand.vmem [shape: f32[16,128], index: 9, kind: input, shape index: {}]
  %s10 = inlined_call_operand.vmem [shape: f32[1,128], index: 10, kind: input, shape index: {}]
  %s11 = inlined_call_operand.vmem [shape: f32[2,128], index: 11, kind: output, shape index: {}]
  %s12 = sld [smem:[#allocation0]]
  $region54: #{priori_forward.1} parent=0
    _
  %s14 = ssub.s32 1, %s12
  %s15 = scalar_select 0, %s14, %s12
  // Predicated region
  $region2: #{priori_forward.1} parent=0 // pred_check
    _
  $region3: #{priori_forward.1} parent=0 // pred_check_branch
    %17 = sbr.rel (0) target = $region5
  $region4: #{priori_forward.1} parent=0 // pred_region
    _
  $region5: #{priori_forward.1} parent=0 // pred_fallthru
    _
  // Predicated region
  $region6: #{priori_forward.1} parent=0 // pred_check
    _
  $region7: #{priori_forward.1} parent=0 // pred_check_branch
    %19 = sbr.rel (0) target = $region9
  $region8: #{priori_forward.1} parent=0 // pred_region
    _
  $region9: #{priori_forward.1} parent=0 // pred_fallthru
    _
  // Predicated region
  $region10: #{priori_forward.1} parent=0 // pred_check
    _
  $region11: #{priori_forward.1} parent=0 // pred_check_branch
    %21 = sbr.rel (0) target = $region13
  $region12: #{priori_forward.1} parent=0 // pred_region
    _
  $region13: #{priori_forward.1} parent=0 // pred_fallthru
    _
  // Predicated region
  $region14: #{priori_forward.1} parent=0 // pred_check
    _
  $region15: #{priori_forward.1} parent=0 // pred_check_branch
    %23 = sbr.rel (0) target = $region17
  $region16: #{priori_forward.1} parent=0 // pred_region
    _
  $region17: #{priori_forward.1} parent=0 // pred_fallthru
    _
  // Predicated region
  $region18: #{priori_forward.1} parent=0 // pred_check
    _
  $region19: #{priori_forward.1} parent=0 // pred_check_branch
    %25 = sbr.rel (0) target = $region21
  $region20: #{priori_forward.1} parent=0 // pred_region
    _
  $region21: #{priori_forward.1} parent=0 // pred_fallthru
    _
  // Predicated region
  $region22: #{priori_forward.1} parent=0 // pred_check
    _
  $region23: #{priori_forward.1} parent=0 // pred_check_branch
    %27 = sbr.rel (0) target = $region25
  $region24: #{priori_forward.1} parent=0 // pred_region
    _
  $region25: #{priori_forward.1} parent=0 // pred_fallthru
    _
  // Predicated region
  $region26: #{priori_forward.1} parent=0 // pred_check
    _
  $region27: #{priori_forward.1} parent=0 // pred_check_branch
    %29 = sbr.rel (0) target = $region29
  $region28: #{priori_forward.1} parent=0 // pred_region
    _
  $region29: #{priori_forward.1} parent=0 // pred_fallthru
    _
  // Predicated region
  $region30: #{priori_forward.1} parent=0 // pred_check
    _
  $region31: #{priori_forward.1} parent=0 // pred_check_branch
    %31 = sbr.rel (0) target = $region33
  $region32: #{priori_forward.1} parent=0 // pred_region
    _
  $region33: #{priori_forward.1} parent=0 // pred_fallthru
    _
  // Predicated region
  $region34: #{priori_forward.1} parent=0 // pred_check
    _
  $region35: #{priori_forward.1} parent=0 // pred_check_branch
    %33 = sbr.rel (0) target = $region37
  $region36: #{priori_forward.1} parent=0 // pred_region
    _
  $region37: #{priori_forward.1} parent=0 // pred_fallthru
    _
  // Predicated region
  $region38: #{priori_forward.1} parent=0 // pred_check
    _
  $region39: #{priori_forward.1} parent=0 // pred_check_branch
    %35 = sbr.rel (0) target = $region41
  $region40: #{priori_forward.1} parent=0 // pred_region
    _
  $region41: #{priori_forward.1} parent=0 // pred_fallthru
    _
  // Predicated region
  $region42: #{priori_forward.1} parent=0 // pred_check
    _
  $region43: #{priori_forward.1} parent=0 // pred_check_branch
    %37 = sbr.rel (0) target = $region45
  $region44: #{priori_forward.1} parent=0 // pred_region
    _
  $region45: #{priori_forward.1} parent=0 // pred_fallthru
    _
  %v38 = vld [vmem:[%s0] sm:$0xff]
  %v39 = vld [vmem:[%s0 + $0x8] sm:$0xff]
  %v40 = vld [vmem:[%s0 + $0x10] sm:$0xff]
  %v41 = vld [vmem:[%s0 + $0x18] sm:$0xff]
  %v42 = vld [vmem:[%s0 + $0x20] sm:$0xff]
  %v43 = vld [vmem:[%s0 + $0x28] sm:$0xff]
  %v44 = vld [vmem:[%s0 + $0x30] sm:$0xff]
  %v45 = vld [vmem:[%s0 + $0x38] sm:$0xff]
  %v46 = vld [vmem:[%s0 + $0x40] sm:$0xff]
  %v47 = vld [vmem:[%s0 + $0x48] sm:$0xff]
  %v48 = vld [vmem:[%s0 + $0x50] sm:$0xff]
  %v49 = vld [vmem:[%s0 + $0x58] sm:$0xff]
  %v50 = vld [vmem:[%s0 + $0x60] sm:$0xff]
  %v51 = vld [vmem:[%s0 + $0x68] sm:$0xff]
  %v52 = vld [vmem:[%s0 + $0x70] sm:$0xff]
  %v53 = vld [vmem:[%s0 + $0x78] sm:$0xff]
  %v54 = vld [vmem:[%s1] sm:$0xff]
  %v55 = vld [vmem:[%s1 + $0x8] sm:$0xff]
  %v56 = vld [vmem:[%s1 + $0x10] sm:$0xff]
  %v57 = vld [vmem:[%s1 + $0x18] sm:$0xff]
  %v58 = vld [vmem:[%s1 + $0x20] sm:$0xff]
  %v59 = vld [vmem:[%s1 + $0x28] sm:$0xff]
  %v60 = vld [vmem:[%s1 + $0x30] sm:$0xff]
  %v61 = vld [vmem:[%s1 + $0x38] sm:$0xff]
  %vm62 = vcmask 523264
  %v64 = vsel %vm62, %v38, 0
  %v67 = vsel %vm62, %v39, 0
  %v70 = vsel %vm62, %v40, 0
  %v73 = vsel %vm62, %v41, 0
  %v76 = vsel %vm62, %v42, 0
  %v79 = vsel %vm62, %v43, 0
  %v82 = vsel %vm62, %v44, 0
  %v85 = vsel %vm62, %v45, 0
  %v88 = vsel %vm62, %v46, 0
  %v91 = vsel %vm62, %v47, 0
  %v94 = vsel %vm62, %v48, 0
  %v97 = vsel %vm62, %v49, 0
  %v100 = vsel %vm62, %v50, 0
  %v103 = vsel %vm62, %v51, 0
  %v106 = vsel %vm62, %v52, 0
  %v109 = vsel %vm62, %v53, 0
  %111 = vmatprep.subr.mxu0 0.0
  %112 = vmatpush1.msra.mxu0 %v54
  %113 = vmatprep.subr.mxu0 0.0
  %114 = vmatpush1.msra.mxu0 %v55
  %115 = vmatprep.subr.mxu0 0.0
  %116 = vmatpush1.msra.mxu0 %v56
  %117 = vmatprep.subr.mxu0 0.0
  %118 = vmatpush1.msra.mxu0 %v57
  %119 = vmatprep.subr.mxu0 0.0
  %120 = vmatpush1.msra.mxu0 %v58
  %121 = vmatprep.subr.mxu0 0.0
  %122 = vmatpush1.msra.mxu0 %v59
  %123 = vmatprep.subr.mxu0 0.0
  %124 = vmatpush1.msra.mxu0 %v60
  %125 = vmatprep.subr.mxu0 0.0
  %126 = vmatpush1.msra.mxu0 %v61
  %127 = vmatprep.subr.mxu0 0.0
  %128 = vmatpush1.msra.mxu0 0.0
  %129 = vmatprep.subr.mxu0 0.0
  %130 = vmatpush1.msra.mxu0 0.0
  %131 = vmatprep.subr.mxu0 0.0
  %132 = vmatpush1.msra.mxu0 0.0
  %133 = vmatprep.subr.mxu0 0.0
  %134 = vmatpush1.msra.mxu0 0.0
  %135 = vmatprep.subr.mxu0 0.0
  %136 = vmatpush1.msra.mxu0 0.0
  %137 = vmatprep.subr.mxu0 0.0
  %138 = vmatpush1.msra.mxu0 0.0
  %139 = vmatprep.subr.mxu0 0.0
  %140 = vmatpush1.msra.mxu0 0.0
  %141 = vmatprep.subr.mxu0 0.0
  %142 = vmatpush1.msra.mxu0 0.0
  %143 = vmatprep.subr.mxu0 0.0
  %144 = vmatpush1.msra.mxu0 0.0
  %145 = vmatprep.subr.mxu0 0.0
  %146 = vmatpush1.msra.mxu0 0.0
  %147 = vmatprep.subr.mxu0 0.0
  %148 = vmatpush1.msra.mxu0 0.0
  %149 = vmatprep.subr.mxu0 0.0
  %150 = vmatpush1.msra.mxu0 0.0
  %151 = vmatprep.subr.mxu0 0.0
  %152 = vmatpush1.msra.mxu0 0.0
  %153 = vmatprep.subr.mxu0 0.0
  %154 = vmatpush1.msra.mxu0 0.0
  %155 = vmatprep.subr.mxu0 0.0
  %156 = vmatpush1.msra.mxu0 0.0
  %157 = vmatprep.subr.mxu0 0.0
  %158 = vmatpush1.msra.mxu0 0.0
  %159 = vmatprep.subr.mxu0 0.0
  %160 = vmatpush1.msra.mxu0 0.0
  %161 = vmatprep.subr.mxu0 0.0
  %162 = vmatpush1.msra.mxu0 0.0
  %163 = vmatprep.subr.mxu0 0.0
  %164 = vmatpush1.msra.mxu0 0.0
  %165 = vmatprep.subr.mxu0 0.0
  %166 = vmatpush1.msra.mxu0 0.0
  %167 = vmatprep.subr.mxu0 0.0
  %168 = vmatpush1.msra.mxu0 0.0
  %169 = vmatprep.subr.mxu0 0.0
  %170 = vmatpush1.msra.mxu0 0.0
  %171 = vmatprep.subr.mxu0 0.0
  %172 = vmatpush1.msra.mxu0 0.0
  %173 = vmatprep.subr.mxu0 0.0
  %174 = vmatpush1.msra.mxu0 0.0
  %175 = vmatprep.mubr.f32.mxu0 0.0
  %176 = vmatmul.mubr.f32.gmra.mrb[0].mxu0 %v64
  %v177 = vpop.f32.mrb[0].mxu0
  %v178 = vadd.f32 0.0, %v177
  %v179 = vpop.f32.mrb[0].mxu0
  %180 = vmatprep.mubr.f32.mxu0 0.0
  %181 = vmatmul.mubr.f32.gmra.mrb[0].mxu0 %v67
  %v182 = vpop.f32.mrb[0].mxu0
  %v183 = vadd.f32 0.0, %v182
  %v184 = vpop.f32.mrb[0].mxu0
  %185 = vmatprep.mubr.f32.mxu0 0.0
  %186 = vmatmul.mubr.f32.gmra.mrb[0].mxu0 %v70
  %v187 = vpop.f32.mrb[0].mxu0
  %v188 = vadd.f32 0.0, %v187
  %v189 = vpop.f32.mrb[0].mxu0
  %190 = vmatprep.mubr.f32.mxu0 0.0
  %191 = vmatmul.mubr.f32.gmra.mrb[0].mxu0 %v73
  %v192 = vpop.f32.mrb[0].mxu0
  %v193 = vadd.f32 0.0, %v192
  %v194 = vpop.f32.mrb[0].mxu0
  %195 = vmatprep.mubr.f32.mxu0 0.0
  %196 = vmatmul.mubr.f32.gmra.mrb[0].mxu0 %v76
  %v197 = vpop.f32.mrb[0].mxu0
  %v198 = vadd.f32 0.0, %v197
  %v199 = vpop.f32.mrb[0].mxu0
  %200 = vmatprep.mubr.f32.mxu0 0.0
  %201 = vmatmul.mubr.f32.gmra.mrb[0].mxu0 %v79
  %v202 = vpop.f32.mrb[0].mxu0
  %v203 = vadd.f32 0.0, %v202
  %v204 = vpop.f32.mrb[0].mxu0
  %205 = vmatprep.mubr.f32.mxu0 0.0
  %206 = vmatmul.mubr.f32.gmra.mrb[0].mxu0 %v82
  %v207 = vpop.f32.mrb[0].mxu0
  %v208 = vadd.f32 0.0, %v207
  %v209 = vpop.f32.mrb[0].mxu0
  %210 = vmatprep.mubr.f32.mxu0 0.0
  %211 = vmatmul.mubr.f32.gmra.mrb[0].mxu0 %v85
  %v212 = vpop.f32.mrb[0].mxu0
  %v213 = vadd.f32 0.0, %v212
  %v214 = vpop.f32.mrb[0].mxu0
  %215 = vmatprep.mubr.f32.mxu0 0.0
  %216 = vmatmul.mubr.f32.gmra.mrb[0].mxu0 %v88
  %v217 = vpop.f32.mrb[0].mxu0
  %v218 = vadd.f32 0.0, %v217
  %v219 = vpop.f32.mrb[0].mxu0
  %220 = vmatprep.mubr.f32.mxu0 0.0
  %221 = vmatmul.mubr.f32.gmra.mrb[0].mxu0 %v91
  %v222 = vpop.f32.mrb[0].mxu0
  %v223 = vadd.f32 0.0, %v222
  %v224 = vpop.f32.mrb[0].mxu0
  %225 = vmatprep.mubr.f32.mxu0 0.0
  %226 = vmatmul.mubr.f32.gmra.mrb[0].mxu0 %v94
  %v227 = vpop.f32.mrb[0].mxu0
  %v228 = vadd.f32 0.0, %v227
  %v229 = vpop.f32.mrb[0].mxu0
  %230 = vmatprep.mubr.f32.mxu0 0.0
  %231 = vmatmul.mubr.f32.gmra.mrb[0].mxu0 %v97
  %v232 = vpop.f32.mrb[0].mxu0
  %v233 = vadd.f32 0.0, %v232
  %v234 = vpop.f32.mrb[0].mxu0
  %235 = vmatprep.mubr.f32.mxu0 0.0
  %236 = vmatmul.mubr.f32.gmra.mrb[0].mxu0 %v100
  %v237 = vpop.f32.mrb[0].mxu0
  %v238 = vadd.f32 0.0, %v237
  %v239 = vpop.f32.mrb[0].mxu0
  %240 = vmatprep.mubr.f32.mxu0 0.0
  %241 = vmatmul.mubr.f32.gmra.mrb[0].mxu0 %v103
  %v242 = vpop.f32.mrb[0].mxu0
  %v243 = vadd.f32 0.0, %v242
  %v244 = vpop.f32.mrb[0].mxu0
  %245 = vmatprep.mubr.f32.mxu0 0.0
  %246 = vmatmul.mubr.f32.gmra.mrb[0].mxu0 %v106
  %v247 = vpop.f32.mrb[0].mxu0
  %v248 = vadd.f32 0.0, %v247
  %v249 = vpop.f32.mrb[0].mxu0
  %250 = vmatprep.mubr.f32.mxu0 0.0
  %251 = vmatmul.mubr.f32.gmra.mrb[0].mxu0 %v109
  %v252 = vpop.f32.mrb[0].mxu0
  %v253 = vadd.f32 0.0, %v252
  %v254 = vpop.f32.mrb[0].mxu0
  %255 = vdwg.mxu0
  %vm256 = vcmask 64512
  %v257 = vsel %vm256, %v178, 0.0
  %v258 = vsel %vm256, %v183, 0.0
  %v259 = vadd.f32 %v257, %v258
  %v260 = vsel %vm256, %v188, 0.0
  %v261 = vadd.f32 %v259, %v260
  %v262 = vsel %vm256, %v193, 0.0
  %v263 = vadd.f32 %v261, %v262
  %v264 = vsel %vm256, %v198, 0.0
  %v265 = vadd.f32 %v263, %v264
  %v266 = vsel %vm256, %v203, 0.0
  %v267 = vadd.f32 %v265, %v266
  %v268 = vsel %vm256, %v208, 0.0
  %v269 = vadd.f32 %v267, %v268
  %v270 = vsel %vm256, %v213, 0.0
  %v271 = vadd.f32 %v269, %v270
  %v272 = vsel %vm256, %v218, 0.0
  %v273 = vadd.f32 %v271, %v272
  %v274 = vsel %vm256, %v223, 0.0
  %v275 = vadd.f32 %v273, %v274
  %v276 = vsel %vm256, %v228, 0.0
  %v277 = vadd.f32 %v275, %v276
  %v278 = vsel %vm256, %v233, 0.0
  %v279 = vadd.f32 %v277, %v278
  %v280 = vsel %vm256, %v238, 0.0
  %v281 = vadd.f32 %v279, %v280
  %v282 = vsel %vm256, %v243, 0.0
  %v283 = vadd.f32 %v281, %v282
  %v284 = vsel %vm256, %v248, 0.0
  %v285 = vadd.f32 %v283, %v284
  %v286 = vsel %vm256, %v253, 0.0
  %v287 = vadd.f32 %v285, %v286
  %v288 = vrot.slane %v287, 4
  %v289 = vadd.f32 %v287, %v288
  %v290 = vrot.slane %v289, 2
  %v291 = vadd.f32 %v289, %v290
  %v292 = vrot.slane %v291, 1
  %v293 = vadd.f32 %v291, %v292
  %v294 = vrcp.pop 128.0
  %v295 = vmul.f32 %v293, %v294
  %v296 = vsub.f32 %v178, %v295
  %v297 = vsub.f32 %v183, %v295
  %v298 = vsub.f32 %v188, %v295
  %v299 = vsub.f32 %v193, %v295
  %v300 = vsub.f32 %v198, %v295
  %v301 = vsub.f32 %v203, %v295
  %v302 = vsub.f32 %v208, %v295
  %v303 = vsub.f32 %v213, %v295
  %v304 = vsub.f32 %v218, %v295
  %v305 = vsub.f32 %v223, %v295
  %v306 = vsub.f32 %v228, %v295
  %v307 = vsub.f32 %v233, %v295
  %v308 = vsub.f32 %v238, %v295
  %v309 = vsub.f32 %v243, %v295
  %v310 = vsub.f32 %v248, %v295
  %v311 = vsub.f32 %v253, %v295
  %v312 = vmul.f32 %v296, %v296
  %v313 = vmul.f32 %v297, %v297
  %v314 = vmul.f32 %v298, %v298
  %v315 = vmul.f32 %v299, %v299
  %v316 = vmul.f32 %v300, %v300
  %v317 = vmul.f32 %v301, %v301
  %v318 = vmul.f32 %v302, %v302
  %v319 = vmul.f32 %v303, %v303
  %v320 = vmul.f32 %v304, %v304
  %v321 = vmul.f32 %v305, %v305
  %v322 = vmul.f32 %v306, %v306
  %v323 = vmul.f32 %v307, %v307
  %v324 = vmul.f32 %v308, %v308
  %v325 = vmul.f32 %v309, %v309
  %v326 = vmul.f32 %v310, %v310
  %v327 = vmul.f32 %v311, %v311
  %v328 = vsel %vm256, %v312, 0.0
  %v329 = vsel %vm256, %v313, 0.0
  %v330 = vadd.f32 %v328, %v329
  %v331 = vsel %vm256, %v314, 0.0
  %v332 = vadd.f32 %v330, %v331
  %v333 = vsel %vm256, %v315, 0.0
  %v334 = vadd.f32 %v332, %v333
  %v335 = vsel %vm256, %v316, 0.0
  %v336 = vadd.f32 %v334, %v335
  %v337 = vsel %vm256, %v317, 0.0
  %v338 = vadd.f32 %v336, %v337
  %v339 = vsel %vm256, %v318, 0.0
  %v340 = vadd.f32 %v338, %v339
  %v341 = vsel %vm256, %v319, 0.0
  %v342 = vadd.f32 %v340, %v341
  %v343 = vsel %vm256, %v320, 0.0
  %v344 = vadd.f32 %v342, %v343
  %v345 = vsel %vm256, %v321, 0.0
  %v346 = vadd.f32 %v344, %v345
  %v347 = vsel %vm256, %v322, 0.0
  %v348 = vadd.f32 %v346, %v347
  %v349 = vsel %vm256, %v323, 0.0
  %v350 = vadd.f32 %v348, %v349
  %v351 = vsel %vm256, %v324, 0.0
  %v352 = vadd.f32 %v350, %v351
  %v353 = vsel %vm256, %v325, 0.0
  %v354 = vadd.f32 %v352, %v353
  %v355 = vsel %vm256, %v326, 0.0
  %v356 = vadd.f32 %v354, %v355
  %v357 = vsel %vm256, %v327, 0.0
  %v358 = vadd.f32 %v356, %v357
  %v359 = vrot.slane %v358, 4
  %v360 = vadd.f32 %v358, %v359
  %v361 = vrot.slane %v360, 2
  %v362 = vadd.f32 %v360, %v361
  %v363 = vrot.slane %v362, 1
  %v364 = vadd.f32 %v362, %v363
  %v365 = vmul.f32 %v364, %v294
  %v366 = vadd.f32 %v365, 1e-05
  %v367 = vrsqrt.pop %v366
  %v368 = vmul.f32 %v296, %v367
  %v369 = vmul.f32 %v297, %v367
  %v370 = vmul.f32 %v298, %v367
  %v371 = vmul.f32 %v299, %v367
  %v372 = vmul.f32 %v300, %v367
  %v373 = vmul.f32 %v301, %v367
  %v374 = vmul.f32 %v302, %v367
  %v375 = vmul.f32 %v303, %v367
  %v376 = vmul.f32 %v304, %v367
  %v377 = vmul.f32 %v305, %v367
  %v378 = vmul.f32 %v306, %v367
  %v379 = vmul.f32 %v307, %v367
  %v380 = vmul.f32 %v308, %v367
  %v381 = vmul.f32 %v309, %v367
  %v382 = vmul.f32 %v310, %v367
  %v383 = vmul.f32 %v311, %v367
  %v384 = vld [vmem:[%s2] sm:$0x1]
  %v386 = vlaneseq
  %v387 = vshrl.u32 %v386, 7
  %v388 = vsub.s32 0, %v387
  %v389 = vrot.slane %v384, %v388
  %v391 = vmul.f32 %v368, %v389
  %v392 = vmul.f32 %v369, %v389
  %v393 = vmul.f32 %v370, %v389
  %v394 = vmul.f32 %v371, %v389
  %v395 = vmul.f32 %v372, %v389
  %v396 = vmul.f32 %v373, %v389
  %v397 = vmul.f32 %v374, %v389
  %v398 = vmul.f32 %v375, %v389
  %v399 = vmul.f32 %v376, %v389
  %v400 = vmul.f32 %v377, %v389
  %v401 = vmul.f32 %v378, %v389
  %v402 = vmul.f32 %v379, %v389
  %v403 = vmul.f32 %v380, %v389
  %v404 = vmul.f32 %v381, %v389
  %v405 = vmul.f32 %v382, %v389
  %v406 = vmul.f32 %v383, %v389
  %v407 = vld [vmem:[%s3] sm:$0x1]
  %v409 = vlaneseq
  %v410 = vshrl.u32 %v409, 7
  %v411 = vsub.s32 0, %v410
  %v412 = vrot.slane %v407, %v411
  %v414 = vadd.f32 %v391, %v412
  %v415 = vadd.f32 %v392, %v412
  %v416 = vadd.f32 %v393, %v412
  %v417 = vadd.f32 %v394, %v412
  %v418 = vadd.f32 %v395, %v412
  %v419 = vadd.f32 %v396, %v412
  %v420 = vadd.f32 %v397, %v412
  %v421 = vadd.f32 %v398, %v412
  %v422 = vadd.f32 %v399, %v412
  %v423 = vadd.f32 %v400, %v412
  %v424 = vadd.f32 %v401, %v412
  %v425 = vadd.f32 %v402, %v412
  %v426 = vadd.f32 %v403, %v412
  %v427 = vadd.f32 %v404, %v412
  %v428 = vadd.f32 %v405, %v412
  %v429 = vadd.f32 %v406, %v412
  %v430 = vmax.f32 %v414, 0.0
  %v431 = vmax.f32 %v415, 0.0
  %v432 = vmax.f32 %v416, 0.0
  %v433 = vmax.f32 %v417, 0.0
  %v434 = vmax.f32 %v418, 0.0
  %v435 = vmax.f32 %v419, 0.0
  %v436 = vmax.f32 %v420, 0.0
  %v437 = vmax.f32 %v421, 0.0
  %v438 = vmax.f32 %v422, 0.0
  %v439 = vmax.f32 %v423, 0.0
  %v440 = vmax.f32 %v424, 0.0
  %v441 = vmax.f32 %v425, 0.0
  %v442 = vmax.f32 %v426, 0.0
  %v443 = vmax.f32 %v427, 0.0
  %v444 = vmax.f32 %v428, 0.0
  %v445 = vmax.f32 %v429, 0.0
  %v446 = vld [vmem:[%s4] sm:$0xff]
  %v447 = vld [vmem:[%s4 + $0x8] sm:$0xff]
  %v448 = vld [vmem:[%s4 + $0x10] sm:$0xff]
  %v449 = vld [vmem:[%s4 + $0x18] sm:$0xff]
  %450 = vmatprep.subr.mxu0 0.0
  %451 = vmatpush1.msra.mxu0 %v430
  %452 = vmatprep.subr.mxu0 0.0
  %453 = vmatpush1.msra.mxu0 %v431
  %454 = vmatprep.subr.mxu0 0.0
  %455 = vmatpush1.msra.mxu0 %v432
  %456 = vmatprep.subr.mxu0 0.0
  %457 = vmatpush1.msra.mxu0 %v433
  %458 = vmatprep.subr.mxu0 0.0
  %459 = vmatpush1.msra.mxu0 %v434
  %460 = vmatprep.subr.mxu0 0.0
  %461 = vmatpush1.msra.mxu0 %v435
  %462 = vmatprep.subr.mxu0 0.0
  %463 = vmatpush1.msra.mxu0 %v436
  %464 = vmatprep.subr.mxu0 0.0
  %465 = vmatpush1.msra.mxu0 %v437
  %466 = vmatprep.subr.mxu0 0.0
  %467 = vmatpush1.msra.mxu0 %v438
  %468 = vmatprep.subr.mxu0 0.0
  %469 = vmatpush1.msra.mxu0 %v439
  %470 = vmatprep.subr.mxu0 0.0
  %471 = vmatpush1.msra.mxu0 %v440
  %472 = vmatprep.subr.mxu0 0.0
  %473 = vmatpush1.msra.mxu0 %v441
  %474 = vmatprep.subr.mxu0 0.0
  %475 = vmatpush1.msra.mxu0 %v442
  %476 = vmatprep.subr.mxu0 0.0
  %477 = vmatpush1.msra.mxu0 %v443
  %478 = vmatprep.subr.mxu0 0.0
  %479 = vmatpush1.msra.mxu0 %v444
  %480 = vmatprep.subr.mxu0 0.0
  %481 = vmatpush1.msra.mxu0 %v445
  %482 = vmatprep.subr.mxu0 0.0
  %483 = vmatpush1.msra.mxu0 0.0
  %484 = vmatprep.subr.mxu0 0.0
  %485 = vmatpush1.msra.mxu0 0.0
  %486 = vmatprep.subr.mxu0 0.0
  %487 = vmatpush1.msra.mxu0 0.0
  %488 = vmatprep.subr.mxu0 0.0
  %489 = vmatpush1.msra.mxu0 0.0
  %490 = vmatprep.subr.mxu0 0.0
  %491 = vmatpush1.msra.mxu0 0.0
  %492 = vmatprep.subr.mxu0 0.0
  %493 = vmatpush1.msra.mxu0 0.0
  %494 = vmatprep.subr.mxu0 0.0
  %495 = vmatpush1.msra.mxu0 0.0
  %496 = vmatprep.subr.mxu0 0.0
  %497 = vmatpush1.msra.mxu0 0.0
  %498 = vmatprep.subr.mxu0 0.0
  %499 = vmatpush1.msra.mxu0 0.0
  %500 = vmatprep.subr.mxu0 0.0
  %501 = vmatpush1.msra.mxu0 0.0
  %502 = vmatprep.subr.mxu0 0.0
  %503 = vmatpush1.msra.mxu0 0.0
  %504 = vmatprep.subr.mxu0 0.0
  %505 = vmatpush1.msra.mxu0 0.0
  %506 = vmatprep.subr.mxu0 0.0
  %507 = vmatpush1.msra.mxu0 0.0
  %508 = vmatprep.subr.mxu0 0.0
  %509 = vmatpush1.msra.mxu0 0.0
  %510 = vmatprep.subr.mxu0 0.0
  %511 = vmatpush1.msra.mxu0 0.0
  %512 = vmatprep.subr.mxu0 0.0
  %513 = vmatpush1.msra.mxu0 0.0
  %514 = vmatprep.mubr.f32.mxu0 0.0
  %515 = vmatmul.mubr.f32.gmra.mrb[0].mxu0 %v446
  %v516 = vpop.f32.mrb[0].mxu0
  %v517 = vadd.f32 0.0, %v516
  %v518 = vpop.f32.mrb[0].mxu0
  %519 = vmatprep.mubr.f32.mxu0 0.0
  %520 = vmatmul.mubr.f32.gmra.mrb[0].mxu0 %v447
  %v521 = vpop.f32.mrb[0].mxu0
  %v522 = vadd.f32 0.0, %v521
  %v523 = vpop.f32.mrb[0].mxu0
  %524 = vmatprep.mubr.f32.mxu0 0.0
  %525 = vmatmul.mubr.f32.gmra.mrb[0].mxu0 %v448
  %v526 = vpop.f32.mrb[0].mxu0
  %v527 = vadd.f32 0.0, %v526
  %v528 = vpop.f32.mrb[0].mxu0
  %529 = vmatprep.mubr.f32.mxu0 0.0
  %530 = vmatmul.mubr.f32.gmra.mrb[0].mxu0 %v449
  %v531 = vpop.f32.mrb[0].mxu0
  %v532 = vadd.f32 0.0, %v531
  %v533 = vpop.f32.mrb[0].mxu0
  %534 = vdwg.mxu0
  %v535 = vld [vmem:[%s5] sm:$0xff]
  %s536 = scalar_lea.vmem %s4, 32
  %v537 = vld [vmem:[%s536] sm:$0xff]
  %v538 = vld [vmem:[%s536 + $0x8] sm:$0xff]
  %v539 = vld [vmem:[%s536 + $0x10] sm:$0xff]
  %v540 = vld [vmem:[%s536 + $0x18] sm:$0xff]
  %541 = vmatprep.subr.mxu0 0.0
  %542 = vmatpush1.msra.mxu0 %v430
  %543 = vmatprep.subr.mxu0 0.0
  %544 = vmatpush1.msra.mxu0 %v431
  %545 = vmatprep.subr.mxu0 0.0
  %546 = vmatpush1.msra.mxu0 %v432
  %547 = vmatprep.subr.mxu0 0.0
  %548 = vmatpush1.msra.mxu0 %v433
  %549 = vmatprep.subr.mxu0 0.0
  %550 = vmatpush1.msra.mxu0 %v434
  %551 = vmatprep.subr.mxu0 0.0
  %552 = vmatpush1.msra.mxu0 %v435
  %553 = vmatprep.subr.mxu0 0.0
  %554 = vmatpush1.msra.mxu0 %v436
  %555 = vmatprep.subr.mxu0 0.0
  %556 = vmatpush1.msra.mxu0 %v437
  %557 = vmatprep.subr.mxu0 0.0
  %558 = vmatpush1.msra.mxu0 %v438
  %559 = vmatprep.subr.mxu0 0.0
  %560 = vmatpush1.msra.mxu0 %v439
  %561 = vmatprep.subr.mxu0 0.0
  %562 = vmatpush1.msra.mxu0 %v440
  %563 = vmatprep.subr.mxu0 0.0
  %564 = vmatpush1.msra.mxu0 %v441
  %565 = vmatprep.subr.mxu0 0.0
  %566 = vmatpush1.msra.mxu0 %v442
  %567 = vmatprep.subr.mxu0 0.0
  %568 = vmatpush1.msra.mxu0 %v443
  %569 = vmatprep.subr.mxu0 0.0
  %570 = vmatpush1.msra.mxu0 %v444
  %571 = vmatprep.subr.mxu0 0.0
  %572 = vmatpush1.msra.mxu0 %v445
  %573 = vmatprep.subr.mxu0 0.0
  %574 = vmatpush1.msra.mxu0 0.0
  %575 = vmatprep.subr.mxu0 0.0
  %576 = vmatpush1.msra.mxu0 0.0
  %577 = vmatprep.subr.mxu0 0.0
  %578 = vmatpush1.msra.mxu0 0.0
  %579 = vmatprep.subr.mxu0 0.0
  %580 = vmatpush1.msra.mxu0 0.0
  %581 = vmatprep.subr.mxu0 0.0
  %582 = vmatpush1.msra.mxu0 0.0
  %583 = vmatprep.subr.mxu0 0.0
  %584 = vmatpush1.msra.mxu0 0.0
  %585 = vmatprep.subr.mxu0 0.0
  %586 = vmatpush1.msra.mxu0 0.0
  %587 = vmatprep.subr.mxu0 0.0
  %588 = vmatpush1.msra.mxu0 0.0
  %589 = vmatprep.subr.mxu0 0.0
  %590 = vmatpush1.msra.mxu0 0.0
  %591 = vmatprep.subr.mxu0 0.0
  %592 = vmatpush1.msra.mxu0 0.0
  %593 = vmatprep.subr.mxu0 0.0
  %594 = vmatpush1.msra.mxu0 0.0
  %595 = vmatprep.subr.mxu0 0.0
  %596 = vmatpush1.msra.mxu0 0.0
  %597 = vmatprep.subr.mxu0 0.0
  %598 = vmatpush1.msra.mxu0 0.0
  %599 = vmatprep.subr.mxu0 0.0
  %600 = vmatpush1.msra.mxu0 0.0
  %601 = vmatprep.subr.mxu0 0.0
  %602 = vmatpush1.msra.mxu0 0.0
  %603 = vmatprep.subr.mxu0 0.0
  %604 = vmatpush1.msra.mxu0 0.0
  %605 = vmatprep.mubr.f32.mxu0 0.0
  %606 = vmatmul.mubr.f32.gmra.mrb[0].mxu0 %v537
  %v607 = vpop.f32.mrb[0].mxu0
  %v608 = vadd.f32 0.0, %v607
  %v609 = vpop.f32.mrb[0].mxu0
  %610 = vmatprep.mubr.f32.mxu0 0.0
  %611 = vmatmul.mubr.f32.gmra.mrb[0].mxu0 %v538
  %v612 = vpop.f32.mrb[0].mxu0
  %v613 = vadd.f32 0.0, %v612
  %v614 = vpop.f32.mrb[0].mxu0
  %615 = vmatprep.mubr.f32.mxu0 0.0
  %616 = vmatmul.mubr.f32.gmra.mrb[0].mxu0 %v539
  %v617 = vpop.f32.mrb[0].mxu0
  %v618 = vadd.f32 0.0, %v617
  %v619 = vpop.f32.mrb[0].mxu0
  %620 = vmatprep.mubr.f32.mxu0 0.0
  %621 = vmatmul.mubr.f32.gmra.mrb[0].mxu0 %v540
  %v622 = vpop.f32.mrb[0].mxu0
  %v623 = vadd.f32 0.0, %v622
  %v624 = vpop.f32.mrb[0].mxu0
  %625 = vdwg.mxu0
  %s626 = scalar_lea.vmem %s5, 8
  %v627 = vld [vmem:[%s626] sm:$0xff]
  %v629 = vsel %vm256, %v608, 0
  %v632 = vsel %vm256, %v613, 0
  %v635 = vsel %vm256, %v618, 0
  %v638 = vsel %vm256, %v623, 0
  %640 = vmatprep.subr.mxu0 0.0
  %641 = vmatpush1.msra.mxu0 %v627
  %642 = vmatprep.subr.mxu0 0.0
  %643 = vmatpush1.msra.mxu0 0.0
  %644 = vmatprep.subr.mxu0 0.0
  %645 = vmatpush1.msra.mxu0 0.0
  %646 = vmatprep.subr.mxu0 0.0
  %647 = vmatpush1.msra.mxu0 0.0
  %648 = vmatprep.subr.mxu0 0.0
  %649 = vmatpush1.msra.mxu0 0.0
  %650 = vmatprep.subr.mxu0 0.0
  %651 = vmatpush1.msra.mxu0 0.0
  %652 = vmatprep.subr.mxu0 0.0
  %653 = vmatpush1.msra.mxu0 0.0
  %654 = vmatprep.subr.mxu0 0.0
  %655 = vmatpush1.msra.mxu0 0.0
  %656 = vmatprep.subr.mxu0 0.0
  %657 = vmatpush1.msra.mxu0 0.0
  %658 = vmatprep.subr.mxu0 0.0
  %659 = vmatpush1.msra.mxu0 0.0
  %660 = vmatprep.subr.mxu0 0.0
  %661 = vmatpush1.msra.mxu0 0.0
  %662 = vmatprep.subr.mxu0 0.0
  %663 = vmatpush1.msra.mxu0 0.0
  %664 = vmatprep.subr.mxu0 0.0
  %665 = vmatpush1.msra.mxu0 0.0
  %666 = vmatprep.subr.mxu0 0.0
  %667 = vmatpush1.msra.mxu0 0.0
  %668 = vmatprep.subr.mxu0 0.0
  %669 = vmatpush1.msra.mxu0 0.0
  %670 = vmatprep.subr.mxu0 0.0
  %671 = vmatpush1.msra.mxu0 0.0
  %672 = vmatprep.subr.mxu0 0.0
  %673 = vmatpush1.msra.mxu0 0.0
  %674 = vmatprep.subr.mxu0 0.0
  %675 = vmatpush1.msra.mxu0 0.0
  %676 = vmatprep.subr.mxu0 0.0
  %677 = vmatpush1.msra.mxu0 0.0
  %678 = vmatprep.subr.mxu0 0.0
  %679 = vmatpush1.msra.mxu0 0.0
  %680 = vmatprep.subr.mxu0 0.0
  %681 = vmatpush1.msra.mxu0 0.0
  %682 = vmatprep.subr.mxu0 0.0
  %683 = vmatpush1.msra.mxu0 0.0
  %684 = vmatprep.subr.mxu0 0.0
  %685 = vmatpush1.msra.mxu0 0.0
  %686 = vmatprep.subr.mxu0 0.0
  %687 = vmatpush1.msra.mxu0 0.0
  %688 = vmatprep.subr.mxu0 0.0
  %689 = vmatpush1.msra.mxu0 0.0
  %690 = vmatprep.subr.mxu0 0.0
  %691 = vmatpush1.msra.mxu0 0.0
  %692 = vmatprep.subr.mxu0 0.0
  %693 = vmatpush1.msra.mxu0 0.0
  %694 = vmatprep.subr.mxu0 0.0
  %695 = vmatpush1.msra.mxu0 0.0
  %696 = vmatprep.subr.mxu0 0.0
  %697 = vmatpush1.msra.mxu0 0.0
  %698 = vmatprep.subr.mxu0 0.0
  %699 = vmatpush1.msra.mxu0 0.0
  %700 = vmatprep.subr.mxu0 0.0
  %701 = vmatpush1.msra.mxu0 0.0
  %702 = vmatprep.subr.mxu0 0.0
  %703 = vmatpush1.msra.mxu0 0.0
  %704 = vmatprep.mubr.f32.mxu0 0.0
  %705 = vmatmul.mubr.f32.gmra.mrb[0].mxu0 %v629
  %v706 = vpop.f32.mrb[0].mxu0
  %v707 = vadd.f32 0.0, %v706
  %v708 = vpop.f32.mrb[0].mxu0
  %709 = vmatprep.mubr.f32.mxu0 0.0
  %710 = vmatmul.mubr.f32.gmra.mrb[0].mxu0 %v632
  %v711 = vpop.f32.mrb[0].mxu0
  %v712 = vadd.f32 0.0, %v711
  %v713 = vpop.f32.mrb[0].mxu0
  %714 = vmatprep.mubr.f32.mxu0 0.0
  %715 = vmatmul.mubr.f32.gmra.mrb[0].mxu0 %v635
  %v716 = vpop.f32.mrb[0].mxu0
  %v717 = vadd.f32 0.0, %v716
  %v718 = vpop.f32.mrb[0].mxu0
  %719 = vmatprep.mubr.f32.mxu0 0.0
  %720 = vmatmul.mubr.f32.gmra.mrb[0].mxu0 %v638
  %v721 = vpop.f32.mrb[0].mxu0
  %v722 = vadd.f32 0.0, %v721
  %v723 = vpop.f32.mrb[0].mxu0
  %724 = vdwg.mxu0
  %v726 = vsel %vm256, %v517, 0
  %v729 = vsel %vm256, %v522, 0
  %v732 = vsel %vm256, %v527, 0
  %v735 = vsel %vm256, %v532, 0
  %737 = vmatprep.subr.mxu0 0.0
  %738 = vmatpush1.msra.mxu0 %v535
  %739 = vmatprep.subr.mxu0 0.0
  %740 = vmatpush1.msra.mxu0 0.0
  %741 = vmatprep.subr.mxu0 0.0
  %742 = vmatpush1.msra.mxu0 0.0
  %743 = vmatprep.subr.mxu0 0.0
  %744 = vmatpush1.msra.mxu0 0.0
  %745 = vmatprep.subr.mxu0 0.0
  %746 = vmatpush1.msra.mxu0 0.0
  %747 = vmatprep.subr.mxu0 0.0
  %748 = vmatpush1.msra.mxu0 0.0
  %749 = vmatprep.subr.mxu0 0.0
  %750 = vmatpush1.msra.mxu0 0.0
  %751 = vmatprep.subr.mxu0 0.0
  %752 = vmatpush1.msra.mxu0 0.0
  %753 = vmatprep.subr.mxu0 0.0
  %754 = vmatpush1.msra.mxu0 0.0
  %755 = vmatprep.subr.mxu0 0.0
  %756 = vmatpush1.msra.mxu0 0.0
  %757 = vmatprep.subr.mxu0 0.0
  %758 = vmatpush1.msra.mxu0 0.0
  %759 = vmatprep.subr.mxu0 0.0
  %760 = vmatpush1.msra.mxu0 0.0
  %761 = vmatprep.subr.mxu0 0.0
  %762 = vmatpush1.msra.mxu0 0.0
  %763 = vmatprep.subr.mxu0 0.0
  %764 = vmatpush1.msra.mxu0 0.0
  %765 = vmatprep.subr.mxu0 0.0
  %766 = vmatpush1.msra.mxu0 0.0
  %767 = vmatprep.subr.mxu0 0.0
  %768 = vmatpush1.msra.mxu0 0.0
  %769 = vmatprep.subr.mxu0 0.0
  %770 = vmatpush1.msra.mxu0 0.0
  %771 = vmatprep.subr.mxu0 0.0
  %772 = vmatpush1.msra.mxu0 0.0
  %773 = vmatprep.subr.mxu0 0.0
  %774 = vmatpush1.msra.mxu0 0.0
  %775 = vmatprep.subr.mxu0 0.0
  %776 = vmatpush1.msra.mxu0 0.0
  %777 = vmatprep.subr.mxu0 0.0
  %778 = vmatpush1.msra.mxu0 0.0
  %779 = vmatprep.subr.mxu0 0.0
  %780 = vmatpush1.msra.mxu0 0.0
  %781 = vmatprep.subr.mxu0 0.0
  %782 = vmatpush1.msra.mxu0 0.0
  %783 = vmatprep.subr.mxu0 0.0
  %784 = vmatpush1.msra.mxu0 0.0
  %785 = vmatprep.subr.mxu0 0.0
  %786 = vmatpush1.msra.mxu0 0.0
  %787 = vmatprep.subr.mxu0 0.0
  %788 = vmatpush1.msra.mxu0 0.0
  %789 = vmatprep.subr.mxu0 0.0
  %790 = vmatpush1.msra.mxu0 0.0
  %791 = vmatprep.subr.mxu0 0.0
  %792 = vmatpush1.msra.mxu0 0.0
  %793 = vmatprep.subr.mxu0 0.0
  %794 = vmatpush1.msra.mxu0 0.0
  %795 = vmatprep.subr.mxu0 0.0
  %796 = vmatpush1.msra.mxu0 0.0
  %797 = vmatprep.subr.mxu0 0.0
  %798 = vmatpush1.msra.mxu0 0.0
  %799 = vmatprep.subr.mxu0 0.0
  %800 = vmatpush1.msra.mxu0 0.0
  %801 = vmatprep.mubr.f32.mxu0 0.0
  %802 = vmatmul.mubr.f32.gmra.mrb[0].mxu0 %v726
  %v803 = vpop.f32.mrb[0].mxu0
  %v804 = vadd.f32 %v707, %v803
  %v805 = vpop.f32.mrb[0].mxu0
  %806 = vmatprep.mubr.f32.mxu0 0.0
  %807 = vmatmul.mubr.f32.gmra.mrb[0].mxu0 %v729
  %v808 = vpop.f32.mrb[0].mxu0
  %v809 = vadd.f32 %v712, %v808
  %v810 = vpop.f32.mrb[0].mxu0
  %811 = vmatprep.mubr.f32.mxu0 0.0
  %812 = vmatmul.mubr.f32.gmra.mrb[0].mxu0 %v732
  %v813 = vpop.f32.mrb[0].mxu0
  %v814 = vadd.f32 %v717, %v813
  %v815 = vpop.f32.mrb[0].mxu0
  %816 = vmatprep.mubr.f32.mxu0 0.0
  %817 = vmatmul.mubr.f32.gmra.mrb[0].mxu0 %v735
  %v818 = vpop.f32.mrb[0].mxu0
  %v819 = vadd.f32 %v722, %v818
  %v820 = vpop.f32.mrb[0].mxu0
  %821 = vdwg.mxu0
  %s822 = scalar_lea.vmem %s4, 64
  %v823 = vld [vmem:[%s822] sm:$0xff]
  %v824 = vld [vmem:[%s822 + $0x8] sm:$0xff]
  %v825 = vld [vmem:[%s822 + $0x10] sm:$0xff]
  %v826 = vld [vmem:[%s822 + $0x18] sm:$0xff]
  %827 = vmatprep.subr.mxu0 0.0
  %828 = vmatpush1.msra.mxu0 %v430
  %829 = vmatprep.subr.mxu0 0.0
  %830 = vmatpush1.msra.mxu0 %v431
  %831 = vmatprep.subr.mxu0 0.0
  %832 = vmatpush1.msra.mxu0 %v432
  %833 = vmatprep.subr.mxu0 0.0
  %834 = vmatpush1.msra.mxu0 %v433
  %835 = vmatprep.subr.mxu0 0.0
  %836 = vmatpush1.msra.mxu0 %v434
  %837 = vmatprep.subr.mxu0 0.0
  %838 = vmatpush1.msra.mxu0 %v435
  %839 = vmatprep.subr.mxu0 0.0
  %840 = vmatpush1.msra.mxu0 %v436
  %841 = vmatprep.subr.mxu0 0.0
  %842 = vmatpush1.msra.mxu0 %v437
  %843 = vmatprep.subr.mxu0 0.0
  %844 = vmatpush1.msra.mxu0 %v438
  %845 = vmatprep.subr.mxu0 0.0
  %846 = vmatpush1.msra.mxu0 %v439
  %847 = vmatprep.subr.mxu0 0.0
  %848 = vmatpush1.msra.mxu0 %v440
  %849 = vmatprep.subr.mxu0 0.0
  %850 = vmatpush1.msra.mxu0 %v441
  %851 = vmatprep.subr.mxu0 0.0
  %852 = vmatpush1.msra.mxu0 %v442
  %853 = vmatprep.subr.mxu0 0.0
  %854 = vmatpush1.msra.mxu0 %v443
  %855 = vmatprep.subr.mxu0 0.0
  %856 = vmatpush1.msra.mxu0 %v444
  %857 = vmatprep.subr.mxu0 0.0
  %858 = vmatpush1.msra.mxu0 %v445
  %859 = vmatprep.subr.mxu0 0.0
  %860 = vmatpush1.msra.mxu0 0.0
  %861 = vmatprep.subr.mxu0 0.0
  %862 = vmatpush1.msra.mxu0 0.0
  %863 = vmatprep.subr.mxu0 0.0
  %864 = vmatpush1.msra.mxu0 0.0
  %865 = vmatprep.subr.mxu0 0.0
  %866 = vmatpush1.msra.mxu0 0.0
  %867 = vmatprep.subr.mxu0 0.0
  %868 = vmatpush1.msra.mxu0 0.0
  %869 = vmatprep.subr.mxu0 0.0
  %870 = vmatpush1.msra.mxu0 0.0
  %871 = vmatprep.subr.mxu0 0.0
  %872 = vmatpush1.msra.mxu0 0.0
  %873 = vmatprep.subr.mxu0 0.0
  %874 = vmatpush1.msra.mxu0 0.0
  %875 = vmatprep.subr.mxu0 0.0
  %876 = vmatpush1.msra.mxu0 0.0
  %877 = vmatprep.subr.mxu0 0.0
  %878 = vmatpush1.msra.mxu0 0.0
  %879 = vmatprep.subr.mxu0 0.0
  %880 = vmatpush1.msra.mxu0 0.0
  %881 = vmatprep.subr.mxu0 0.0
  %882 = vmatpush1.msra.mxu0 0.0
  %883 = vmatprep.subr.mxu0 0.0
  %884 = vmatpush1.msra.mxu0 0.0
  %885 = vmatprep.subr.mxu0 0.0
  %886 = vmatpush1.msra.mxu0 0.0
  %887 = vmatprep.subr.mxu0 0.0
  %888 = vmatpush1.msra.mxu0 0.0
  %889 = vmatprep.subr.mxu0 0.0
  %890 = vmatpush1.msra.mxu0 0.0
  %891 = vmatprep.mubr.f32.mxu0 0.0
  %892 = vmatmul.mubr.f32.gmra.mrb[0].mxu0 %v823
  %v893 = vpop.f32.mrb[0].mxu0
  %v894 = vadd.f32 0.0, %v893
  %v895 = vpop.f32.mrb[0].mxu0
  %896 = vmatprep.mubr.f32.mxu0 0.0
  %897 = vmatmul.mubr.f32.gmra.mrb[0].mxu0 %v824
  %v898 = vpop.f32.mrb[0].mxu0
  %v899 = vadd.f32 0.0, %v898
  %v900 = vpop.f32.mrb[0].mxu0
  %901 = vmatprep.mubr.f32.mxu0 0.0
  %902 = vmatmul.mubr.f32.gmra.mrb[0].mxu0 %v825
  %v903 = vpop.f32.mrb[0].mxu0
  %v904 = vadd.f32 0.0, %v903
  %v905 = vpop.f32.mrb[0].mxu0
  %906 = vmatprep.mubr.f32.mxu0 0.0
  %907 = vmatmul.mubr.f32.gmra.mrb[0].mxu0 %v826
  %v908 = vpop.f32.mrb[0].mxu0
  %v909 = vadd.f32 0.0, %v908
  %v910 = vpop.f32.mrb[0].mxu0
  %911 = vdwg.mxu0
  %s912 = scalar_lea.vmem %s5, 16
  %v913 = vld [vmem:[%s912] sm:$0xff]
  %v915 = vsel %vm256, %v894, 0
  %v918 = vsel %vm256, %v899, 0
  %v921 = vsel %vm256, %v904, 0
  %v924 = vsel %vm256, %v909, 0
  %926 = vmatprep.subr.mxu0 0.0
  %927 = vmatpush1.msra.mxu0 %v913
  %928 = vmatprep.subr.mxu0 0.0
  %929 = vmatpush1.msra.mxu0 0.0
  %930 = vmatprep.subr.mxu0 0.0
  %931 = vmatpush1.msra.mxu0 0.0
  %932 = vmatprep.subr.mxu0 0.0
  %933 = vmatpush1.msra.mxu0 0.0
  %934 = vmatprep.subr.mxu0 0.0
  %935 = vmatpush1.msra.mxu0 0.0
  %936 = vmatprep.subr.mxu0 0.0
  %937 = vmatpush1.msra.mxu0 0.0
  %938 = vmatprep.subr.mxu0 0.0
  %939 = vmatpush1.msra.mxu0 0.0
  %940 = vmatprep.subr.mxu0 0.0
  %941 = vmatpush1.msra.mxu0 0.0
  %942 = vmatprep.subr.mxu0 0.0
  %943 = vmatpush1.msra.mxu0 0.0
  %944 = vmatprep.subr.mxu0 0.0
  %945 = vmatpush1.msra.mxu0 0.0
  %946 = vmatprep.subr.mxu0 0.0
  %947 = vmatpush1.msra.mxu0 0.0
  %948 = vmatprep.subr.mxu0 0.0
  %949 = vmatpush1.msra.mxu0 0.0
  %950 = vmatprep.subr.mxu0 0.0
  %951 = vmatpush1.msra.mxu0 0.0
  %952 = vmatprep.subr.mxu0 0.0
  %953 = vmatpush1.msra.mxu0 0.0
  %954 = vmatprep.subr.mxu0 0.0
  %955 = vmatpush1.msra.mxu0 0.0
  %956 = vmatprep.subr.mxu0 0.0
  %957 = vmatpush1.msra.mxu0 0.0
  %958 = vmatprep.subr.mxu0 0.0
  %959 = vmatpush1.msra.mxu0 0.0
  %960 = vmatprep.subr.mxu0 0.0
  %961 = vmatpush1.msra.mxu0 0.0
  %962 = vmatprep.subr.mxu0 0.0
  %963 = vmatpush1.msra.mxu0 0.0
  %964 = vmatprep.subr.mxu0 0.0
  %965 = vmatpush1.msra.mxu0 0.0
  %966 = vmatprep.subr.mxu0 0.0
  %967 = vmatpush1.msra.mxu0 0.0
  %968 = vmatprep.subr.mxu0 0.0
  %969 = vmatpush1.msra.mxu0 0.0
  %970 = vmatprep.subr.mxu0 0.0
  %971 = vmatpush1.msra.mxu0 0.0
  %972 = vmatprep.subr.mxu0 0.0
  %973 = vmatpush1.msra.mxu0 0.0
  %974 = vmatprep.subr.mxu0 0.0
  %975 = vmatpush1.msra.mxu0 0.0
  %976 = vmatprep.subr.mxu0 0.0
  %977 = vmatpush1.msra.mxu0 0.0
  %978 = vmatprep.subr.mxu0 0.0
  %979 = vmatpush1.msra.mxu0 0.0
  %980 = vmatprep.subr.mxu0 0.0
  %981 = vmatpush1.msra.mxu0 0.0
  %982 = vmatprep.subr.mxu0 0.0
  %983 = vmatpush1.msra.mxu0 0.0
  %984 = vmatprep.subr.mxu0 0.0
  %985 = vmatpush1.msra.mxu0 0.0
  %986 = vmatprep.subr.mxu0 0.0
  %987 = vmatpush1.msra.mxu0 0.0
  %988 = vmatprep.subr.mxu0 0.0
  %989 = vmatpush1.msra.mxu0 0.0
  %990 = vmatprep.mubr.f32.mxu0 0.0
  %991 = vmatmul.mubr.f32.gmra.mrb[0].mxu0 %v915
  %v992 = vpop.f32.mrb[0].mxu0
  %v993 = vadd.f32 0.0, %v992
  %v994 = vpop.f32.mrb[0].mxu0
  %995 = vmatprep.mubr.f32.mxu0 0.0
  %996 = vmatmul.mubr.f32.gmra.mrb[0].mxu0 %v918
  %v997 = vpop.f32.mrb[0].mxu0
  %v998 = vadd.f32 0.0, %v997
  %v999 = vpop.f32.mrb[0].mxu0
  %1000 = vmatprep.mubr.f32.mxu0 0.0
  %1001 = vmatmul.mubr.f32.gmra.mrb[0].mxu0 %v921
  %v1002 = vpop.f32.mrb[0].mxu0
  %v1003 = vadd.f32 0.0, %v1002
  %v1004 = vpop.f32.mrb[0].mxu0
  %1005 = vmatprep.mubr.f32.mxu0 0.0
  %1006 = vmatmul.mubr.f32.gmra.mrb[0].mxu0 %v924
  %v1007 = vpop.f32.mrb[0].mxu0
  %v1008 = vadd.f32 0.0, %v1007
  %v1009 = vpop.f32.mrb[0].mxu0
  %1010 = vdwg.mxu0
  %v1011 = vadd.f32 %v804, %v993
  %v1012 = vadd.f32 %v809, %v998
  %v1013 = vadd.f32 %v814, %v1003
  %v1014 = vadd.f32 %v819, %v1008
  %s1015 = scalar_lea.vmem %s4, 96
  %v1016 = vld [vmem:[%s1015] sm:$0xff]
  %v1017 = vld [vmem:[%s1015 + $0x8] sm:$0xff]
  %v1018 = vld [vmem:[%s1015 + $0x10] sm:$0xff]
  %v1019 = vld [vmem:[%s1015 + $0x18] sm:$0xff]
  %1020 = vmatprep.subr.mxu0 0.0
  %1021 = vmatpush1.msra.mxu0 %v430
  %1022 = vmatprep.subr.mxu0 0.0
  %1023 = vmatpush1.msra.mxu0 %v431
  %1024 = vmatprep.subr.mxu0 0.0
  %1025 = vmatpush1.msra.mxu0 %v432
  %1026 = vmatprep.subr.mxu0 0.0
  %1027 = vmatpush1.msra.mxu0 %v433
  %1028 = vmatprep.subr.mxu0 0.0
  %1029 = vmatpush1.msra.mxu0 %v434
  %1030 = vmatprep.subr.mxu0 0.0
  %1031 = vmatpush1.msra.mxu0 %v435
  %1032 = vmatprep.subr.mxu0 0.0
  %1033 = vmatpush1.msra.mxu0 %v436
  %1034 = vmatprep.subr.mxu0 0.0
  %1035 = vmatpush1.msra.mxu0 %v437
  %1036 = vmatprep.subr.mxu0 0.0
  %1037 = vmatpush1.msra.mxu0 %v438
  %1038 = vmatprep.subr.mxu0 0.0
  %1039 = vmatpush1.msra.mxu0 %v439
  %1040 = vmatprep.subr.mxu0 0.0
  %1041 = vmatpush1.msra.mxu0 %v440
  %1042 = vmatprep.subr.mxu0 0.0
  %1043 = vmatpush1.msra.mxu0 %v441
  %1044 = vmatprep.subr.mxu0 0.0
  %1045 = vmatpush1.msra.mxu0 %v442
  %1046 = vmatprep.subr.mxu0 0.0
  %1047 = vmatpush1.msra.mxu0 %v443
  %1048 = vmatprep.subr.mxu0 0.0
  %1049 = vmatpush1.msra.mxu0 %v444
  %1050 = vmatprep.subr.mxu0 0.0
  %1051 = vmatpush1.msra.mxu0 %v445
  %1052 = vmatprep.subr.mxu0 0.0
  %1053 = vmatpush1.msra.mxu0 0.0
  %1054 = vmatprep.subr.mxu0 0.0
  %1055 = vmatpush1.msra.mxu0 0.0
  %1056 = vmatprep.subr.mxu0 0.0
  %1057 = vmatpush1.msra.mxu0 0.0
  %1058 = vmatprep.subr.mxu0 0.0
  %1059 = vmatpush1.msra.mxu0 0.0
  %1060 = vmatprep.subr.mxu0 0.0
  %1061 = vmatpush1.msra.mxu0 0.0
  %1062 = vmatprep.subr.mxu0 0.0
  %1063 = vmatpush1.msra.mxu0 0.0
  %1064 = vmatprep.subr.mxu0 0.0
  %1065 = vmatpush1.msra.mxu0 0.0
  %1066 = vmatprep.subr.mxu0 0.0
  %1067 = vmatpush1.msra.mxu0 0.0
  %1068 = vmatprep.subr.mxu0 0.0
  %1069 = vmatpush1.msra.mxu0 0.0
  %1070 = vmatprep.subr.mxu0 0.0
  %1071 = vmatpush1.msra.mxu0 0.0
  %1072 = vmatprep.subr.mxu0 0.0
  %1073 = vmatpush1.msra.mxu0 0.0
  %1074 = vmatprep.subr.mxu0 0.0
  %1075 = vmatpush1.msra.mxu0 0.0
  %1076 = vmatprep.subr.mxu0 0.0
  %1077 = vmatpush1.msra.mxu0 0.0
  %1078 = vmatprep.subr.mxu0 0.0
  %1079 = vmatpush1.msra.mxu0 0.0
  %1080 = vmatprep.subr.mxu0 0.0
  %1081 = vmatpush1.msra.mxu0 0.0
  %1082 = vmatprep.subr.mxu0 0.0
  %1083 = vmatpush1.msra.mxu0 0.0
  %1084 = vmatprep.mubr.f32.mxu0 0.0
  %1085 = vmatmul.mubr.f32.gmra.mrb[0].mxu0 %v1016
  %v1086 = vpop.f32.mrb[0].mxu0
  %v1087 = vadd.f32 0.0, %v1086
  %v1088 = vpop.f32.mrb[0].mxu0
  %1089 = vmatprep.mubr.f32.mxu0 0.0
  %1090 = vmatmul.mubr.f32.gmra.mrb[0].mxu0 %v1017
  %v1091 = vpop.f32.mrb[0].mxu0
  %v1092 = vadd.f32 0.0, %v1091
  %v1093 = vpop.f32.mrb[0].mxu0
  %1094 = vmatprep.mubr.f32.mxu0 0.0
  %1095 = vmatmul.mubr.f32.gmra.mrb[0].mxu0 %v1018
  %v1096 = vpop.f32.mrb[0].mxu0
  %v1097 = vadd.f32 0.0, %v1096
  %v1098 = vpop.f32.mrb[0].mxu0
  %1099 = vmatprep.mubr.f32.mxu0 0.0
  %1100 = vmatmul.mubr.f32.gmra.mrb[0].mxu0 %v1019
  %v1101 = vpop.f32.mrb[0].mxu0
  %v1102 = vadd.f32 0.0, %v1101
  %v1103 = vpop.f32.mrb[0].mxu0
  %1104 = vdwg.mxu0
  %s1105 = scalar_lea.vmem %s5, 24
  %v1106 = vld [vmem:[%s1105] sm:$0xff]
  %v1108 = vsel %vm256, %v1087, 0
  %v1111 = vsel %vm256, %v1092, 0
  %v1114 = vsel %vm256, %v1097, 0
  %v1117 = vsel %vm256, %v1102, 0
  %1119 = vmatprep.subr.mxu0 0.0
  %1120 = vmatpush1.msra.mxu0 %v1106
  %1121 = vmatprep.subr.mxu0 0.0
  %1122 = vmatpush1.msra.mxu0 0.0
  %1123 = vmatprep.subr.mxu0 0.0
  %1124 = vmatpush1.msra.mxu0 0.0
  %1125 = vmatprep.subr.mxu0 0.0
  %1126 = vmatpush1.msra.mxu0 0.0
  %1127 = vmatprep.subr.mxu0 0.0
  %1128 = vmatpush1.msra.mxu0 0.0
  %1129 = vmatprep.subr.mxu0 0.0
  %1130 = vmatpush1.msra.mxu0 0.0
  %1131 = vmatprep.subr.mxu0 0.0
  %1132 = vmatpush1.msra.mxu0 0.0
  %1133 = vmatprep.subr.mxu0 0.0
  %1134 = vmatpush1.msra.mxu0 0.0
  %1135 = vmatprep.subr.mxu0 0.0
  %1136 = vmatpush1.msra.mxu0 0.0
  %1137 = vmatprep.subr.mxu0 0.0
  %1138 = vmatpush1.msra.mxu0 0.0
  %1139 = vmatprep.subr.mxu0 0.0
  %1140 = vmatpush1.msra.mxu0 0.0
  %1141 = vmatprep.subr.mxu0 0.0
  %1142 = vmatpush1.msra.mxu0 0.0
  %1143 = vmatprep.subr.mxu0 0.0
  %1144 = vmatpush1.msra.mxu0 0.0
  %1145 = vmatprep.subr.mxu0 0.0
  %1146 = vmatpush1.msra.mxu0 0.0
  %1147 = vmatprep.subr.mxu0 0.0
  %1148 = vmatpush1.msra.mxu0 0.0
  %1149 = vmatprep.subr.mxu0 0.0
  %1150 = vmatpush1.msra.mxu0 0.0
  %1151 = vmatprep.subr.mxu0 0.0
  %1152 = vmatpush1.msra.mxu0 0.0
  %1153 = vmatprep.subr.mxu0 0.0
  %1154 = vmatpush1.msra.mxu0 0.0
  %1155 = vmatprep.subr.mxu0 0.0
  %1156 = vmatpush1.msra.mxu0 0.0
  %1157 = vmatprep.subr.mxu0 0.0
  %1158 = vmatpush1.msra.mxu0 0.0
  %1159 = vmatprep.subr.mxu0 0.0
  %1160 = vmatpush1.msra.mxu0 0.0
  %1161 = vmatprep.subr.mxu0 0.0
  %1162 = vmatpush1.msra.mxu0 0.0
  %1163 = vmatprep.subr.mxu0 0.0
  %1164 = vmatpush1.msra.mxu0 0.0
  %1165 = vmatprep.subr.mxu0 0.0
  %1166 = vmatpush1.msra.mxu0 0.0
  %1167 = vmatprep.subr.mxu0 0.0
  %1168 = vmatpush1.msra.mxu0 0.0
  %1169 = vmatprep.subr.mxu0 0.0
  %1170 = vmatpush1.msra.mxu0 0.0
  %1171 = vmatprep.subr.mxu0 0.0
  %1172 = vmatpush1.msra.mxu0 0.0
  %1173 = vmatprep.subr.mxu0 0.0
  %1174 = vmatpush1.msra.mxu0 0.0
  %1175 = vmatprep.subr.mxu0 0.0
  %1176 = vmatpush1.msra.mxu0 0.0
  %1177 = vmatprep.subr.mxu0 0.0
  %1178 = vmatpush1.msra.mxu0 0.0
  %1179 = vmatprep.subr.mxu0 0.0
  %1180 = vmatpush1.msra.mxu0 0.0
  %1181 = vmatprep.subr.mxu0 0.0
  %1182 = vmatpush1.msra.mxu0 0.0
  %1183 = vmatprep.mubr.f32.mxu0 0.0
  %1184 = vmatmul.mubr.f32.gmra.mrb[0].mxu0 %v1108
  %v1185 = vpop.f32.mrb[0].mxu0
  %v1186 = vadd.f32 0.0, %v1185
  %v1187 = vpop.f32.mrb[0].mxu0
  %1188 = vmatprep.mubr.f32.mxu0 0.0
  %1189 = vmatmul.mubr.f32.gmra.mrb[0].mxu0 %v1111
  %v1190 = vpop.f32.mrb[0].mxu0
  %v1191 = vadd.f32 0.0, %v1190
  %v1192 = vpop.f32.mrb[0].mxu0
  %1193 = vmatprep.mubr.f32.mxu0 0.0
  %1194 = vmatmul.mubr.f32.gmra.mrb[0].mxu0 %v1114
  %v1195 = vpop.f32.mrb[0].mxu0
  %v1196 = vadd.f32 0.0, %v1195
  %v1197 = vpop.f32.mrb[0].mxu0
  %1198 = vmatprep.mubr.f32.mxu0 0.0
  %1199 = vmatmul.mubr.f32.gmra.mrb[0].mxu0 %v1117
  %v1200 = vpop.f32.mrb[0].mxu0
  %v1201 = vadd.f32 0.0, %v1200
  %v1202 = vpop.f32.mrb[0].mxu0
  %1203 = vdwg.mxu0
  %v1204 = vadd.f32 %v1011, %v1186
  %v1205 = vadd.f32 %v1012, %v1191
  %v1206 = vadd.f32 %v1013, %v1196
  %v1207 = vadd.f32 %v1014, %v1201
  %s1208 = scalar_lea.vmem %s4, 128
  %v1209 = vld [vmem:[%s1208] sm:$0xff]
  %v1210 = vld [vmem:[%s1208 + $0x8] sm:$0xff]
  %v1211 = vld [vmem:[%s1208 + $0x10] sm:$0xff]
  %v1212 = vld [vmem:[%s1208 + $0x18] sm:$0xff]
  %1213 = vmatprep.subr.mxu0 0.0
  %1214 = vmatpush1.msra.mxu0 %v430
  %1215 = vmatprep.subr.mxu0 0.0
  %1216 = vmatpush1.msra.mxu0 %v431
  %1217 = vmatprep.subr.mxu0 0.0
  %1218 = vmatpush1.msra.mxu0 %v432
  %1219 = vmatprep.subr.mxu0 0.0
  %1220 = vmatpush1.msra.mxu0 %v433
  %1221 = vmatprep.subr.mxu0 0.0
  %1222 = vmatpush1.msra.mxu0 %v434
  %1223 = vmatprep.subr.mxu0 0.0
  %1224 = vmatpush1.msra.mxu0 %v435
  %1225 = vmatprep.subr.mxu0 0.0
  %1226 = vmatpush1.msra.mxu0 %v436
  %1227 = vmatprep.subr.mxu0 0.0
  %1228 = vmatpush1.msra.mxu0 %v437
  %1229 = vmatprep.subr.mxu0 0.0
  %1230 = vmatpush1.msra.mxu0 %v438
  %1231 = vmatprep.subr.mxu0 0.0
  %1232 = vmatpush1.msra.mxu0 %v439
  %1233 = vmatprep.subr.mxu0 0.0
  %1234 = vmatpush1.msra.mxu0 %v440
  %1235 = vmatprep.subr.mxu0 0.0
  %1236 = vmatpush1.msra.mxu0 %v441
  %1237 = vmatprep.subr.mxu0 0.0
  %1238 = vmatpush1.msra.mxu0 %v442
  %1239 = vmatprep.subr.mxu0 0.0
  %1240 = vmatpush1.msra.mxu0 %v443
  %1241 = vmatprep.subr.mxu0 0.0
  %1242 = vmatpush1.msra.mxu0 %v444
  %1243 = vmatprep.subr.mxu0 0.0
  %1244 = vmatpush1.msra.mxu0 %v445
  %1245 = vmatprep.subr.mxu0 0.0
  %1246 = vmatpush1.msra.mxu0 0.0
  %1247 = vmatprep.subr.mxu0 0.0
  %1248 = vmatpush1.msra.mxu0 0.0
  %1249 = vmatprep.subr.mxu0 0.0
  %1250 = vmatpush1.msra.mxu0 0.0
  %1251 = vmatprep.subr.mxu0 0.0
  %1252 = vmatpush1.msra.mxu0 0.0
  %1253 = vmatprep.subr.mxu0 0.0
  %1254 = vmatpush1.msra.mxu0 0.0
  %1255 = vmatprep.subr.mxu0 0.0
  %1256 = vmatpush1.msra.mxu0 0.0
  %1257 = vmatprep.subr.mxu0 0.0
  %1258 = vmatpush1.msra.mxu0 0.0
  %1259 = vmatprep.subr.mxu0 0.0
  %1260 = vmatpush1.msra.mxu0 0.0
  %1261 = vmatprep.subr.mxu0 0.0
  %1262 = vmatpush1.msra.mxu0 0.0
  %1263 = vmatprep.subr.mxu0 0.0
  %1264 = vmatpush1.msra.mxu0 0.0
  %1265 = vmatprep.subr.mxu0 0.0
  %1266 = vmatpush1.msra.mxu0 0.0
  %1267 = vmatprep.subr.mxu0 0.0
  %1268 = vmatpush1.msra.mxu0 0.0
  %1269 = vmatprep.subr.mxu0 0.0
  %1270 = vmatpush1.msra.mxu0 0.0
  %1271 = vmatprep.subr.mxu0 0.0
  %1272 = vmatpush1.msra.mxu0 0.0
  %1273 = vmatprep.subr.mxu0 0.0
  %1274 = vmatpush1.msra.mxu0 0.0
  %1275 = vmatprep.subr.mxu0 0.0
  %1276 = vmatpush1.msra.mxu0 0.0
  %1277 = vmatprep.mubr.f32.mxu0 0.0
  %1278 = vmatmul.mubr.f32.gmra.mrb[0].mxu0 %v1209
  %v1279 = vpop.f32.mrb[0].mxu0
  %v1280 = vadd.f32 0.0, %v1279
  %v1281 = vpop.f32.mrb[0].mxu0
  %1282 = vmatprep.mubr.f32.mxu0 0.0
  %1283 = vmatmul.mubr.f32.gmra.mrb[0].mxu0 %v1210
  %v1284 = vpop.f32.mrb[0].mxu0
  %v1285 = vadd.f32 0.0, %v1284
  %v1286 = vpop.f32.mrb[0].mxu0
  %1287 = vmatprep.mubr.f32.mxu0 0.0
  %1288 = vmatmul.mubr.f32.gmra.mrb[0].mxu0 %v1211
  %v1289 = vpop.f32.mrb[0].mxu0
  %v1290 = vadd.f32 0.0, %v1289
  %v1291 = vpop.f32.mrb[0].mxu0
  %1292 = vmatprep.mubr.f32.mxu0 0.0
  %1293 = vmatmul.mubr.f32.gmra.mrb[0].mxu0 %v1212
  %v1294 = vpop.f32.mrb[0].mxu0
  %v1295 = vadd.f32 0.0, %v1294
  %v1296 = vpop.f32.mrb[0].mxu0
  %1297 = vdwg.mxu0
  %s1298 = scalar_lea.vmem %s5, 32
  %v1299 = vld [vmem:[%s1298] sm:$0xff]
  %v1301 = vsel %vm256, %v1280, 0
  %v1304 = vsel %vm256, %v1285, 0
  %v1307 = vsel %vm256, %v1290, 0
  %v1310 = vsel %vm256, %v1295, 0
  %1312 = vmatprep.subr.mxu0 0.0
  %1313 = vmatpush1.msra.mxu0 %v1299
  %1314 = vmatprep.subr.mxu0 0.0
  %1315 = vmatpush1.msra.mxu0 0.0
  %1316 = vmatprep.subr.mxu0 0.0
  %1317 = vmatpush1.msra.mxu0 0.0
  %1318 = vmatprep.subr.mxu0 0.0
  %1319 = vmatpush1.msra.mxu0 0.0
  %1320 = vmatprep.subr.mxu0 0.0
  %1321 = vmatpush1.msra.mxu0 0.0
  %1322 = vmatprep.subr.mxu0 0.0
  %1323 = vmatpush1.msra.mxu0 0.0
  %1324 = vmatprep.subr.mxu0 0.0
  %1325 = vmatpush1.msra.mxu0 0.0
  %1326 = vmatprep.subr.mxu0 0.0
  %1327 = vmatpush1.msra.mxu0 0.0
  %1328 = vmatprep.subr.mxu0 0.0
  %1329 = vmatpush1.msra.mxu0 0.0
  %1330 = vmatprep.subr.mxu0 0.0
  %1331 = vmatpush1.msra.mxu0 0.0
  %1332 = vmatprep.subr.mxu0 0.0
  %1333 = vmatpush1.msra.mxu0 0.0
  %1334 = vmatprep.subr.mxu0 0.0
  %1335 = vmatpush1.msra.mxu0 0.0
  %1336 = vmatprep.subr.mxu0 0.0
  %1337 = vmatpush1.msra.mxu0 0.0
  %1338 = vmatprep.subr.mxu0 0.0
  %1339 = vmatpush1.msra.mxu0 0.0
  %1340 = vmatprep.subr.mxu0 0.0
  %1341 = vmatpush1.msra.mxu0 0.0
  %1342 = vmatprep.subr.mxu0 0.0
  %1343 = vmatpush1.msra.mxu0 0.0
  %1344 = vmatprep.subr.mxu0 0.0
  %1345 = vmatpush1.msra.mxu0 0.0
  %1346 = vmatprep.subr.mxu0 0.0
  %1347 = vmatpush1.msra.mxu0 0.0
  %1348 = vmatprep.subr.mxu0 0.0
  %1349 = vmatpush1.msra.mxu0 0.0
  %1350 = vmatprep.subr.mxu0 0.0
  %1351 = vmatpush1.msra.mxu0 0.0
  %1352 = vmatprep.subr.mxu0 0.0
  %1353 = vmatpush1.msra.mxu0 0.0
  %1354 = vmatprep.subr.mxu0 0.0
  %1355 = vmatpush1.msra.mxu0 0.0
  %1356 = vmatprep.subr.mxu0 0.0
  %1357 = vmatpush1.msra.mxu0 0.0
  %1358 = vmatprep.subr.mxu0 0.0
  %1359 = vmatpush1.msra.mxu0 0.0
  %1360 = vmatprep.subr.mxu0 0.0
  %1361 = vmatpush1.msra.mxu0 0.0
  %1362 = vmatprep.subr.mxu0 0.0
  %1363 = vmatpush1.msra.mxu0 0.0
  %1364 = vmatprep.subr.mxu0 0.0
  %1365 = vmatpush1.msra.mxu0 0.0
  %1366 = vmatprep.subr.mxu0 0.0
  %1367 = vmatpush1.msra.mxu0 0.0
  %1368 = vmatprep.subr.mxu0 0.0
  %1369 = vmatpush1.msra.mxu0 0.0
  %1370 = vmatprep.subr.mxu0 0.0
  %1371 = vmatpush1.msra.mxu0 0.0
  %1372 = vmatprep.subr.mxu0 0.0
  %1373 = vmatpush1.msra.mxu0 0.0
  %1374 = vmatprep.subr.mxu0 0.0
  %1375 = vmatpush1.msra.mxu0 0.0
  %1376 = vmatprep.mubr.f32.mxu0 0.0
  %1377 = vmatmul.mubr.f32.gmra.mrb[0].mxu0 %v1301
  %v1378 = vpop.f32.mrb[0].mxu0
  %v1379 = vadd.f32 0.0, %v1378
  %v1380 = vpop.f32.mrb[0].mxu0
  %1381 = vmatprep.mubr.f32.mxu0 0.0
  %1382 = vmatmul.mubr.f32.gmra.mrb[0].mxu0 %v1304
  %v1383 = vpop.f32.mrb[0].mxu0
  %v1384 = vadd.f32 0.0, %v1383
  %v1385 = vpop.f32.mrb[0].mxu0
  %1386 = vmatprep.mubr.f32.mxu0 0.0
  %1387 = vmatmul.mubr.f32.gmra.mrb[0].mxu0 %v1307
  %v1388 = vpop.f32.mrb[0].mxu0
  %v1389 = vadd.f32 0.0, %v1388
  %v1390 = vpop.f32.mrb[0].mxu0
  %1391 = vmatprep.mubr.f32.mxu0 0.0
  %1392 = vmatmul.mubr.f32.gmra.mrb[0].mxu0 %v1310
  %v1393 = vpop.f32.mrb[0].mxu0
  %v1394 = vadd.f32 0.0, %v1393
  %v1395 = vpop.f32.mrb[0].mxu0
  %1396 = vdwg.mxu0
  %v1397 = vadd.f32 %v1204, %v1379
  %v1398 = vadd.f32 %v1205, %v1384
  %v1399 = vadd.f32 %v1206, %v1389
  %v1400 = vadd.f32 %v1207, %v1394
  %s1401 = scalar_lea.vmem %s4, 160
  %v1402 = vld [vmem:[%s1401] sm:$0xff]
  %v1403 = vld [vmem:[%s1401 + $0x8] sm:$0xff]
  %v1404 = vld [vmem:[%s1401 + $0x10] sm:$0xff]
  %v1405 = vld [vmem:[%s1401 + $0x18] sm:$0xff]
  %1406 = vmatprep.subr.mxu0 0.0
  %1407 = vmatpush1.msra.mxu0 %v430
  %1408 = vmatprep.subr.mxu0 0.0
  %1409 = vmatpush1.msra.mxu0 %v431
  %1410 = vmatprep.subr.mxu0 0.0
  %1411 = vmatpush1.msra.mxu0 %v432
  %1412 = vmatprep.subr.mxu0 0.0
  %1413 = vmatpush1.msra.mxu0 %v433
  %1414 = vmatprep.subr.mxu0 0.0
  %1415 = vmatpush1.msra.mxu0 %v434
  %1416 = vmatprep.subr.mxu0 0.0
  %1417 = vmatpush1.msra.mxu0 %v435
  %1418 = vmatprep.subr.mxu0 0.0
  %1419 = vmatpush1.msra.mxu0 %v436
  %1420 = vmatprep.subr.mxu0 0.0
  %1421 = vmatpush1.msra.mxu0 %v437
  %1422 = vmatprep.subr.mxu0 0.0
  %1423 = vmatpush1.msra.mxu0 %v438
  %1424 = vmatprep.subr.mxu0 0.0
  %1425 = vmatpush1.msra.mxu0 %v439
  %1426 = vmatprep.subr.mxu0 0.0
  %1427 = vmatpush1.msra.mxu0 %v440
  %1428 = vmatprep.subr.mxu0 0.0
  %1429 = vmatpush1.msra.mxu0 %v441
  %1430 = vmatprep.subr.mxu0 0.0
  %1431 = vmatpush1.msra.mxu0 %v442
  %1432 = vmatprep.subr.mxu0 0.0
  %1433 = vmatpush1.msra.mxu0 %v443
  %1434 = vmatprep.subr.mxu0 0.0
  %1435 = vmatpush1.msra.mxu0 %v444
  %1436 = vmatprep.subr.mxu0 0.0
  %1437 = vmatpush1.msra.mxu0 %v445
  %1438 = vmatprep.subr.mxu0 0.0
  %1439 = vmatpush1.msra.mxu0 0.0
  %1440 = vmatprep.subr.mxu0 0.0
  %1441 = vmatpush1.msra.mxu0 0.0
  %1442 = vmatprep.subr.mxu0 0.0
  %1443 = vmatpush1.msra.mxu0 0.0
  %1444 = vmatprep.subr.mxu0 0.0
  %1445 = vmatpush1.msra.mxu0 0.0
  %1446 = vmatprep.subr.mxu0 0.0
  %1447 = vmatpush1.msra.mxu0 0.0
  %1448 = vmatprep.subr.mxu0 0.0
  %1449 = vmatpush1.msra.mxu0 0.0
  %1450 = vmatprep.subr.mxu0 0.0
  %1451 = vmatpush1.msra.mxu0 0.0
  %1452 = vmatprep.subr.mxu0 0.0
  %1453 = vmatpush1.msra.mxu0 0.0
  %1454 = vmatprep.subr.mxu0 0.0
  %1455 = vmatpush1.msra.mxu0 0.0
  %1456 = vmatprep.subr.mxu0 0.0
  %1457 = vmatpush1.msra.mxu0 0.0
  %1458 = vmatprep.subr.mxu0 0.0
  %1459 = vmatpush1.msra.mxu0 0.0
  %1460 = vmatprep.subr.mxu0 0.0
  %1461 = vmatpush1.msra.mxu0 0.0
  %1462 = vmatprep.subr.mxu0 0.0
  %1463 = vmatpush1.msra.mxu0 0.0
  %1464 = vmatprep.subr.mxu0 0.0
  %1465 = vmatpush1.msra.mxu0 0.0
  %1466 = vmatprep.subr.mxu0 0.0
  %1467 = vmatpush1.msra.mxu0 0.0
  %1468 = vmatprep.subr.mxu0 0.0
  %1469 = vmatpush1.msra.mxu0 0.0
  %1470 = vmatprep.mubr.f32.mxu0 0.0
  %1471 = vmatmul.mubr.f32.gmra.mrb[0].mxu0 %v1402
  %v1472 = vpop.f32.mrb[0].mxu0
  %v1473 = vadd.f32 0.0, %v1472
  %v1474 = vpop.f32.mrb[0].mxu0
  %1475 = vmatprep.mubr.f32.mxu0 0.0
  %1476 = vmatmul.mubr.f32.gmra.mrb[0].mxu0 %v1403
  %v1477 = vpop.f32.mrb[0].mxu0
  %v1478 = vadd.f32 0.0, %v1477
  %v1479 = vpop.f32.mrb[0].mxu0
  %1480 = vmatprep.mubr.f32.mxu0 0.0
  %1481 = vmatmul.mubr.f32.gmra.mrb[0].mxu0 %v1404
  %v1482 = vpop.f32.mrb[0].mxu0
  %v1483 = vadd.f32 0.0, %v1482
  %v1484 = vpop.f32.mrb[0].mxu0
  %1485 = vmatprep.mubr.f32.mxu0 0.0
  %1486 = vmatmul.mubr.f32.gmra.mrb[0].mxu0 %v1405
  %v1487 = vpop.f32.mrb[0].mxu0
  %v1488 = vadd.f32 0.0, %v1487
  %v1489 = vpop.f32.mrb[0].mxu0
  %1490 = vdwg.mxu0
  %s1491 = scalar_lea.vmem %s5, 40
  %v1492 = vld [vmem:[%s1491] sm:$0xff]
  %v1494 = vsel %vm256, %v1473, 0
  %v1497 = vsel %vm256, %v1478, 0
  %v1500 = vsel %vm256, %v1483, 0
  %v1503 = vsel %vm256, %v1488, 0
  %1505 = vmatprep.subr.mxu0 0.0
  %1506 = vmatpush1.msra.mxu0 %v1492
  %1507 = vmatprep.subr.mxu0 0.0
  %1508 = vmatpush1.msra.mxu0 0.0
  %1509 = vmatprep.subr.mxu0 0.0
  %1510 = vmatpush1.msra.mxu0 0.0
  %1511 = vmatprep.subr.mxu0 0.0
  %1512 = vmatpush1.msra.mxu0 0.0
  %1513 = vmatprep.subr.mxu0 0.0
  %1514 = vmatpush1.msra.mxu0 0.0
  %1515 = vmatprep.subr.mxu0 0.0
  %1516 = vmatpush1.msra.mxu0 0.0
  %1517 = vmatprep.subr.mxu0 0.0
  %1518 = vmatpush1.msra.mxu0 0.0
  %1519 = vmatprep.subr.mxu0 0.0
  %1520 = vmatpush1.msra.mxu0 0.0
  %1521 = vmatprep.subr.mxu0 0.0
  %1522 = vmatpush1.msra.mxu0 0.0
  %1523 = vmatprep.subr.mxu0 0.0
  %1524 = vmatpush1.msra.mxu0 0.0
  %1525 = vmatprep.subr.mxu0 0.0
  %1526 = vmatpush1.msra.mxu0 0.0
  %1527 = vmatprep.subr.mxu0 0.0
  %1528 = vmatpush1.msra.mxu0 0.0
  %1529 = vmatprep.subr.mxu0 0.0
  %1530 = vmatpush1.msra.mxu0 0.0
  %1531 = vmatprep.subr.mxu0 0.0
  %1532 = vmatpush1.msra.mxu0 0.0
  %1533 = vmatprep.subr.mxu0 0.0
  %1534 = vmatpush1.msra.mxu0 0.0
  %1535 = vmatprep.subr.mxu0 0.0
  %1536 = vmatpush1.msra.mxu0 0.0
  %1537 = vmatprep.subr.mxu0 0.0
  %1538 = vmatpush1.msra.mxu0 0.0
  %1539 = vmatprep.subr.mxu0 0.0
  %1540 = vmatpush1.msra.mxu0 0.0
  %1541 = vmatprep.subr.mxu0 0.0
  %1542 = vmatpush1.msra.mxu0 0.0
  %1543 = vmatprep.subr.mxu0 0.0
  %1544 = vmatpush1.msra.mxu0 0.0
  %1545 = vmatprep.subr.mxu0 0.0
  %1546 = vmatpush1.msra.mxu0 0.0
  %1547 = vmatprep.subr.mxu0 0.0
  %1548 = vmatpush1.msra.mxu0 0.0
  %1549 = vmatprep.subr.mxu0 0.0
  %1550 = vmatpush1.msra.mxu0 0.0
  %1551 = vmatprep.subr.mxu0 0.0
  %1552 = vmatpush1.msra.mxu0 0.0
  %1553 = vmatprep.subr.mxu0 0.0
  %1554 = vmatpush1.msra.mxu0 0.0
  %1555 = vmatprep.subr.mxu0 0.0
  %1556 = vmatpush1.msra.mxu0 0.0
  %1557 = vmatprep.subr.mxu0 0.0
  %1558 = vmatpush1.msra.mxu0 0.0
  %1559 = vmatprep.subr.mxu0 0.0
  %1560 = vmatpush1.msra.mxu0 0.0
  %1561 = vmatprep.subr.mxu0 0.0
  %1562 = vmatpush1.msra.mxu0 0.0
  %1563 = vmatprep.subr.mxu0 0.0
  %1564 = vmatpush1.msra.mxu0 0.0
  %1565 = vmatprep.subr.mxu0 0.0
  %1566 = vmatpush1.msra.mxu0 0.0
  %1567 = vmatprep.subr.mxu0 0.0
  %1568 = vmatpush1.msra.mxu0 0.0
  %1569 = vmatprep.mubr.f32.mxu0 0.0
  %1570 = vmatmul.mubr.f32.gmra.mrb[0].mxu0 %v1494
  %v1571 = vpop.f32.mrb[0].mxu0
  %v1572 = vadd.f32 0.0, %v1571
  %v1573 = vpop.f32.mrb[0].mxu0
  %1574 = vmatprep.mubr.f32.mxu0 0.0
  %1575 = vmatmul.mubr.f32.gmra.mrb[0].mxu0 %v1497
  %v1576 = vpop.f32.mrb[0].mxu0
  %v1577 = vadd.f32 0.0, %v1576
  %v1578 = vpop.f32.mrb[0].mxu0
  %1579 = vmatprep.mubr.f32.mxu0 0.0
  %1580 = vmatmul.mubr.f32.gmra.mrb[0].mxu0 %v1500
  %v1581 = vpop.f32.mrb[0].mxu0
  %v1582 = vadd.f32 0.0, %v1581
  %v1583 = vpop.f32.mrb[0].mxu0
  %1584 = vmatprep.mubr.f32.mxu0 0.0
  %1585 = vmatmul.mubr.f32.gmra.mrb[0].mxu0 %v1503
  %v1586 = vpop.f32.mrb[0].mxu0
  %v1587 = vadd.f32 0.0, %v1586
  %v1588 = vpop.f32.mrb[0].mxu0
  %1589 = vdwg.mxu0
  %v1590 = vadd.f32 %v1397, %v1572
  %v1591 = vadd.f32 %v1398, %v1577
  %v1592 = vadd.f32 %v1399, %v1582
  %v1593 = vadd.f32 %v1400, %v1587
  %s1594 = scalar_lea.vmem %s4, 192
  %v1595 = vld [vmem:[%s1594] sm:$0xff]
  %v1596 = vld [vmem:[%s1594 + $0x8] sm:$0xff]
  %v1597 = vld [vmem:[%s1594 + $0x10] sm:$0xff]
  %v1598 = vld [vmem:[%s1594 + $0x18] sm:$0xff]
  %1599 = vmatprep.subr.mxu0 0.0
  %1600 = vmatpush1.msra.mxu0 %v430
  %1601 = vmatprep.subr.mxu0 0.0
  %1602 = vmatpush1.msra.mxu0 %v431
  %1603 = vmatprep.subr.mxu0 0.0
  %1604 = vmatpush1.msra.mxu0 %v432
  %1605 = vmatprep.subr.mxu0 0.0
  %1606 = vmatpush1.msra.mxu0 %v433
  %1607 = vmatprep.subr.mxu0 0.0
  %1608 = vmatpush1.msra.mxu0 %v434
  %1609 = vmatprep.subr.mxu0 0.0
  %1610 = vmatpush1.msra.mxu0 %v435
  %1611 = vmatprep.subr.mxu0 0.0
  %1612 = vmatpush1.msra.mxu0 %v436
  %1613 = vmatprep.subr.mxu0 0.0
  %1614 = vmatpush1.msra.mxu0 %v437
  %1615 = vmatprep.subr.mxu0 0.0
  %1616 = vmatpush1.msra.mxu0 %v438
  %1617 = vmatprep.subr.mxu0 0.0
  %1618 = vmatpush1.msra.mxu0 %v439
  %1619 = vmatprep.subr.mxu0 0.0
  %1620 = vmatpush1.msra.mxu0 %v440
  %1621 = vmatprep.subr.mxu0 0.0
  %1622 = vmatpush1.msra.mxu0 %v441
  %1623 = vmatprep.subr.mxu0 0.0
  %1624 = vmatpush1.msra.mxu0 %v442
  %1625 = vmatprep.subr.mxu0 0.0
  %1626 = vmatpush1.msra.mxu0 %v443
  %1627 = vmatprep.subr.mxu0 0.0
  %1628 = vmatpush1.msra.mxu0 %v444
  %1629 = vmatprep.subr.mxu0 0.0
  %1630 = vmatpush1.msra.mxu0 %v445
  %1631 = vmatprep.subr.mxu0 0.0
  %1632 = vmatpush1.msra.mxu0 0.0
  %1633 = vmatprep.subr.mxu0 0.0
  %1634 = vmatpush1.msra.mxu0 0.0
  %1635 = vmatprep.subr.mxu0 0.0
  %1636 = vmatpush1.msra.mxu0 0.0
  %1637 = vmatprep.subr.mxu0 0.0
  %1638 = vmatpush1.msra.mxu0 0.0
  %1639 = vmatprep.subr.mxu0 0.0
  %1640 = vmatpush1.msra.mxu0 0.0
  %1641 = vmatprep.subr.mxu0 0.0
  %1642 = vmatpush1.msra.mxu0 0.0
  %1643 = vmatprep.subr.mxu0 0.0
  %1644 = vmatpush1.msra.mxu0 0.0
  %1645 = vmatprep.subr.mxu0 0.0
  %1646 = vmatpush1.msra.mxu0 0.0
  %1647 = vmatprep.subr.mxu0 0.0
  %1648 = vmatpush1.msra.mxu0 0.0
  %1649 = vmatprep.subr.mxu0 0.0
  %1650 = vmatpush1.msra.mxu0 0.0
  %1651 = vmatprep.subr.mxu0 0.0
  %1652 = vmatpush1.msra.mxu0 0.0
  %1653 = vmatprep.subr.mxu0 0.0
  %1654 = vmatpush1.msra.mxu0 0.0
  %1655 = vmatprep.subr.mxu0 0.0
  %1656 = vmatpush1.msra.mxu0 0.0
  %1657 = vmatprep.subr.mxu0 0.0
  %1658 = vmatpush1.msra.mxu0 0.0
  %1659 = vmatprep.subr.mxu0 0.0
  %1660 = vmatpush1.msra.mxu0 0.0
  %1661 = vmatprep.subr.mxu0 0.0
  %1662 = vmatpush1.msra.mxu0 0.0
  %1663 = vmatprep.mubr.f32.mxu0 0.0
  %1664 = vmatmul.mubr.f32.gmra.mrb[0].mxu0 %v1595
  %v1665 = vpop.f32.mrb[0].mxu0
  %v1666 = vadd.f32 0.0, %v1665
  %v1667 = vpop.f32.mrb[0].mxu0
  %1668 = vmatprep.mubr.f32.mxu0 0.0
  %1669 = vmatmul.mubr.f32.gmra.mrb[0].mxu0 %v1596
  %v1670 = vpop.f32.mrb[0].mxu0
  %v1671 = vadd.f32 0.0, %v1670
  %v1672 = vpop.f32.mrb[0].mxu0
  %1673 = vmatprep.mubr.f32.mxu0 0.0
  %1674 = vmatmul.mubr.f32.gmra.mrb[0].mxu0 %v1597
  %v1675 = vpop.f32.mrb[0].mxu0
  %v1676 = vadd.f32 0.0, %v1675
  %v1677 = vpop.f32.mrb[0].mxu0
  %1678 = vmatprep.mubr.f32.mxu0 0.0
  %1679 = vmatmul.mubr.f32.gmra.mrb[0].mxu0 %v1598
  %v1680 = vpop.f32.mrb[0].mxu0
  %v1681 = vadd.f32 0.0, %v1680
  %v1682 = vpop.f32.mrb[0].mxu0
  %1683 = vdwg.mxu0
  %s1684 = scalar_lea.vmem %s5, 48
  %v1685 = vld [vmem:[%s1684] sm:$0xff]
  %v1687 = vsel %vm256, %v1666, 0
  %v1690 = vsel %vm256, %v1671, 0
  %v1693 = vsel %vm256, %v1676, 0
  %v1696 = vsel %vm256, %v1681, 0
  %1698 = vmatprep.subr.mxu0 0.0
  %1699 = vmatpush1.msra.mxu0 %v1685
  %1700 = vmatprep.subr.mxu0 0.0
  %1701 = vmatpush1.msra.mxu0 0.0
  %1702 = vmatprep.subr.mxu0 0.0
  %1703 = vmatpush1.msra.mxu0 0.0
  %1704 = vmatprep.subr.mxu0 0.0
  %1705 = vmatpush1.msra.mxu0 0.0
  %1706 = vmatprep.subr.mxu0 0.0
  %1707 = vmatpush1.msra.mxu0 0.0
  %1708 = vmatprep.subr.mxu0 0.0
  %1709 = vmatpush1.msra.mxu0 0.0
  %1710 = vmatprep.subr.mxu0 0.0
  %1711 = vmatpush1.msra.mxu0 0.0
  %1712 = vmatprep.subr.mxu0 0.0
  %1713 = vmatpush1.msra.mxu0 0.0
  %1714 = vmatprep.subr.mxu0 0.0
  %1715 = vmatpush1.msra.mxu0 0.0
  %1716 = vmatprep.subr.mxu0 0.0
  %1717 = vmatpush1.msra.mxu0 0.0
  %1718 = vmatprep.subr.mxu0 0.0
  %1719 = vmatpush1.msra.mxu0 0.0
  %1720 = vmatprep.subr.mxu0 0.0
  %1721 = vmatpush1.msra.mxu0 0.0
  %1722 = vmatprep.subr.mxu0 0.0
  %1723 = vmatpush1.msra.mxu0 0.0
  %1724 = vmatprep.subr.mxu0 0.0
  %1725 = vmatpush1.msra.mxu0 0.0
  %1726 = vmatprep.subr.mxu0 0.0
  %1727 = vmatpush1.msra.mxu0 0.0
  %1728 = vmatprep.subr.mxu0 0.0
  %1729 = vmatpush1.msra.mxu0 0.0
  %1730 = vmatprep.subr.mxu0 0.0
  %1731 = vmatpush1.msra.mxu0 0.0
  %1732 = vmatprep.subr.mxu0 0.0
  %1733 = vmatpush1.msra.mxu0 0.0
  %1734 = vmatprep.subr.mxu0 0.0
  %1735 = vmatpush1.msra.mxu0 0.0
  %1736 = vmatprep.subr.mxu0 0.0
  %1737 = vmatpush1.msra.mxu0 0.0
  %1738 = vmatprep.subr.mxu0 0.0
  %1739 = vmatpush1.msra.mxu0 0.0
  %1740 = vmatprep.subr.mxu0 0.0
  %1741 = vmatpush1.msra.mxu0 0.0
  %1742 = vmatprep.subr.mxu0 0.0
  %1743 = vmatpush1.msra.mxu0 0.0
  %1744 = vmatprep.subr.mxu0 0.0
  %1745 = vmatpush1.msra.mxu0 0.0
  %1746 = vmatprep.subr.mxu0 0.0
  %1747 = vmatpush1.msra.mxu0 0.0
  %1748 = vmatprep.subr.mxu0 0.0
  %1749 = vmatpush1.msra.mxu0 0.0
  %1750 = vmatprep.subr.mxu0 0.0
  %1751 = vmatpush1.msra.mxu0 0.0
  %1752 = vmatprep.subr.mxu0 0.0
  %1753 = vmatpush1.msra.mxu0 0.0
  %1754 = vmatprep.subr.mxu0 0.0
  %1755 = vmatpush1.msra.mxu0 0.0
  %1756 = vmatprep.subr.mxu0 0.0
  %1757 = vmatpush1.msra.mxu0 0.0
  %1758 = vmatprep.subr.mxu0 0.0
  %1759 = vmatpush1.msra.mxu0 0.0
  %1760 = vmatprep.subr.mxu0 0.0
  %1761 = vmatpush1.msra.mxu0 0.0
  %1762 = vmatprep.mubr.f32.mxu0 0.0
  %1763 = vmatmul.mubr.f32.gmra.mrb[0].mxu0 %v1687
  %v1764 = vpop.f32.mrb[0].mxu0
  %v1765 = vadd.f32 0.0, %v1764
  %v1766 = vpop.f32.mrb[0].mxu0
  %1767 = vmatprep.mubr.f32.mxu0 0.0
  %1768 = vmatmul.mubr.f32.gmra.mrb[0].mxu0 %v1690
  %v1769 = vpop.f32.mrb[0].mxu0
  %v1770 = vadd.f32 0.0, %v1769
  %v1771 = vpop.f32.mrb[0].mxu0
  %1772 = vmatprep.mubr.f32.mxu0 0.0
  %1773 = vmatmul.mubr.f32.gmra.mrb[0].mxu0 %v1693
  %v1774 = vpop.f32.mrb[0].mxu0
  %v1775 = vadd.f32 0.0, %v1774
  %v1776 = vpop.f32.mrb[0].mxu0
  %1777 = vmatprep.mubr.f32.mxu0 0.0
  %1778 = vmatmul.mubr.f32.gmra.mrb[0].mxu0 %v1696
  %v1779 = vpop.f32.mrb[0].mxu0
  %v1780 = vadd.f32 0.0, %v1779
  %v1781 = vpop.f32.mrb[0].mxu0
  %1782 = vdwg.mxu0
  %v1783 = vadd.f32 %v1590, %v1765
  %v1784 = vadd.f32 %v1591, %v1770
  %v1785 = vadd.f32 %v1592, %v1775
  %v1786 = vadd.f32 %v1593, %v1780
  %s1787 = scalar_lea.vmem %s4, 224
  %v1788 = vld [vmem:[%s1787] sm:$0xff]
  %v1789 = vld [vmem:[%s1787 + $0x8] sm:$0xff]
  %v1790 = vld [vmem:[%s1787 + $0x10] sm:$0xff]
  %v1791 = vld [vmem:[%s1787 + $0x18] sm:$0xff]
  %1792 = vmatprep.subr.mxu0 0.0
  %1793 = vmatpush1.msra.mxu0 %v430
  %1794 = vmatprep.subr.mxu0 0.0
  %1795 = vmatpush1.msra.mxu0 %v431
  %1796 = vmatprep.subr.mxu0 0.0
  %1797 = vmatpush1.msra.mxu0 %v432
  %1798 = vmatprep.subr.mxu0 0.0
  %1799 = vmatpush1.msra.mxu0 %v433
  %1800 = vmatprep.subr.mxu0 0.0
  %1801 = vmatpush1.msra.mxu0 %v434
  %1802 = vmatprep.subr.mxu0 0.0
  %1803 = vmatpush1.msra.mxu0 %v435
  %1804 = vmatprep.subr.mxu0 0.0
  %1805 = vmatpush1.msra.mxu0 %v436
  %1806 = vmatprep.subr.mxu0 0.0
  %1807 = vmatpush1.msra.mxu0 %v437
  %1808 = vmatprep.subr.mxu0 0.0
  %1809 = vmatpush1.msra.mxu0 %v438
  %1810 = vmatprep.subr.mxu0 0.0
  %1811 = vmatpush1.msra.mxu0 %v439
  %1812 = vmatprep.subr.mxu0 0.0
  %1813 = vmatpush1.msra.mxu0 %v440
  %1814 = vmatprep.subr.mxu0 0.0
  %1815 = vmatpush1.msra.mxu0 %v441
  %1816 = vmatprep.subr.mxu0 0.0
  %1817 = vmatpush1.msra.mxu0 %v442
  %1818 = vmatprep.subr.mxu0 0.0
  %1819 = vmatpush1.msra.mxu0 %v443
  %1820 = vmatprep.subr.mxu0 0.0
  %1821 = vmatpush1.msra.mxu0 %v444
  %1822 = vmatprep.subr.mxu0 0.0
  %1823 = vmatpush1.msra.mxu0 %v445
  %1824 = vmatprep.subr.mxu0 0.0
  %1825 = vmatpush1.msra.mxu0 0.0
  %1826 = vmatprep.subr.mxu0 0.0
  %1827 = vmatpush1.msra.mxu0 0.0
  %1828 = vmatprep.subr.mxu0 0.0
  %1829 = vmatpush1.msra.mxu0 0.0
  %1830 = vmatprep.subr.mxu0 0.0
  %1831 = vmatpush1.msra.mxu0 0.0
  %1832 = vmatprep.subr.mxu0 0.0
  %1833 = vmatpush1.msra.mxu0 0.0
  %1834 = vmatprep.subr.mxu0 0.0
  %1835 = vmatpush1.msra.mxu0 0.0
  %1836 = vmatprep.subr.mxu0 0.0
  %1837 = vmatpush1.msra.mxu0 0.0
  %1838 = vmatprep.subr.mxu0 0.0
  %1839 = vmatpush1.msra.mxu0 0.0
  %1840 = vmatprep.subr.mxu0 0.0
  %1841 = vmatpush1.msra.mxu0 0.0
  %1842 = vmatprep.subr.mxu0 0.0
  %1843 = vmatpush1.msra.mxu0 0.0
  %1844 = vmatprep.subr.mxu0 0.0
  %1845 = vmatpush1.msra.mxu0 0.0
  %1846 = vmatprep.subr.mxu0 0.0
  %1847 = vmatpush1.msra.mxu0 0.0
  %1848 = vmatprep.subr.mxu0 0.0
  %1849 = vmatpush1.msra.mxu0 0.0
  %1850 = vmatprep.subr.mxu0 0.0
  %1851 = vmatpush1.msra.mxu0 0.0
  %1852 = vmatprep.subr.mxu0 0.0
  %1853 = vmatpush1.msra.mxu0 0.0
  %1854 = vmatprep.subr.mxu0 0.0
  %1855 = vmatpush1.msra.mxu0 0.0
  %1856 = vmatprep.mubr.f32.mxu0 0.0
  %1857 = vmatmul.mubr.f32.gmra.mrb[0].mxu0 %v1788
  %v1858 = vpop.f32.mrb[0].mxu0
  %v1859 = vadd.f32 0.0, %v1858
  %v1860 = vpop.f32.mrb[0].mxu0
  %1861 = vmatprep.mubr.f32.mxu0 0.0
  %1862 = vmatmul.mubr.f32.gmra.mrb[0].mxu0 %v1789
  %v1863 = vpop.f32.mrb[0].mxu0
  %v1864 = vadd.f32 0.0, %v1863
  %v1865 = vpop.f32.mrb[0].mxu0
  %1866 = vmatprep.mubr.f32.mxu0 0.0
  %1867 = vmatmul.mubr.f32.gmra.mrb[0].mxu0 %v1790
  %v1868 = vpop.f32.mrb[0].mxu0
  %v1869 = vadd.f32 0.0, %v1868
  %v1870 = vpop.f32.mrb[0].mxu0
  %1871 = vmatprep.mubr.f32.mxu0 0.0
  %1872 = vmatmul.mubr.f32.gmra.mrb[0].mxu0 %v1791
  %v1873 = vpop.f32.mrb[0].mxu0
  %v1874 = vadd.f32 0.0, %v1873
  %v1875 = vpop.f32.mrb[0].mxu0
  %1876 = vdwg.mxu0
  %s1877 = scalar_lea.vmem %s5, 56
  %v1878 = vld [vmem:[%s1877] sm:$0xff]
  %v1880 = vsel %vm256, %v1859, 0
  %v1883 = vsel %vm256, %v1864, 0
  %v1886 = vsel %vm256, %v1869, 0
  %v1889 = vsel %vm256, %v1874, 0
  %1891 = vmatprep.subr.mxu0 0.0
  %1892 = vmatpush1.msra.mxu0 %v1878
  %1893 = vmatprep.subr.mxu0 0.0
  %1894 = vmatpush1.msra.mxu0 0.0
  %1895 = vmatprep.subr.mxu0 0.0
  %1896 = vmatpush1.msra.mxu0 0.0
  %1897 = vmatprep.subr.mxu0 0.0
  %1898 = vmatpush1.msra.mxu0 0.0
  %1899 = vmatprep.subr.mxu0 0.0
  %1900 = vmatpush1.msra.mxu0 0.0
  %1901 = vmatprep.subr.mxu0 0.0
  %1902 = vmatpush1.msra.mxu0 0.0
  %1903 = vmatprep.subr.mxu0 0.0
  %1904 = vmatpush1.msra.mxu0 0.0
  %1905 = vmatprep.subr.mxu0 0.0
  %1906 = vmatpush1.msra.mxu0 0.0
  %1907 = vmatprep.subr.mxu0 0.0
  %1908 = vmatpush1.msra.mxu0 0.0
  %1909 = vmatprep.subr.mxu0 0.0
  %1910 = vmatpush1.msra.mxu0 0.0
  %1911 = vmatprep.subr.mxu0 0.0
  %1912 = vmatpush1.msra.mxu0 0.0
  %1913 = vmatprep.subr.mxu0 0.0
  %1914 = vmatpush1.msra.mxu0 0.0
  %1915 = vmatprep.subr.mxu0 0.0
  %1916 = vmatpush1.msra.mxu0 0.0
  %1917 = vmatprep.subr.mxu0 0.0
  %1918 = vmatpush1.msra.mxu0 0.0
  %1919 = vmatprep.subr.mxu0 0.0
  %1920 = vmatpush1.msra.mxu0 0.0
  %1921 = vmatprep.subr.mxu0 0.0
  %1922 = vmatpush1.msra.mxu0 0.0
  %1923 = vmatprep.subr.mxu0 0.0
  %1924 = vmatpush1.msra.mxu0 0.0
  %1925 = vmatprep.subr.mxu0 0.0
  %1926 = vmatpush1.msra.mxu0 0.0
  %1927 = vmatprep.subr.mxu0 0.0
  %1928 = vmatpush1.msra.mxu0 0.0
  %1929 = vmatprep.subr.mxu0 0.0
  %1930 = vmatpush1.msra.mxu0 0.0
  %1931 = vmatprep.subr.mxu0 0.0
  %1932 = vmatpush1.msra.mxu0 0.0
  %1933 = vmatprep.subr.mxu0 0.0
  %1934 = vmatpush1.msra.mxu0 0.0
  %1935 = vmatprep.subr.mxu0 0.0
  %1936 = vmatpush1.msra.mxu0 0.0
  %1937 = vmatprep.subr.mxu0 0.0
  %1938 = vmatpush1.msra.mxu0 0.0
  %1939 = vmatprep.subr.mxu0 0.0
  %1940 = vmatpush1.msra.mxu0 0.0
  %1941 = vmatprep.subr.mxu0 0.0
  %1942 = vmatpush1.msra.mxu0 0.0
  %1943 = vmatprep.subr.mxu0 0.0
  %1944 = vmatpush1.msra.mxu0 0.0
  %1945 = vmatprep.subr.mxu0 0.0
  %1946 = vmatpush1.msra.mxu0 0.0
  %1947 = vmatprep.subr.mxu0 0.0
  %1948 = vmatpush1.msra.mxu0 0.0
  %1949 = vmatprep.subr.mxu0 0.0
  %1950 = vmatpush1.msra.mxu0 0.0
  %1951 = vmatprep.subr.mxu0 0.0
  %1952 = vmatpush1.msra.mxu0 0.0
  %1953 = vmatprep.subr.mxu0 0.0
  %1954 = vmatpush1.msra.mxu0 0.0
  %1955 = vmatprep.mubr.f32.mxu0 0.0
  %1956 = vmatmul.mubr.f32.gmra.mrb[0].mxu0 %v1880
  %v1957 = vpop.f32.mrb[0].mxu0
  %v1958 = vadd.f32 0.0, %v1957
  %v1959 = vpop.f32.mrb[0].mxu0
  %1960 = vmatprep.mubr.f32.mxu0 0.0
  %1961 = vmatmul.mubr.f32.gmra.mrb[0].mxu0 %v1883
  %v1962 = vpop.f32.mrb[0].mxu0
  %v1963 = vadd.f32 0.0, %v1962
  %v1964 = vpop.f32.mrb[0].mxu0
  %1965 = vmatprep.mubr.f32.mxu0 0.0
  %1966 = vmatmul.mubr.f32.gmra.mrb[0].mxu0 %v1886
  %v1967 = vpop.f32.mrb[0].mxu0
  %v1968 = vadd.f32 0.0, %v1967
  %v1969 = vpop.f32.mrb[0].mxu0
  %1970 = vmatprep.mubr.f32.mxu0 0.0
  %1971 = vmatmul.mubr.f32.gmra.mrb[0].mxu0 %v1889
  %v1972 = vpop.f32.mrb[0].mxu0
  %v1973 = vadd.f32 0.0, %v1972
  %v1974 = vpop.f32.mrb[0].mxu0
  %1975 = vdwg.mxu0
  %v1976 = vadd.f32 %v1783, %v1958
  %v1977 = vadd.f32 %v1784, %v1963
  %v1978 = vadd.f32 %v1785, %v1968
  %v1979 = vadd.f32 %v1786, %v1973
  %s1980 = scalar_lea.vmem %s4, 256
  %v1981 = vld [vmem:[%s1980] sm:$0xff]
  %v1982 = vld [vmem:[%s1980 + $0x8] sm:$0xff]
  %v1983 = vld [vmem:[%s1980 + $0x10] sm:$0xff]
  %v1984 = vld [vmem:[%s1980 + $0x18] sm:$0xff]
  %1985 = vmatprep.subr.mxu0 0.0
  %1986 = vmatpush1.msra.mxu0 %v430
  %1987 = vmatprep.subr.mxu0 0.0
  %1988 = vmatpush1.msra.mxu0 %v431
  %1989 = vmatprep.subr.mxu0 0.0
  %1990 = vmatpush1.msra.mxu0 %v432
  %1991 = vmatprep.subr.mxu0 0.0
  %1992 = vmatpush1.msra.mxu0 %v433
  %1993 = vmatprep.subr.mxu0 0.0
  %1994 = vmatpush1.msra.mxu0 %v434
  %1995 = vmatprep.subr.mxu0 0.0
  %1996 = vmatpush1.msra.mxu0 %v435
  %1997 = vmatprep.subr.mxu0 0.0
  %1998 = vmatpush1.msra.mxu0 %v436
  %1999 = vmatprep.subr.mxu0 0.0
  %2000 = vmatpush1.msra.mxu0 %v437
  %2001 = vmatprep.subr.mxu0 0.0
  %2002 = vmatpush1.msra.mxu0 %v438
  %2003 = vmatprep.subr.mxu0 0.0
  %2004 = vmatpush1.msra.mxu0 %v439
  %2005 = vmatprep.subr.mxu0 0.0
  %2006 = vmatpush1.msra.mxu0 %v440
  %2007 = vmatprep.subr.mxu0 0.0
  %2008 = vmatpush1.msra.mxu0 %v441
  %2009 = vmatprep.subr.mxu0 0.0
  %2010 = vmatpush1.msra.mxu0 %v442
  %2011 = vmatprep.subr.mxu0 0.0
  %2012 = vmatpush1.msra.mxu0 %v443
  %2013 = vmatprep.subr.mxu0 0.0
  %2014 = vmatpush1.msra.mxu0 %v444
  %2015 = vmatprep.subr.mxu0 0.0
  %2016 = vmatpush1.msra.mxu0 %v445
  %2017 = vmatprep.subr.mxu0 0.0
  %2018 = vmatpush1.msra.mxu0 0.0
  %2019 = vmatprep.subr.mxu0 0.0
  %2020 = vmatpush1.msra.mxu0 0.0
  %2021 = vmatprep.subr.mxu0 0.0
  %2022 = vmatpush1.msra.mxu0 0.0
  %2023 = vmatprep.subr.mxu0 0.0
  %2024 = vmatpush1.msra.mxu0 0.0
  %2025 = vmatprep.subr.mxu0 0.0
  %2026 = vmatpush1.msra.mxu0 0.0
  %2027 = vmatprep.subr.mxu0 0.0
  %2028 = vmatpush1.msra.mxu0 0.0
  %2029 = vmatprep.subr.mxu0 0.0
  %2030 = vmatpush1.msra.mxu0 0.0
  %2031 = vmatprep.subr.mxu0 0.0
  %2032 = vmatpush1.msra.mxu0 0.0
  %2033 = vmatprep.subr.mxu0 0.0
  %2034 = vmatpush1.msra.mxu0 0.0
  %2035 = vmatprep.subr.mxu0 0.0
  %2036 = vmatpush1.msra.mxu0 0.0
  %2037 = vmatprep.subr.mxu0 0.0
  %2038 = vmatpush1.msra.mxu0 0.0
  %2039 = vmatprep.subr.mxu0 0.0
  %2040 = vmatpush1.msra.mxu0 0.0
  %2041 = vmatprep.subr.mxu0 0.0
  %2042 = vmatpush1.msra.mxu0 0.0
  %2043 = vmatprep.subr.mxu0 0.0
  %2044 = vmatpush1.msra.mxu0 0.0
  %2045 = vmatprep.subr.mxu0 0.0
  %2046 = vmatpush1.msra.mxu0 0.0
  %2047 = vmatprep.subr.mxu0 0.0
  %2048 = vmatpush1.msra.mxu0 0.0
  %2049 = vmatprep.mubr.f32.mxu0 0.0
  %2050 = vmatmul.mubr.f32.gmra.mrb[0].mxu0 %v1981
  %v2051 = vpop.f32.mrb[0].mxu0
  %v2052 = vadd.f32 0.0, %v2051
  %v2053 = vpop.f32.mrb[0].mxu0
  %2054 = vmatprep.mubr.f32.mxu0 0.0
  %2055 = vmatmul.mubr.f32.gmra.mrb[0].mxu0 %v1982
  %v2056 = vpop.f32.mrb[0].mxu0
  %v2057 = vadd.f32 0.0, %v2056
  %v2058 = vpop.f32.mrb[0].mxu0
  %2059 = vmatprep.mubr.f32.mxu0 0.0
  %2060 = vmatmul.mubr.f32.gmra.mrb[0].mxu0 %v1983
  %v2061 = vpop.f32.mrb[0].mxu0
  %v2062 = vadd.f32 0.0, %v2061
  %v2063 = vpop.f32.mrb[0].mxu0
  %2064 = vmatprep.mubr.f32.mxu0 0.0
  %2065 = vmatmul.mubr.f32.gmra.mrb[0].mxu0 %v1984
  %v2066 = vpop.f32.mrb[0].mxu0
  %v2067 = vadd.f32 0.0, %v2066
  %v2068 = vpop.f32.mrb[0].mxu0
  %2069 = vdwg.mxu0
  %s2070 = scalar_lea.vmem %s5, 64
  %v2071 = vld [vmem:[%s2070] sm:$0xff]
  %v2073 = vsel %vm256, %v2052, 0
  %v2076 = vsel %vm256, %v2057, 0
  %v2079 = vsel %vm256, %v2062, 0
  %v2082 = vsel %vm256, %v2067, 0
  %2084 = vmatprep.subr.mxu0 0.0
  %2085 = vmatpush1.msra.mxu0 %v2071
  %2086 = vmatprep.subr.mxu0 0.0
  %2087 = vmatpush1.msra.mxu0 0.0
  %2088 = vmatprep.subr.mxu0 0.0
  %2089 = vmatpush1.msra.mxu0 0.0
  %2090 = vmatprep.subr.mxu0 0.0
  %2091 = vmatpush1.msra.mxu0 0.0
  %2092 = vmatprep.subr.mxu0 0.0
  %2093 = vmatpush1.msra.mxu0 0.0
  %2094 = vmatprep.subr.mxu0 0.0
  %2095 = vmatpush1.msra.mxu0 0.0
  %2096 = vmatprep.subr.mxu0 0.0
  %2097 = vmatpush1.msra.mxu0 0.0
  %2098 = vmatprep.subr.mxu0 0.0
  %2099 = vmatpush1.msra.mxu0 0.0
  %2100 = vmatprep.subr.mxu0 0.0
  %2101 = vmatpush1.msra.mxu0 0.0
  %2102 = vmatprep.subr.mxu0 0.0
  %2103 = vmatpush1.msra.mxu0 0.0
  %2104 = vmatprep.subr.mxu0 0.0
  %2105 = vmatpush1.msra.mxu0 0.0
  %2106 = vmatprep.subr.mxu0 0.0
  %2107 = vmatpush1.msra.mxu0 0.0
  %2108 = vmatprep.subr.mxu0 0.0
  %2109 = vmatpush1.msra.mxu0 0.0
  %2110 = vmatprep.subr.mxu0 0.0
  %2111 = vmatpush1.msra.mxu0 0.0
  %2112 = vmatprep.subr.mxu0 0.0
  %2113 = vmatpush1.msra.mxu0 0.0
  %2114 = vmatprep.subr.mxu0 0.0
  %2115 = vmatpush1.msra.mxu0 0.0
  %2116 = vmatprep.subr.mxu0 0.0
  %2117 = vmatpush1.msra.mxu0 0.0
  %2118 = vmatprep.subr.mxu0 0.0
  %2119 = vmatpush1.msra.mxu0 0.0
  %2120 = vmatprep.subr.mxu0 0.0
  %2121 = vmatpush1.msra.mxu0 0.0
  %2122 = vmatprep.subr.mxu0 0.0
  %2123 = vmatpush1.msra.mxu0 0.0
  %2124 = vmatprep.subr.mxu0 0.0
  %2125 = vmatpush1.msra.mxu0 0.0
  %2126 = vmatprep.subr.mxu0 0.0
  %2127 = vmatpush1.msra.mxu0 0.0
  %2128 = vmatprep.subr.mxu0 0.0
  %2129 = vmatpush1.msra.mxu0 0.0
  %2130 = vmatprep.subr.mxu0 0.0
  %2131 = vmatpush1.msra.mxu0 0.0
  %2132 = vmatprep.subr.mxu0 0.0
  %2133 = vmatpush1.msra.mxu0 0.0
  %2134 = vmatprep.subr.mxu0 0.0
  %2135 = vmatpush1.msra.mxu0 0.0
  %2136 = vmatprep.subr.mxu0 0.0
  %2137 = vmatpush1.msra.mxu0 0.0
  %2138 = vmatprep.subr.mxu0 0.0
  %2139 = vmatpush1.msra.mxu0 0.0
  %2140 = vmatprep.subr.mxu0 0.0
  %2141 = vmatpush1.msra.mxu0 0.0
  %2142 = vmatprep.subr.mxu0 0.0
  %2143 = vmatpush1.msra.mxu0 0.0
  %2144 = vmatprep.subr.mxu0 0.0
  %2145 = vmatpush1.msra.mxu0 0.0
  %2146 = vmatprep.subr.mxu0 0.0
  %2147 = vmatpush1.msra.mxu0 0.0
  %2148 = vmatprep.mubr.f32.mxu0 0.0
  %2149 = vmatmul.mubr.f32.gmra.mrb[0].mxu0 %v2073
  %v2150 = vpop.f32.mrb[0].mxu0
  %v2151 = vadd.f32 0.0, %v2150
  %v2152 = vpop.f32.mrb[0].mxu0
  %2153 = vmatprep.mubr.f32.mxu0 0.0
  %2154 = vmatmul.mubr.f32.gmra.mrb[0].mxu0 %v2076
  %v2155 = vpop.f32.mrb[0].mxu0
  %v2156 = vadd.f32 0.0, %v2155
  %v2157 = vpop.f32.mrb[0].mxu0
  %2158 = vmatprep.mubr.f32.mxu0 0.0
  %2159 = vmatmul.mubr.f32.gmra.mrb[0].mxu0 %v2079
  %v2160 = vpop.f32.mrb[0].mxu0
  %v2161 = vadd.f32 0.0, %v2160
  %v2162 = vpop.f32.mrb[0].mxu0
  %2163 = vmatprep.mubr.f32.mxu0 0.0
  %2164 = vmatmul.mubr.f32.gmra.mrb[0].mxu0 %v2082
  %v2165 = vpop.f32.mrb[0].mxu0
  %v2166 = vadd.f32 0.0, %v2165
  %v2167 = vpop.f32.mrb[0].mxu0
  %2168 = vdwg.mxu0
  %v2169 = vadd.f32 %v1976, %v2151
  %v2170 = vadd.f32 %v1977, %v2156
  %v2171 = vadd.f32 %v1978, %v2161
  %v2172 = vadd.f32 %v1979, %v2166
  %s2173 = scalar_lea.vmem %s4, 288
  %v2174 = vld [vmem:[%s2173] sm:$0xff]
  %v2175 = vld [vmem:[%s2173 + $0x8] sm:$0xff]
  %v2176 = vld [vmem:[%s2173 + $0x10] sm:$0xff]
  %v2177 = vld [vmem:[%s2173 + $0x18] sm:$0xff]
  %2178 = vmatprep.subr.mxu0 0.0
  %2179 = vmatpush1.msra.mxu0 %v430
  %2180 = vmatprep.subr.mxu0 0.0
  %2181 = vmatpush1.msra.mxu0 %v431
  %2182 = vmatprep.subr.mxu0 0.0
  %2183 = vmatpush1.msra.mxu0 %v432
  %2184 = vmatprep.subr.mxu0 0.0
  %2185 = vmatpush1.msra.mxu0 %v433
  %2186 = vmatprep.subr.mxu0 0.0
  %2187 = vmatpush1.msra.mxu0 %v434
  %2188 = vmatprep.subr.mxu0 0.0
  %2189 = vmatpush1.msra.mxu0 %v435
  %2190 = vmatprep.subr.mxu0 0.0
  %2191 = vmatpush1.msra.mxu0 %v436
  %2192 = vmatprep.subr.mxu0 0.0
  %2193 = vmatpush1.msra.mxu0 %v437
  %2194 = vmatprep.subr.mxu0 0.0
  %2195 = vmatpush1.msra.mxu0 %v438
  %2196 = vmatprep.subr.mxu0 0.0
  %2197 = vmatpush1.msra.mxu0 %v439
  %2198 = vmatprep.subr.mxu0 0.0
  %2199 = vmatpush1.msra.mxu0 %v440
  %2200 = vmatprep.subr.mxu0 0.0
  %2201 = vmatpush1.msra.mxu0 %v441
  %2202 = vmatprep.subr.mxu0 0.0
  %2203 = vmatpush1.msra.mxu0 %v442
  %2204 = vmatprep.subr.mxu0 0.0
  %2205 = vmatpush1.msra.mxu0 %v443
  %2206 = vmatprep.subr.mxu0 0.0
  %2207 = vmatpush1.msra.mxu0 %v444
  %2208 = vmatprep.subr.mxu0 0.0
  %2209 = vmatpush1.msra.mxu0 %v445
  %2210 = vmatprep.subr.mxu0 0.0
  %2211 = vmatpush1.msra.mxu0 0.0
  %2212 = vmatprep.subr.mxu0 0.0
  %2213 = vmatpush1.msra.mxu0 0.0
  %2214 = vmatprep.subr.mxu0 0.0
  %2215 = vmatpush1.msra.mxu0 0.0
  %2216 = vmatprep.subr.mxu0 0.0
  %2217 = vmatpush1.msra.mxu0 0.0
  %2218 = vmatprep.subr.mxu0 0.0
  %2219 = vmatpush1.msra.mxu0 0.0
  %2220 = vmatprep.subr.mxu0 0.0
  %2221 = vmatpush1.msra.mxu0 0.0
  %2222 = vmatprep.subr.mxu0 0.0
  %2223 = vmatpush1.msra.mxu0 0.0
  %2224 = vmatprep.subr.mxu0 0.0
  %2225 = vmatpush1.msra.mxu0 0.0
  %2226 = vmatprep.subr.mxu0 0.0
  %2227 = vmatpush1.msra.mxu0 0.0
  %2228 = vmatprep.subr.mxu0 0.0
  %2229 = vmatpush1.msra.mxu0 0.0
  %2230 = vmatprep.subr.mxu0 0.0
  %2231 = vmatpush1.msra.mxu0 0.0
  %2232 = vmatprep.subr.mxu0 0.0
  %2233 = vmatpush1.msra.mxu0 0.0
  %2234 = vmatprep.subr.mxu0 0.0
  %2235 = vmatpush1.msra.mxu0 0.0
  %2236 = vmatprep.subr.mxu0 0.0
  %2237 = vmatpush1.msra.mxu0 0.0
  %2238 = vmatprep.subr.mxu0 0.0
  %2239 = vmatpush1.msra.mxu0 0.0
  %2240 = vmatprep.subr.mxu0 0.0
  %2241 = vmatpush1.msra.mxu0 0.0
  %2242 = vmatprep.mubr.f32.mxu0 0.0
  %2243 = vmatmul.mubr.f32.gmra.mrb[0].mxu0 %v2174
  %v2244 = vpop.f32.mrb[0].mxu0
  %v2245 = vadd.f32 0.0, %v2244
  %v2246 = vpop.f32.mrb[0].mxu0
  %2247 = vmatprep.mubr.f32.mxu0 0.0
  %2248 = vmatmul.mubr.f32.gmra.mrb[0].mxu0 %v2175
  %v2249 = vpop.f32.mrb[0].mxu0
  %v2250 = vadd.f32 0.0, %v2249
  %v2251 = vpop.f32.mrb[0].mxu0
  %2252 = vmatprep.mubr.f32.mxu0 0.0
  %2253 = vmatmul.mubr.f32.gmra.mrb[0].mxu0 %v2176
  %v2254 = vpop.f32.mrb[0].mxu0
  %v2255 = vadd.f32 0.0, %v2254
  %v2256 = vpop.f32.mrb[0].mxu0
  %2257 = vmatprep.mubr.f32.mxu0 0.0
  %2258 = vmatmul.mubr.f32.gmra.mrb[0].mxu0 %v2177
  %v2259 = vpop.f32.mrb[0].mxu0
  %v2260 = vadd.f32 0.0, %v2259
  %v2261 = vpop.f32.mrb[0].mxu0
  %2262 = vdwg.mxu0
  %s2263 = scalar_lea.vmem %s5, 72
  %v2264 = vld [vmem:[%s2263] sm:$0xff]
  %v2266 = vsel %vm256, %v2245, 0
  %v2269 = vsel %vm256, %v2250, 0
  %v2272 = vsel %vm256, %v2255, 0
  %v2275 = vsel %vm256, %v2260, 0
  %2277 = vmatprep.subr.mxu0 0.0
  %2278 = vmatpush1.msra.mxu0 %v2264
  %2279 = vmatprep.subr.mxu0 0.0
  %2280 = vmatpush1.msra.mxu0 0.0
  %2281 = vmatprep.subr.mxu0 0.0
  %2282 = vmatpush1.msra.mxu0 0.0
  %2283 = vmatprep.subr.mxu0 0.0
  %2284 = vmatpush1.msra.mxu0 0.0
  %2285 = vmatprep.subr.mxu0 0.0
  %2286 = vmatpush1.msra.mxu0 0.0
  %2287 = vmatprep.subr.mxu0 0.0
  %2288 = vmatpush1.msra.mxu0 0.0
  %2289 = vmatprep.subr.mxu0 0.0
  %2290 = vmatpush1.msra.mxu0 0.0
  %2291 = vmatprep.subr.mxu0 0.0
  %2292 = vmatpush1.msra.mxu0 0.0
  %2293 = vmatprep.subr.mxu0 0.0
  %2294 = vmatpush1.msra.mxu0 0.0
  %2295 = vmatprep.subr.mxu0 0.0
  %2296 = vmatpush1.msra.mxu0 0.0
  %2297 = vmatprep.subr.mxu0 0.0
  %2298 = vmatpush1.msra.mxu0 0.0
  %2299 = vmatprep.subr.mxu0 0.0
  %2300 = vmatpush1.msra.mxu0 0.0
  %2301 = vmatprep.subr.mxu0 0.0
  %2302 = vmatpush1.msra.mxu0 0.0
  %2303 = vmatprep.subr.mxu0 0.0
  %2304 = vmatpush1.msra.mxu0 0.0
  %2305 = vmatprep.subr.mxu0 0.0
  %2306 = vmatpush1.msra.mxu0 0.0
  %2307 = vmatprep.subr.mxu0 0.0
  %2308 = vmatpush1.msra.mxu0 0.0
  %2309 = vmatprep.subr.mxu0 0.0
  %2310 = vmatpush1.msra.mxu0 0.0
  %2311 = vmatprep.subr.mxu0 0.0
  %2312 = vmatpush1.msra.mxu0 0.0
  %2313 = vmatprep.subr.mxu0 0.0
  %2314 = vmatpush1.msra.mxu0 0.0
  %2315 = vmatprep.subr.mxu0 0.0
  %2316 = vmatpush1.msra.mxu0 0.0
  %2317 = vmatprep.subr.mxu0 0.0
  %2318 = vmatpush1.msra.mxu0 0.0
  %2319 = vmatprep.subr.mxu0 0.0
  %2320 = vmatpush1.msra.mxu0 0.0
  %2321 = vmatprep.subr.mxu0 0.0
  %2322 = vmatpush1.msra.mxu0 0.0
  %2323 = vmatprep.subr.mxu0 0.0
  %2324 = vmatpush1.msra.mxu0 0.0
  %2325 = vmatprep.subr.mxu0 0.0
  %2326 = vmatpush1.msra.mxu0 0.0
  %2327 = vmatprep.subr.mxu0 0.0
  %2328 = vmatpush1.msra.mxu0 0.0
  %2329 = vmatprep.subr.mxu0 0.0
  %2330 = vmatpush1.msra.mxu0 0.0
  %2331 = vmatprep.subr.mxu0 0.0
  %2332 = vmatpush1.msra.mxu0 0.0
  %2333 = vmatprep.subr.mxu0 0.0
  %2334 = vmatpush1.msra.mxu0 0.0
  %2335 = vmatprep.subr.mxu0 0.0
  %2336 = vmatpush1.msra.mxu0 0.0
  %2337 = vmatprep.subr.mxu0 0.0
  %2338 = vmatpush1.msra.mxu0 0.0
  %2339 = vmatprep.subr.mxu0 0.0
  %2340 = vmatpush1.msra.mxu0 0.0
  %2341 = vmatprep.mubr.f32.mxu0 0.0
  %2342 = vmatmul.mubr.f32.gmra.mrb[0].mxu0 %v2266
  %v2343 = vpop.f32.mrb[0].mxu0
  %v2344 = vadd.f32 0.0, %v2343
  %v2345 = vpop.f32.mrb[0].mxu0
  %2346 = vmatprep.mubr.f32.mxu0 0.0
  %2347 = vmatmul.mubr.f32.gmra.mrb[0].mxu0 %v2269
  %v2348 = vpop.f32.mrb[0].mxu0
  %v2349 = vadd.f32 0.0, %v2348
  %v2350 = vpop.f32.mrb[0].mxu0
  %2351 = vmatprep.mubr.f32.mxu0 0.0
  %2352 = vmatmul.mubr.f32.gmra.mrb[0].mxu0 %v2272
  %v2353 = vpop.f32.mrb[0].mxu0
  %v2354 = vadd.f32 0.0, %v2353
  %v2355 = vpop.f32.mrb[0].mxu0
  %2356 = vmatprep.mubr.f32.mxu0 0.0
  %2357 = vmatmul.mubr.f32.gmra.mrb[0].mxu0 %v2275
  %v2358 = vpop.f32.mrb[0].mxu0
  %v2359 = vadd.f32 0.0, %v2358
  %v2360 = vpop.f32.mrb[0].mxu0
  %2361 = vdwg.mxu0
  %v2362 = vadd.f32 %v2169, %v2344
  %v2363 = vadd.f32 %v2170, %v2349
  %v2364 = vadd.f32 %v2171, %v2354
  %v2365 = vadd.f32 %v2172, %v2359
  %s2366 = scalar_lea.vmem %s4, 320
  %v2367 = vld [vmem:[%s2366] sm:$0xff]
  %v2368 = vld [vmem:[%s2366 + $0x8] sm:$0xff]
  %v2369 = vld [vmem:[%s2366 + $0x10] sm:$0xff]
  %v2370 = vld [vmem:[%s2366 + $0x18] sm:$0xff]
  %2371 = vmatprep.subr.mxu0 0.0
  %2372 = vmatpush1.msra.mxu0 %v430
  %2373 = vmatprep.subr.mxu0 0.0
  %2374 = vmatpush1.msra.mxu0 %v431
  %2375 = vmatprep.subr.mxu0 0.0
  %2376 = vmatpush1.msra.mxu0 %v432
  %2377 = vmatprep.subr.mxu0 0.0
  %2378 = vmatpush1.msra.mxu0 %v433
  %2379 = vmatprep.subr.mxu0 0.0
  %2380 = vmatpush1.msra.mxu0 %v434
  %2381 = vmatprep.subr.mxu0 0.0
  %2382 = vmatpush1.msra.mxu0 %v435
  %2383 = vmatprep.subr.mxu0 0.0
  %2384 = vmatpush1.msra.mxu0 %v436
  %2385 = vmatprep.subr.mxu0 0.0
  %2386 = vmatpush1.msra.mxu0 %v437
  %2387 = vmatprep.subr.mxu0 0.0
  %2388 = vmatpush1.msra.mxu0 %v438
  %2389 = vmatprep.subr.mxu0 0.0
  %2390 = vmatpush1.msra.mxu0 %v439
  %2391 = vmatprep.subr.mxu0 0.0
  %2392 = vmatpush1.msra.mxu0 %v440
  %2393 = vmatprep.subr.mxu0 0.0
  %2394 = vmatpush1.msra.mxu0 %v441
  %2395 = vmatprep.subr.mxu0 0.0
  %2396 = vmatpush1.msra.mxu0 %v442
  %2397 = vmatprep.subr.mxu0 0.0
  %2398 = vmatpush1.msra.mxu0 %v443
  %2399 = vmatprep.subr.mxu0 0.0
  %2400 = vmatpush1.msra.mxu0 %v444
  %2401 = vmatprep.subr.mxu0 0.0
  %2402 = vmatpush1.msra.mxu0 %v445
  %2403 = vmatprep.subr.mxu0 0.0
  %2404 = vmatpush1.msra.mxu0 0.0
  %2405 = vmatprep.subr.mxu0 0.0
  %2406 = vmatpush1.msra.mxu0 0.0
  %2407 = vmatprep.subr.mxu0 0.0
  %2408 = vmatpush1.msra.mxu0 0.0
  %2409 = vmatprep.subr.mxu0 0.0
  %2410 = vmatpush1.msra.mxu0 0.0
  %2411 = vmatprep.subr.mxu0 0.0
  %2412 = vmatpush1.msra.mxu0 0.0
  %2413 = vmatprep.subr.mxu0 0.0
  %2414 = vmatpush1.msra.mxu0 0.0
  %2415 = vmatprep.subr.mxu0 0.0
  %2416 = vmatpush1.msra.mxu0 0.0
  %2417 = vmatprep.subr.mxu0 0.0
  %2418 = vmatpush1.msra.mxu0 0.0
  %2419 = vmatprep.subr.mxu0 0.0
  %2420 = vmatpush1.msra.mxu0 0.0
  %2421 = vmatprep.subr.mxu0 0.0
  %2422 = vmatpush1.msra.mxu0 0.0
  %2423 = vmatprep.subr.mxu0 0.0
  %2424 = vmatpush1.msra.mxu0 0.0
  %2425 = vmatprep.subr.mxu0 0.0
  %2426 = vmatpush1.msra.mxu0 0.0
  %2427 = vmatprep.subr.mxu0 0.0
  %2428 = vmatpush1.msra.mxu0 0.0
  %2429 = vmatprep.subr.mxu0 0.0
  %2430 = vmatpush1.msra.mxu0 0.0
  %2431 = vmatprep.subr.mxu0 0.0
  %2432 = vmatpush1.msra.mxu0 0.0
  %2433 = vmatprep.subr.mxu0 0.0
  %2434 = vmatpush1.msra.mxu0 0.0
  %2435 = vmatprep.mubr.f32.mxu0 0.0
  %2436 = vmatmul.mubr.f32.gmra.mrb[0].mxu0 %v2367
  %v2437 = vpop.f32.mrb[0].mxu0
  %v2438 = vadd.f32 0.0, %v2437
  %v2439 = vpop.f32.mrb[0].mxu0
  %2440 = vmatprep.mubr.f32.mxu0 0.0
  %2441 = vmatmul.mubr.f32.gmra.mrb[0].mxu0 %v2368
  %v2442 = vpop.f32.mrb[0].mxu0
  %v2443 = vadd.f32 0.0, %v2442
  %v2444 = vpop.f32.mrb[0].mxu0
  %2445 = vmatprep.mubr.f32.mxu0 0.0
  %2446 = vmatmul.mubr.f32.gmra.mrb[0].mxu0 %v2369
  %v2447 = vpop.f32.mrb[0].mxu0
  %v2448 = vadd.f32 0.0, %v2447
  %v2449 = vpop.f32.mrb[0].mxu0
  %2450 = vmatprep.mubr.f32.mxu0 0.0
  %2451 = vmatmul.mubr.f32.gmra.mrb[0].mxu0 %v2370
  %v2452 = vpop.f32.mrb[0].mxu0
  %v2453 = vadd.f32 0.0, %v2452
  %v2454 = vpop.f32.mrb[0].mxu0
  %2455 = vdwg.mxu0
  %s2456 = scalar_lea.vmem %s5, 80
  %v2457 = vld [vmem:[%s2456] sm:$0xff]
  %v2459 = vsel %vm256, %v2438, 0
  %v2462 = vsel %vm256, %v2443, 0
  %v2465 = vsel %vm256, %v2448, 0
  %v2468 = vsel %vm256, %v2453, 0
  %2470 = vmatprep.subr.mxu0 0.0
  %2471 = vmatpush1.msra.mxu0 %v2457
  %2472 = vmatprep.subr.mxu0 0.0
  %2473 = vmatpush1.msra.mxu0 0.0
  %2474 = vmatprep.subr.mxu0 0.0
  %2475 = vmatpush1.msra.mxu0 0.0
  %2476 = vmatprep.subr.mxu0 0.0
  %2477 = vmatpush1.msra.mxu0 0.0
  %2478 = vmatprep.subr.mxu0 0.0
  %2479 = vmatpush1.msra.mxu0 0.0
  %2480 = vmatprep.subr.mxu0 0.0
  %2481 = vmatpush1.msra.mxu0 0.0
  %2482 = vmatprep.subr.mxu0 0.0
  %2483 = vmatpush1.msra.mxu0 0.0
  %2484 = vmatprep.subr.mxu0 0.0
  %2485 = vmatpush1.msra.mxu0 0.0
  %2486 = vmatprep.subr.mxu0 0.0
  %2487 = vmatpush1.msra.mxu0 0.0
  %2488 = vmatprep.subr.mxu0 0.0
  %2489 = vmatpush1.msra.mxu0 0.0
  %2490 = vmatprep.subr.mxu0 0.0
  %2491 = vmatpush1.msra.mxu0 0.0
  %2492 = vmatprep.subr.mxu0 0.0
  %2493 = vmatpush1.msra.mxu0 0.0
  %2494 = vmatprep.subr.mxu0 0.0
  %2495 = vmatpush1.msra.mxu0 0.0
  %2496 = vmatprep.subr.mxu0 0.0
  %2497 = vmatpush1.msra.mxu0 0.0
  %2498 = vmatprep.subr.mxu0 0.0
  %2499 = vmatpush1.msra.mxu0 0.0
  %2500 = vmatprep.subr.mxu0 0.0
  %2501 = vmatpush1.msra.mxu0 0.0
  %2502 = vmatprep.subr.mxu0 0.0
  %2503 = vmatpush1.msra.mxu0 0.0
  %2504 = vmatprep.subr.mxu0 0.0
  %2505 = vmatpush1.msra.mxu0 0.0
  %2506 = vmatprep.subr.mxu0 0.0
  %2507 = vmatpush1.msra.mxu0 0.0
  %2508 = vmatprep.subr.mxu0 0.0
  %2509 = vmatpush1.msra.mxu0 0.0
  %2510 = vmatprep.subr.mxu0 0.0
  %2511 = vmatpush1.msra.mxu0 0.0
  %2512 = vmatprep.subr.mxu0 0.0
  %2513 = vmatpush1.msra.mxu0 0.0
  %2514 = vmatprep.subr.mxu0 0.0
  %2515 = vmatpush1.msra.mxu0 0.0
  %2516 = vmatprep.subr.mxu0 0.0
  %2517 = vmatpush1.msra.mxu0 0.0
  %2518 = vmatprep.subr.mxu0 0.0
  %2519 = vmatpush1.msra.mxu0 0.0
  %2520 = vmatprep.subr.mxu0 0.0
  %2521 = vmatpush1.msra.mxu0 0.0
  %2522 = vmatprep.subr.mxu0 0.0
  %2523 = vmatpush1.msra.mxu0 0.0
  %2524 = vmatprep.subr.mxu0 0.0
  %2525 = vmatpush1.msra.mxu0 0.0
  %2526 = vmatprep.subr.mxu0 0.0
  %2527 = vmatpush1.msra.mxu0 0.0
  %2528 = vmatprep.subr.mxu0 0.0
  %2529 = vmatpush1.msra.mxu0 0.0
  %2530 = vmatprep.subr.mxu0 0.0
  %2531 = vmatpush1.msra.mxu0 0.0
  %2532 = vmatprep.subr.mxu0 0.0
  %2533 = vmatpush1.msra.mxu0 0.0
  %2534 = vmatprep.mubr.f32.mxu0 0.0
  %2535 = vmatmul.mubr.f32.gmra.mrb[0].mxu0 %v2459
  %v2536 = vpop.f32.mrb[0].mxu0
  %v2537 = vadd.f32 0.0, %v2536
  %v2538 = vpop.f32.mrb[0].mxu0
  %2539 = vmatprep.mubr.f32.mxu0 0.0
  %2540 = vmatmul.mubr.f32.gmra.mrb[0].mxu0 %v2462
  %v2541 = vpop.f32.mrb[0].mxu0
  %v2542 = vadd.f32 0.0, %v2541
  %v2543 = vpop.f32.mrb[0].mxu0
  %2544 = vmatprep.mubr.f32.mxu0 0.0
  %2545 = vmatmul.mubr.f32.gmra.mrb[0].mxu0 %v2465
  %v2546 = vpop.f32.mrb[0].mxu0
  %v2547 = vadd.f32 0.0, %v2546
  %v2548 = vpop.f32.mrb[0].mxu0
  %2549 = vmatprep.mubr.f32.mxu0 0.0
  %2550 = vmatmul.mubr.f32.gmra.mrb[0].mxu0 %v2468
  %v2551 = vpop.f32.mrb[0].mxu0
  %v2552 = vadd.f32 0.0, %v2551
  %v2553 = vpop.f32.mrb[0].mxu0
  %2554 = vdwg.mxu0
  %v2555 = vadd.f32 %v2362, %v2537
  %v2556 = vadd.f32 %v2363, %v2542
  %v2557 = vadd.f32 %v2364, %v2547
  %v2558 = vadd.f32 %v2365, %v2552
  %s2559 = scalar_lea.vmem %s4, 352
  %v2560 = vld [vmem:[%s2559] sm:$0xff]
  %v2561 = vld [vmem:[%s2559 + $0x8] sm:$0xff]
  %v2562 = vld [vmem:[%s2559 + $0x10] sm:$0xff]
  %v2563 = vld [vmem:[%s2559 + $0x18] sm:$0xff]
  %2564 = vmatprep.subr.mxu0 0.0
  %2565 = vmatpush1.msra.mxu0 %v430
  %2566 = vmatprep.subr.mxu0 0.0
  %2567 = vmatpush1.msra.mxu0 %v431
  %2568 = vmatprep.subr.mxu0 0.0
  %2569 = vmatpush1.msra.mxu0 %v432
  %2570 = vmatprep.subr.mxu0 0.0
  %2571 = vmatpush1.msra.mxu0 %v433
  %2572 = vmatprep.subr.mxu0 0.0
  %2573 = vmatpush1.msra.mxu0 %v434
  %2574 = vmatprep.subr.mxu0 0.0
  %2575 = vmatpush1.msra.mxu0 %v435
  %2576 = vmatprep.subr.mxu0 0.0
  %2577 = vmatpush1.msra.mxu0 %v436
  %2578 = vmatprep.subr.mxu0 0.0
  %2579 = vmatpush1.msra.mxu0 %v437
  %2580 = vmatprep.subr.mxu0 0.0
  %2581 = vmatpush1.msra.mxu0 %v438
  %2582 = vmatprep.subr.mxu0 0.0
  %2583 = vmatpush1.msra.mxu0 %v439
  %2584 = vmatprep.subr.mxu0 0.0
  %2585 = vmatpush1.msra.mxu0 %v440
  %2586 = vmatprep.subr.mxu0 0.0
  %2587 = vmatpush1.msra.mxu0 %v441
  %2588 = vmatprep.subr.mxu0 0.0
  %2589 = vmatpush1.msra.mxu0 %v442
  %2590 = vmatprep.subr.mxu0 0.0
  %2591 = vmatpush1.msra.mxu0 %v443
  %2592 = vmatprep.subr.mxu0 0.0
  %2593 = vmatpush1.msra.mxu0 %v444
  %2594 = vmatprep.subr.mxu0 0.0
  %2595 = vmatpush1.msra.mxu0 %v445
  %2596 = vmatprep.subr.mxu0 0.0
  %2597 = vmatpush1.msra.mxu0 0.0
  %2598 = vmatprep.subr.mxu0 0.0
  %2599 = vmatpush1.msra.mxu0 0.0
  %2600 = vmatprep.subr.mxu0 0.0
  %2601 = vmatpush1.msra.mxu0 0.0
  %2602 = vmatprep.subr.mxu0 0.0
  %2603 = vmatpush1.msra.mxu0 0.0
  %2604 = vmatprep.subr.mxu0 0.0
  %2605 = vmatpush1.msra.mxu0 0.0
  %2606 = vmatprep.subr.mxu0 0.0
  %2607 = vmatpush1.msra.mxu0 0.0
  %2608 = vmatprep.subr.mxu0 0.0
  %2609 = vmatpush1.msra.mxu0 0.0
  %2610 = vmatprep.subr.mxu0 0.0
  %2611 = vmatpush1.msra.mxu0 0.0
  %2612 = vmatprep.subr.mxu0 0.0
  %2613 = vmatpush1.msra.mxu0 0.0
  %2614 = vmatprep.subr.mxu0 0.0
  %2615 = vmatpush1.msra.mxu0 0.0
  %2616 = vmatprep.subr.mxu0 0.0
  %2617 = vmatpush1.msra.mxu0 0.0
  %2618 = vmatprep.subr.mxu0 0.0
  %2619 = vmatpush1.msra.mxu0 0.0
  %2620 = vmatprep.subr.mxu0 0.0
  %2621 = vmatpush1.msra.mxu0 0.0
  %2622 = vmatprep.subr.mxu0 0.0
  %2623 = vmatpush1.msra.mxu0 0.0
  %2624 = vmatprep.subr.mxu0 0.0
  %2625 = vmatpush1.msra.mxu0 0.0
  %2626 = vmatprep.subr.mxu0 0.0
  %2627 = vmatpush1.msra.mxu0 0.0
  %2628 = vmatprep.mubr.f32.mxu0 0.0
  %2629 = vmatmul.mubr.f32.gmra.mrb[0].mxu0 %v2560
  %v2630 = vpop.f32.mrb[0].mxu0
  %v2631 = vadd.f32 0.0, %v2630
  %v2632 = vpop.f32.mrb[0].mxu0
  %2633 = vmatprep.mubr.f32.mxu0 0.0
  %2634 = vmatmul.mubr.f32.gmra.mrb[0].mxu0 %v2561
  %v2635 = vpop.f32.mrb[0].mxu0
  %v2636 = vadd.f32 0.0, %v2635
  %v2637 = vpop.f32.mrb[0].mxu0
  %2638 = vmatprep.mubr.f32.mxu0 0.0
  %2639 = vmatmul.mubr.f32.gmra.mrb[0].mxu0 %v2562
  %v2640 = vpop.f32.mrb[0].mxu0
  %v2641 = vadd.f32 0.0, %v2640
  %v2642 = vpop.f32.mrb[0].mxu0
  %2643 = vmatprep.mubr.f32.mxu0 0.0
  %2644 = vmatmul.mubr.f32.gmra.mrb[0].mxu0 %v2563
  %v2645 = vpop.f32.mrb[0].mxu0
  %v2646 = vadd.f32 0.0, %v2645
  %v2647 = vpop.f32.mrb[0].mxu0
  %2648 = vdwg.mxu0
  %s2649 = scalar_lea.vmem %s5, 88
  %v2650 = vld [vmem:[%s2649] sm:$0xff]
  %v2652 = vsel %vm256, %v2631, 0
  %v2655 = vsel %vm256, %v2636, 0
  %v2658 = vsel %vm256, %v2641, 0
  %v2661 = vsel %vm256, %v2646, 0
  %2663 = vmatprep.subr.mxu0 0.0
  %2664 = vmatpush1.msra.mxu0 %v2650
  %2665 = vmatprep.subr.mxu0 0.0
  %2666 = vmatpush1.msra.mxu0 0.0
  %2667 = vmatprep.subr.mxu0 0.0
  %2668 = vmatpush1.msra.mxu0 0.0
  %2669 = vmatprep.subr.mxu0 0.0
  %2670 = vmatpush1.msra.mxu0 0.0
  %2671 = vmatprep.subr.mxu0 0.0
  %2672 = vmatpush1.msra.mxu0 0.0
  %2673 = vmatprep.subr.mxu0 0.0
  %2674 = vmatpush1.msra.mxu0 0.0
  %2675 = vmatprep.subr.mxu0 0.0
  %2676 = vmatpush1.msra.mxu0 0.0
  %2677 = vmatprep.subr.mxu0 0.0
  %2678 = vmatpush1.msra.mxu0 0.0
  %2679 = vmatprep.subr.mxu0 0.0
  %2680 = vmatpush1.msra.mxu0 0.0
  %2681 = vmatprep.subr.mxu0 0.0
  %2682 = vmatpush1.msra.mxu0 0.0
  %2683 = vmatprep.subr.mxu0 0.0
  %2684 = vmatpush1.msra.mxu0 0.0
  %2685 = vmatprep.subr.mxu0 0.0
  %2686 = vmatpush1.msra.mxu0 0.0
  %2687 = vmatprep.subr.mxu0 0.0
  %2688 = vmatpush1.msra.mxu0 0.0
  %2689 = vmatprep.subr.mxu0 0.0
  %2690 = vmatpush1.msra.mxu0 0.0
  %2691 = vmatprep.subr.mxu0 0.0
  %2692 = vmatpush1.msra.mxu0 0.0
  %2693 = vmatprep.subr.mxu0 0.0
  %2694 = vmatpush1.msra.mxu0 0.0
  %2695 = vmatprep.subr.mxu0 0.0
  %2696 = vmatpush1.msra.mxu0 0.0
  %2697 = vmatprep.subr.mxu0 0.0
  %2698 = vmatpush1.msra.mxu0 0.0
  %2699 = vmatprep.subr.mxu0 0.0
  %2700 = vmatpush1.msra.mxu0 0.0
  %2701 = vmatprep.subr.mxu0 0.0
  %2702 = vmatpush1.msra.mxu0 0.0
  %2703 = vmatprep.subr.mxu0 0.0
  %2704 = vmatpush1.msra.mxu0 0.0
  %2705 = vmatprep.subr.mxu0 0.0
  %2706 = vmatpush1.msra.mxu0 0.0
  %2707 = vmatprep.subr.mxu0 0.0
  %2708 = vmatpush1.msra.mxu0 0.0
  %2709 = vmatprep.subr.mxu0 0.0
  %2710 = vmatpush1.msra.mxu0 0.0
  %2711 = vmatprep.subr.mxu0 0.0
  %2712 = vmatpush1.msra.mxu0 0.0
  %2713 = vmatprep.subr.mxu0 0.0
  %2714 = vmatpush1.msra.mxu0 0.0
  %2715 = vmatprep.subr.mxu0 0.0
  %2716 = vmatpush1.msra.mxu0 0.0
  %2717 = vmatprep.subr.mxu0 0.0
  %2718 = vmatpush1.msra.mxu0 0.0
  %2719 = vmatprep.subr.mxu0 0.0
  %2720 = vmatpush1.msra.mxu0 0.0
  %2721 = vmatprep.subr.mxu0 0.0
  %2722 = vmatpush1.msra.mxu0 0.0
  %2723 = vmatprep.subr.mxu0 0.0
  %2724 = vmatpush1.msra.mxu0 0.0
  %2725 = vmatprep.subr.mxu0 0.0
  %2726 = vmatpush1.msra.mxu0 0.0
  %2727 = vmatprep.mubr.f32.mxu0 0.0
  %2728 = vmatmul.mubr.f32.gmra.mrb[0].mxu0 %v2652
  %v2729 = vpop.f32.mrb[0].mxu0
  %v2730 = vadd.f32 0.0, %v2729
  %v2731 = vpop.f32.mrb[0].mxu0
  %2732 = vmatprep.mubr.f32.mxu0 0.0
  %2733 = vmatmul.mubr.f32.gmra.mrb[0].mxu0 %v2655
  %v2734 = vpop.f32.mrb[0].mxu0
  %v2735 = vadd.f32 0.0, %v2734
  %v2736 = vpop.f32.mrb[0].mxu0
  %2737 = vmatprep.mubr.f32.mxu0 0.0
  %2738 = vmatmul.mubr.f32.gmra.mrb[0].mxu0 %v2658
  %v2739 = vpop.f32.mrb[0].mxu0
  %v2740 = vadd.f32 0.0, %v2739
  %v2741 = vpop.f32.mrb[0].mxu0
  %2742 = vmatprep.mubr.f32.mxu0 0.0
  %2743 = vmatmul.mubr.f32.gmra.mrb[0].mxu0 %v2661
  %v2744 = vpop.f32.mrb[0].mxu0
  %v2745 = vadd.f32 0.0, %v2744
  %v2746 = vpop.f32.mrb[0].mxu0
  %2747 = vdwg.mxu0
  %v2748 = vadd.f32 %v2555, %v2730
  %v2749 = vadd.f32 %v2556, %v2735
  %v2750 = vadd.f32 %v2557, %v2740
  %v2751 = vadd.f32 %v2558, %v2745
  %s2752 = scalar_lea.vmem %s4, 384
  %v2753 = vld [vmem:[%s2752] sm:$0xff]
  %v2754 = vld [vmem:[%s2752 + $0x8] sm:$0xff]
  %v2755 = vld [vmem:[%s2752 + $0x10] sm:$0xff]
  %v2756 = vld [vmem:[%s2752 + $0x18] sm:$0xff]
  %2757 = vmatprep.subr.mxu0 0.0
  %2758 = vmatpush1.msra.mxu0 %v430
  %2759 = vmatprep.subr.mxu0 0.0
  %2760 = vmatpush1.msra.mxu0 %v431
  %2761 = vmatprep.subr.mxu0 0.0
  %2762 = vmatpush1.msra.mxu0 %v432
  %2763 = vmatprep.subr.mxu0 0.0
  %2764 = vmatpush1.msra.mxu0 %v433
  %2765 = vmatprep.subr.mxu0 0.0
  %2766 = vmatpush1.msra.mxu0 %v434
  %2767 = vmatprep.subr.mxu0 0.0
  %2768 = vmatpush1.msra.mxu0 %v435
  %2769 = vmatprep.subr.mxu0 0.0
  %2770 = vmatpush1.msra.mxu0 %v436
  %2771 = vmatprep.subr.mxu0 0.0
  %2772 = vmatpush1.msra.mxu0 %v437
  %2773 = vmatprep.subr.mxu0 0.0
  %2774 = vmatpush1.msra.mxu0 %v438
  %2775 = vmatprep.subr.mxu0 0.0
  %2776 = vmatpush1.msra.mxu0 %v439
  %2777 = vmatprep.subr.mxu0 0.0
  %2778 = vmatpush1.msra.mxu0 %v440
  %2779 = vmatprep.subr.mxu0 0.0
  %2780 = vmatpush1.msra.mxu0 %v441
  %2781 = vmatprep.subr.mxu0 0.0
  %2782 = vmatpush1.msra.mxu0 %v442
  %2783 = vmatprep.subr.mxu0 0.0
  %2784 = vmatpush1.msra.mxu0 %v443
  %2785 = vmatprep.subr.mxu0 0.0
  %2786 = vmatpush1.msra.mxu0 %v444
  %2787 = vmatprep.subr.mxu0 0.0
  %2788 = vmatpush1.msra.mxu0 %v445
  %2789 = vmatprep.subr.mxu0 0.0
  %2790 = vmatpush1.msra.mxu0 0.0
  %2791 = vmatprep.subr.mxu0 0.0
  %2792 = vmatpush1.msra.mxu0 0.0
  %2793 = vmatprep.subr.mxu0 0.0
  %2794 = vmatpush1.msra.mxu0 0.0
  %2795 = vmatprep.subr.mxu0 0.0
  %2796 = vmatpush1.msra.mxu0 0.0
  %2797 = vmatprep.subr.mxu0 0.0
  %2798 = vmatpush1.msra.mxu0 0.0
  %2799 = vmatprep.subr.mxu0 0.0
  %2800 = vmatpush1.msra.mxu0 0.0
  %2801 = vmatprep.subr.mxu0 0.0
  %2802 = vmatpush1.msra.mxu0 0.0
  %2803 = vmatprep.subr.mxu0 0.0
  %2804 = vmatpush1.msra.mxu0 0.0
  %2805 = vmatprep.subr.mxu0 0.0
  %2806 = vmatpush1.msra.mxu0 0.0
  %2807 = vmatprep.subr.mxu0 0.0
  %2808 = vmatpush1.msra.mxu0 0.0
  %2809 = vmatprep.subr.mxu0 0.0
  %2810 = vmatpush1.msra.mxu0 0.0
  %2811 = vmatprep.subr.mxu0 0.0
  %2812 = vmatpush1.msra.mxu0 0.0
  %2813 = vmatprep.subr.mxu0 0.0
  %2814 = vmatpush1.msra.mxu0 0.0
  %2815 = vmatprep.subr.mxu0 0.0
  %2816 = vmatpush1.msra.mxu0 0.0
  %2817 = vmatprep.subr.mxu0 0.0
  %2818 = vmatpush1.msra.mxu0 0.0
  %2819 = vmatprep.subr.mxu0 0.0
  %2820 = vmatpush1.msra.mxu0 0.0
  %2821 = vmatprep.mubr.f32.mxu0 0.0
  %2822 = vmatmul.mubr.f32.gmra.mrb[0].mxu0 %v2753
  %v2823 = vpop.f32.mrb[0].mxu0
  %v2824 = vadd.f32 0.0, %v2823
  %v2825 = vpop.f32.mrb[0].mxu0
  %2826 = vmatprep.mubr.f32.mxu0 0.0
  %2827 = vmatmul.mubr.f32.gmra.mrb[0].mxu0 %v2754
  %v2828 = vpop.f32.mrb[0].mxu0
  %v2829 = vadd.f32 0.0, %v2828
  %v2830 = vpop.f32.mrb[0].mxu0
  %2831 = vmatprep.mubr.f32.mxu0 0.0
  %2832 = vmatmul.mubr.f32.gmra.mrb[0].mxu0 %v2755
  %v2833 = vpop.f32.mrb[0].mxu0
  %v2834 = vadd.f32 0.0, %v2833
  %v2835 = vpop.f32.mrb[0].mxu0
  %2836 = vmatprep.mubr.f32.mxu0 0.0
  %2837 = vmatmul.mubr.f32.gmra.mrb[0].mxu0 %v2756
  %v2838 = vpop.f32.mrb[0].mxu0
  %v2839 = vadd.f32 0.0, %v2838
  %v2840 = vpop.f32.mrb[0].mxu0
  %2841 = vdwg.mxu0
  %s2842 = scalar_lea.vmem %s5, 96
  %v2843 = vld [vmem:[%s2842] sm:$0xff]
  %v2845 = vsel %vm256, %v2824, 0
  %v2848 = vsel %vm256, %v2829, 0
  %v2851 = vsel %vm256, %v2834, 0
  %v2854 = vsel %vm256, %v2839, 0
  %2856 = vmatprep.subr.mxu0 0.0
  %2857 = vmatpush1.msra.mxu0 %v2843
  %2858 = vmatprep.subr.mxu0 0.0
  %2859 = vmatpush1.msra.mxu0 0.0
  %2860 = vmatprep.subr.mxu0 0.0
  %2861 = vmatpush1.msra.mxu0 0.0
  %2862 = vmatprep.subr.mxu0 0.0
  %2863 = vmatpush1.msra.mxu0 0.0
  %2864 = vmatprep.subr.mxu0 0.0
  %2865 = vmatpush1.msra.mxu0 0.0
  %2866 = vmatprep.subr.mxu0 0.0
  %2867 = vmatpush1.msra.mxu0 0.0
  %2868 = vmatprep.subr.mxu0 0.0
  %2869 = vmatpush1.msra.mxu0 0.0
  %2870 = vmatprep.subr.mxu0 0.0
  %2871 = vmatpush1.msra.mxu0 0.0
  %2872 = vmatprep.subr.mxu0 0.0
  %2873 = vmatpush1.msra.mxu0 0.0
  %2874 = vmatprep.subr.mxu0 0.0
  %2875 = vmatpush1.msra.mxu0 0.0
  %2876 = vmatprep.subr.mxu0 0.0
  %2877 = vmatpush1.msra.mxu0 0.0
  %2878 = vmatprep.subr.mxu0 0.0
  %2879 = vmatpush1.msra.mxu0 0.0
  %2880 = vmatprep.subr.mxu0 0.0
  %2881 = vmatpush1.msra.mxu0 0.0
  %2882 = vmatprep.subr.mxu0 0.0
  %2883 = vmatpush1.msra.mxu0 0.0
  %2884 = vmatprep.subr.mxu0 0.0
  %2885 = vmatpush1.msra.mxu0 0.0
  %2886 = vmatprep.subr.mxu0 0.0
  %2887 = vmatpush1.msra.mxu0 0.0
  %2888 = vmatprep.subr.mxu0 0.0
  %2889 = vmatpush1.msra.mxu0 0.0
  %2890 = vmatprep.subr.mxu0 0.0
  %2891 = vmatpush1.msra.mxu0 0.0
  %2892 = vmatprep.subr.mxu0 0.0
  %2893 = vmatpush1.msra.mxu0 0.0
  %2894 = vmatprep.subr.mxu0 0.0
  %2895 = vmatpush1.msra.mxu0 0.0
  %2896 = vmatprep.subr.mxu0 0.0
  %2897 = vmatpush1.msra.mxu0 0.0
  %2898 = vmatprep.subr.mxu0 0.0
  %2899 = vmatpush1.msra.mxu0 0.0
  %2900 = vmatprep.subr.mxu0 0.0
  %2901 = vmatpush1.msra.mxu0 0.0
  %2902 = vmatprep.subr.mxu0 0.0
  %2903 = vmatpush1.msra.mxu0 0.0
  %2904 = vmatprep.subr.mxu0 0.0
  %2905 = vmatpush1.msra.mxu0 0.0
  %2906 = vmatprep.subr.mxu0 0.0
  %2907 = vmatpush1.msra.mxu0 0.0
  %2908 = vmatprep.subr.mxu0 0.0
  %2909 = vmatpush1.msra.mxu0 0.0
  %2910 = vmatprep.subr.mxu0 0.0
  %2911 = vmatpush1.msra.mxu0 0.0
  %2912 = vmatprep.subr.mxu0 0.0
  %2913 = vmatpush1.msra.mxu0 0.0
  %2914 = vmatprep.subr.mxu0 0.0
  %2915 = vmatpush1.msra.mxu0 0.0
  %2916 = vmatprep.subr.mxu0 0.0
  %2917 = vmatpush1.msra.mxu0 0.0
  %2918 = vmatprep.subr.mxu0 0.0
  %2919 = vmatpush1.msra.mxu0 0.0
  %2920 = vmatprep.mubr.f32.mxu0 0.0
  %2921 = vmatmul.mubr.f32.gmra.mrb[0].mxu0 %v2845
  %v2922 = vpop.f32.mrb[0].mxu0
  %v2923 = vadd.f32 0.0, %v2922
  %v2924 = vpop.f32.mrb[0].mxu0
  %2925 = vmatprep.mubr.f32.mxu0 0.0
  %2926 = vmatmul.mubr.f32.gmra.mrb[0].mxu0 %v2848
  %v2927 = vpop.f32.mrb[0].mxu0
  %v2928 = vadd.f32 0.0, %v2927
  %v2929 = vpop.f32.mrb[0].mxu0
  %2930 = vmatprep.mubr.f32.mxu0 0.0
  %2931 = vmatmul.mubr.f32.gmra.mrb[0].mxu0 %v2851
  %v2932 = vpop.f32.mrb[0].mxu0
  %v2933 = vadd.f32 0.0, %v2932
  %v2934 = vpop.f32.mrb[0].mxu0
  %2935 = vmatprep.mubr.f32.mxu0 0.0
  %2936 = vmatmul.mubr.f32.gmra.mrb[0].mxu0 %v2854
  %v2937 = vpop.f32.mrb[0].mxu0
  %v2938 = vadd.f32 0.0, %v2937
  %v2939 = vpop.f32.mrb[0].mxu0
  %2940 = vdwg.mxu0
  %v2941 = vadd.f32 %v2748, %v2923
  %v2942 = vadd.f32 %v2749, %v2928
  %v2943 = vadd.f32 %v2750, %v2933
  %v2944 = vadd.f32 %v2751, %v2938
  %s2945 = scalar_lea.vmem %s4, 416
  %v2946 = vld [vmem:[%s2945] sm:$0xff]
  %v2947 = vld [vmem:[%s2945 + $0x8] sm:$0xff]
  %v2948 = vld [vmem:[%s2945 + $0x10] sm:$0xff]
  %v2949 = vld [vmem:[%s2945 + $0x18] sm:$0xff]
  %2950 = vmatprep.subr.mxu0 0.0
  %2951 = vmatpush1.msra.mxu0 %v430
  %2952 = vmatprep.subr.mxu0 0.0
  %2953 = vmatpush1.msra.mxu0 %v431
  %2954 = vmatprep.subr.mxu0 0.0
  %2955 = vmatpush1.msra.mxu0 %v432
  %2956 = vmatprep.subr.mxu0 0.0
  %2957 = vmatpush1.msra.mxu0 %v433
  %2958 = vmatprep.subr.mxu0 0.0
  %2959 = vmatpush1.msra.mxu0 %v434
  %2960 = vmatprep.subr.mxu0 0.0
  %2961 = vmatpush1.msra.mxu0 %v435
  %2962 = vmatprep.subr.mxu0 0.0
  %2963 = vmatpush1.msra.mxu0 %v436
  %2964 = vmatprep.subr.mxu0 0.0
  %2965 = vmatpush1.msra.mxu0 %v437
  %2966 = vmatprep.subr.mxu0 0.0
  %2967 = vmatpush1.msra.mxu0 %v438
  %2968 = vmatprep.subr.mxu0 0.0
  %2969 = vmatpush1.msra.mxu0 %v439
  %2970 = vmatprep.subr.mxu0 0.0
  %2971 = vmatpush1.msra.mxu0 %v440
  %2972 = vmatprep.subr.mxu0 0.0
  %2973 = vmatpush1.msra.mxu0 %v441
  %2974 = vmatprep.subr.mxu0 0.0
  %2975 = vmatpush1.msra.mxu0 %v442
  %2976 = vmatprep.subr.mxu0 0.0
  %2977 = vmatpush1.msra.mxu0 %v443
  %2978 = vmatprep.subr.mxu0 0.0
  %2979 = vmatpush1.msra.mxu0 %v444
  %2980 = vmatprep.subr.mxu0 0.0
  %2981 = vmatpush1.msra.mxu0 %v445
  %2982 = vmatprep.subr.mxu0 0.0
  %2983 = vmatpush1.msra.mxu0 0.0
  %2984 = vmatprep.subr.mxu0 0.0
  %2985 = vmatpush1.msra.mxu0 0.0
  %2986 = vmatprep.subr.mxu0 0.0
  %2987 = vmatpush1.msra.mxu0 0.0
  %2988 = vmatprep.subr.mxu0 0.0
  %2989 = vmatpush1.msra.mxu0 0.0
  %2990 = vmatprep.subr.mxu0 0.0
  %2991 = vmatpush1.msra.mxu0 0.0
  %2992 = vmatprep.subr.mxu0 0.0
  %2993 = vmatpush1.msra.mxu0 0.0
  %2994 = vmatprep.subr.mxu0 0.0
  %2995 = vmatpush1.msra.mxu0 0.0
  %2996 = vmatprep.subr.mxu0 0.0
  %2997 = vmatpush1.msra.mxu0 0.0
  %2998 = vmatprep.subr.mxu0 0.0
  %2999 = vmatpush1.msra.mxu0 0.0
  %3000 = vmatprep.subr.mxu0 0.0
  %3001 = vmatpush1.msra.mxu0 0.0
  %3002 = vmatprep.subr.mxu0 0.0
  %3003 = vmatpush1.msra.mxu0 0.0
  %3004 = vmatprep.subr.mxu0 0.0
  %3005 = vmatpush1.msra.mxu0 0.0
  %3006 = vmatprep.subr.mxu0 0.0
  %3007 = vmatpush1.msra.mxu0 0.0
  %3008 = vmatprep.subr.mxu0 0.0
  %3009 = vmatpush1.msra.mxu0 0.0
  %3010 = vmatprep.subr.mxu0 0.0
  %3011 = vmatpush1.msra.mxu0 0.0
  %3012 = vmatprep.subr.mxu0 0.0
  %3013 = vmatpush1.msra.mxu0 0.0
  %3014 = vmatprep.mubr.f32.mxu0 0.0
  %3015 = vmatmul.mubr.f32.gmra.mrb[0].mxu0 %v2946
  %v3016 = vpop.f32.mrb[0].mxu0
  %v3017 = vadd.f32 0.0, %v3016
  %v3018 = vpop.f32.mrb[0].mxu0
  %3019 = vmatprep.mubr.f32.mxu0 0.0
  %3020 = vmatmul.mubr.f32.gmra.mrb[0].mxu0 %v2947
  %v3021 = vpop.f32.mrb[0].mxu0
  %v3022 = vadd.f32 0.0, %v3021
  %v3023 = vpop.f32.mrb[0].mxu0
  %3024 = vmatprep.mubr.f32.mxu0 0.0
  %3025 = vmatmul.mubr.f32.gmra.mrb[0].mxu0 %v2948
  %v3026 = vpop.f32.mrb[0].mxu0
  %v3027 = vadd.f32 0.0, %v3026
  %v3028 = vpop.f32.mrb[0].mxu0
  %3029 = vmatprep.mubr.f32.mxu0 0.0
  %3030 = vmatmul.mubr.f32.gmra.mrb[0].mxu0 %v2949
  %v3031 = vpop.f32.mrb[0].mxu0
  %v3032 = vadd.f32 0.0, %v3031
  %v3033 = vpop.f32.mrb[0].mxu0
  %3034 = vdwg.mxu0
  %s3035 = scalar_lea.vmem %s5, 104
  %v3036 = vld [vmem:[%s3035] sm:$0xff]
  %v3038 = vsel %vm256, %v3017, 0
  %v3041 = vsel %vm256, %v3022, 0
  %v3044 = vsel %vm256, %v3027, 0
  %v3047 = vsel %vm256, %v3032, 0
  %3049 = vmatprep.subr.mxu0 0.0
  %3050 = vmatpush1.msra.mxu0 %v3036
  %3051 = vmatprep.subr.mxu0 0.0
  %3052 = vmatpush1.msra.mxu0 0.0
  %3053 = vmatprep.subr.mxu0 0.0
  %3054 = vmatpush1.msra.mxu0 0.0
  %3055 = vmatprep.subr.mxu0 0.0
  %3056 = vmatpush1.msra.mxu0 0.0
  %3057 = vmatprep.subr.mxu0 0.0
  %3058 = vmatpush1.msra.mxu0 0.0
  %3059 = vmatprep.subr.mxu0 0.0
  %3060 = vmatpush1.msra.mxu0 0.0
  %3061 = vmatprep.subr.mxu0 0.0
  %3062 = vmatpush1.msra.mxu0 0.0
  %3063 = vmatprep.subr.mxu0 0.0
  %3064 = vmatpush1.msra.mxu0 0.0
  %3065 = vmatprep.subr.mxu0 0.0
  %3066 = vmatpush1.msra.mxu0 0.0
  %3067 = vmatprep.subr.mxu0 0.0
  %3068 = vmatpush1.msra.mxu0 0.0
  %3069 = vmatprep.subr.mxu0 0.0
  %3070 = vmatpush1.msra.mxu0 0.0
  %3071 = vmatprep.subr.mxu0 0.0
  %3072 = vmatpush1.msra.mxu0 0.0
  %3073 = vmatprep.subr.mxu0 0.0
  %3074 = vmatpush1.msra.mxu0 0.0
  %3075 = vmatprep.subr.mxu0 0.0
  %3076 = vmatpush1.msra.mxu0 0.0
  %3077 = vmatprep.subr.mxu0 0.0
  %3078 = vmatpush1.msra.mxu0 0.0
  %3079 = vmatprep.subr.mxu0 0.0
  %3080 = vmatpush1.msra.mxu0 0.0
  %3081 = vmatprep.subr.mxu0 0.0
  %3082 = vmatpush1.msra.mxu0 0.0
  %3083 = vmatprep.subr.mxu0 0.0
  %3084 = vmatpush1.msra.mxu0 0.0
  %3085 = vmatprep.subr.mxu0 0.0
  %3086 = vmatpush1.msra.mxu0 0.0
  %3087 = vmatprep.subr.mxu0 0.0
  %3088 = vmatpush1.msra.mxu0 0.0
  %3089 = vmatprep.subr.mxu0 0.0
  %3090 = vmatpush1.msra.mxu0 0.0
  %3091 = vmatprep.subr.mxu0 0.0
  %3092 = vmatpush1.msra.mxu0 0.0
  %3093 = vmatprep.subr.mxu0 0.0
  %3094 = vmatpush1.msra.mxu0 0.0
  %3095 = vmatprep.subr.mxu0 0.0
  %3096 = vmatpush1.msra.mxu0 0.0
  %3097 = vmatprep.subr.mxu0 0.0
  %3098 = vmatpush1.msra.mxu0 0.0
  %3099 = vmatprep.subr.mxu0 0.0
  %3100 = vmatpush1.msra.mxu0 0.0
  %3101 = vmatprep.subr.mxu0 0.0
  %3102 = vmatpush1.msra.mxu0 0.0
  %3103 = vmatprep.subr.mxu0 0.0
  %3104 = vmatpush1.msra.mxu0 0.0
  %3105 = vmatprep.subr.mxu0 0.0
  %3106 = vmatpush1.msra.mxu0 0.0
  %3107 = vmatprep.subr.mxu0 0.0
  %3108 = vmatpush1.msra.mxu0 0.0
  %3109 = vmatprep.subr.mxu0 0.0
  %3110 = vmatpush1.msra.mxu0 0.0
  %3111 = vmatprep.subr.mxu0 0.0
  %3112 = vmatpush1.msra.mxu0 0.0
  %3113 = vmatprep.mubr.f32.mxu0 0.0
  %3114 = vmatmul.mubr.f32.gmra.mrb[0].mxu0 %v3038
  %v3115 = vpop.f32.mrb[0].mxu0
  %v3116 = vadd.f32 0.0, %v3115
  %v3117 = vpop.f32.mrb[0].mxu0
  %3118 = vmatprep.mubr.f32.mxu0 0.0
  %3119 = vmatmul.mubr.f32.gmra.mrb[0].mxu0 %v3041
  %v3120 = vpop.f32.mrb[0].mxu0
  %v3121 = vadd.f32 0.0, %v3120
  %v3122 = vpop.f32.mrb[0].mxu0
  %3123 = vmatprep.mubr.f32.mxu0 0.0
  %3124 = vmatmul.mubr.f32.gmra.mrb[0].mxu0 %v3044
  %v3125 = vpop.f32.mrb[0].mxu0
  %v3126 = vadd.f32 0.0, %v3125
  %v3127 = vpop.f32.mrb[0].mxu0
  %3128 = vmatprep.mubr.f32.mxu0 0.0
  %3129 = vmatmul.mubr.f32.gmra.mrb[0].mxu0 %v3047
  %v3130 = vpop.f32.mrb[0].mxu0
  %v3131 = vadd.f32 0.0, %v3130
  %v3132 = vpop.f32.mrb[0].mxu0
  %3133 = vdwg.mxu0
  %v3134 = vadd.f32 %v2941, %v3116
  %v3135 = vadd.f32 %v2942, %v3121
  %v3136 = vadd.f32 %v2943, %v3126
  %v3137 = vadd.f32 %v2944, %v3131
  %s3138 = scalar_lea.vmem %s4, 448
  %v3139 = vld [vmem:[%s3138] sm:$0xff]
  %v3140 = vld [vmem:[%s3138 + $0x8] sm:$0xff]
  %v3141 = vld [vmem:[%s3138 + $0x10] sm:$0xff]
  %v3142 = vld [vmem:[%s3138 + $0x18] sm:$0xff]
  %3143 = vmatprep.subr.mxu0 0.0
  %3144 = vmatpush1.msra.mxu0 %v430
  %3145 = vmatprep.subr.mxu0 0.0
  %3146 = vmatpush1.msra.mxu0 %v431
  %3147 = vmatprep.subr.mxu0 0.0
  %3148 = vmatpush1.msra.mxu0 %v432
  %3149 = vmatprep.subr.mxu0 0.0
  %3150 = vmatpush1.msra.mxu0 %v433
  %3151 = vmatprep.subr.mxu0 0.0
  %3152 = vmatpush1.msra.mxu0 %v434
  %3153 = vmatprep.subr.mxu0 0.0
  %3154 = vmatpush1.msra.mxu0 %v435
  %3155 = vmatprep.subr.mxu0 0.0
  %3156 = vmatpush1.msra.mxu0 %v436
  %3157 = vmatprep.subr.mxu0 0.0
  %3158 = vmatpush1.msra.mxu0 %v437
  %3159 = vmatprep.subr.mxu0 0.0
  %3160 = vmatpush1.msra.mxu0 %v438
  %3161 = vmatprep.subr.mxu0 0.0
  %3162 = vmatpush1.msra.mxu0 %v439
  %3163 = vmatprep.subr.mxu0 0.0
  %3164 = vmatpush1.msra.mxu0 %v440
  %3165 = vmatprep.subr.mxu0 0.0
  %3166 = vmatpush1.msra.mxu0 %v441
  %3167 = vmatprep.subr.mxu0 0.0
  %3168 = vmatpush1.msra.mxu0 %v442
  %3169 = vmatprep.subr.mxu0 0.0
  %3170 = vmatpush1.msra.mxu0 %v443
  %3171 = vmatprep.subr.mxu0 0.0
  %3172 = vmatpush1.msra.mxu0 %v444
  %3173 = vmatprep.subr.mxu0 0.0
  %3174 = vmatpush1.msra.mxu0 %v445
  %3175 = vmatprep.subr.mxu0 0.0
  %3176 = vmatpush1.msra.mxu0 0.0
  %3177 = vmatprep.subr.mxu0 0.0
  %3178 = vmatpush1.msra.mxu0 0.0
  %3179 = vmatprep.subr.mxu0 0.0
  %3180 = vmatpush1.msra.mxu0 0.0
  %3181 = vmatprep.subr.mxu0 0.0
  %3182 = vmatpush1.msra.mxu0 0.0
  %3183 = vmatprep.subr.mxu0 0.0
  %3184 = vmatpush1.msra.mxu0 0.0
  %3185 = vmatprep.subr.mxu0 0.0
  %3186 = vmatpush1.msra.mxu0 0.0
  %3187 = vmatprep.subr.mxu0 0.0
  %3188 = vmatpush1.msra.mxu0 0.0
  %3189 = vmatprep.subr.mxu0 0.0
  %3190 = vmatpush1.msra.mxu0 0.0
  %3191 = vmatprep.subr.mxu0 0.0
  %3192 = vmatpush1.msra.mxu0 0.0
  %3193 = vmatprep.subr.mxu0 0.0
  %3194 = vmatpush1.msra.mxu0 0.0
  %3195 = vmatprep.subr.mxu0 0.0
  %3196 = vmatpush1.msra.mxu0 0.0
  %3197 = vmatprep.subr.mxu0 0.0
  %3198 = vmatpush1.msra.mxu0 0.0
  %3199 = vmatprep.subr.mxu0 0.0
  %3200 = vmatpush1.msra.mxu0 0.0
  %3201 = vmatprep.subr.mxu0 0.0
  %3202 = vmatpush1.msra.mxu0 0.0
  %3203 = vmatprep.subr.mxu0 0.0
  %3204 = vmatpush1.msra.mxu0 0.0
  %3205 = vmatprep.subr.mxu0 0.0
  %3206 = vmatpush1.msra.mxu0 0.0
  %3207 = vmatprep.mubr.f32.mxu0 0.0
  %3208 = vmatmul.mubr.f32.gmra.mrb[0].mxu0 %v3139
  %v3209 = vpop.f32.mrb[0].mxu0
  %v3210 = vadd.f32 0.0, %v3209
  %v3211 = vpop.f32.mrb[0].mxu0
  %3212 = vmatprep.mubr.f32.mxu0 0.0
  %3213 = vmatmul.mubr.f32.gmra.mrb[0].mxu0 %v3140
  %v3214 = vpop.f32.mrb[0].mxu0
  %v3215 = vadd.f32 0.0, %v3214
  %v3216 = vpop.f32.mrb[0].mxu0
  %3217 = vmatprep.mubr.f32.mxu0 0.0
  %3218 = vmatmul.mubr.f32.gmra.mrb[0].mxu0 %v3141
  %v3219 = vpop.f32.mrb[0].mxu0
  %v3220 = vadd.f32 0.0, %v3219
  %v3221 = vpop.f32.mrb[0].mxu0
  %3222 = vmatprep.mubr.f32.mxu0 0.0
  %3223 = vmatmul.mubr.f32.gmra.mrb[0].mxu0 %v3142
  %v3224 = vpop.f32.mrb[0].mxu0
  %v3225 = vadd.f32 0.0, %v3224
  %v3226 = vpop.f32.mrb[0].mxu0
  %3227 = vdwg.mxu0
  %s3228 = scalar_lea.vmem %s5, 112
  %v3229 = vld [vmem:[%s3228] sm:$0xff]
  %v3231 = vsel %vm256, %v3210, 0
  %v3234 = vsel %vm256, %v3215, 0
  %v3237 = vsel %vm256, %v3220, 0
  %v3240 = vsel %vm256, %v3225, 0
  %3242 = vmatprep.subr.mxu0 0.0
  %3243 = vmatpush1.msra.mxu0 %v3229
  %3244 = vmatprep.subr.mxu0 0.0
  %3245 = vmatpush1.msra.mxu0 0.0
  %3246 = vmatprep.subr.mxu0 0.0
  %3247 = vmatpush1.msra.mxu0 0.0
  %3248 = vmatprep.subr.mxu0 0.0
  %3249 = vmatpush1.msra.mxu0 0.0
  %3250 = vmatprep.subr.mxu0 0.0
  %3251 = vmatpush1.msra.mxu0 0.0
  %3252 = vmatprep.subr.mxu0 0.0
  %3253 = vmatpush1.msra.mxu0 0.0
  %3254 = vmatprep.subr.mxu0 0.0
  %3255 = vmatpush1.msra.mxu0 0.0
  %3256 = vmatprep.subr.mxu0 0.0
  %3257 = vmatpush1.msra.mxu0 0.0
  %3258 = vmatprep.subr.mxu0 0.0
  %3259 = vmatpush1.msra.mxu0 0.0
  %3260 = vmatprep.subr.mxu0 0.0
  %3261 = vmatpush1.msra.mxu0 0.0
  %3262 = vmatprep.subr.mxu0 0.0
  %3263 = vmatpush1.msra.mxu0 0.0
  %3264 = vmatprep.subr.mxu0 0.0
  %3265 = vmatpush1.msra.mxu0 0.0
  %3266 = vmatprep.subr.mxu0 0.0
  %3267 = vmatpush1.msra.mxu0 0.0
  %3268 = vmatprep.subr.mxu0 0.0
  %3269 = vmatpush1.msra.mxu0 0.0
  %3270 = vmatprep.subr.mxu0 0.0
  %3271 = vmatpush1.msra.mxu0 0.0
  %3272 = vmatprep.subr.mxu0 0.0
  %3273 = vmatpush1.msra.mxu0 0.0
  %3274 = vmatprep.subr.mxu0 0.0
  %3275 = vmatpush1.msra.mxu0 0.0
  %3276 = vmatprep.subr.mxu0 0.0
  %3277 = vmatpush1.msra.mxu0 0.0
  %3278 = vmatprep.subr.mxu0 0.0
  %3279 = vmatpush1.msra.mxu0 0.0
  %3280 = vmatprep.subr.mxu0 0.0
  %3281 = vmatpush1.msra.mxu0 0.0
  %3282 = vmatprep.subr.mxu0 0.0
  %3283 = vmatpush1.msra.mxu0 0.0
  %3284 = vmatprep.subr.mxu0 0.0
  %3285 = vmatpush1.msra.mxu0 0.0
  %3286 = vmatprep.subr.mxu0 0.0
  %3287 = vmatpush1.msra.mxu0 0.0
  %3288 = vmatprep.subr.mxu0 0.0
  %3289 = vmatpush1.msra.mxu0 0.0
  %3290 = vmatprep.subr.mxu0 0.0
  %3291 = vmatpush1.msra.mxu0 0.0
  %3292 = vmatprep.subr.mxu0 0.0
  %3293 = vmatpush1.msra.mxu0 0.0
  %3294 = vmatprep.subr.mxu0 0.0
  %3295 = vmatpush1.msra.mxu0 0.0
  %3296 = vmatprep.subr.mxu0 0.0
  %3297 = vmatpush1.msra.mxu0 0.0
  %3298 = vmatprep.subr.mxu0 0.0
  %3299 = vmatpush1.msra.mxu0 0.0
  %3300 = vmatprep.subr.mxu0 0.0
  %3301 = vmatpush1.msra.mxu0 0.0
  %3302 = vmatprep.subr.mxu0 0.0
  %3303 = vmatpush1.msra.mxu0 0.0
  %3304 = vmatprep.subr.mxu0 0.0
  %3305 = vmatpush1.msra.mxu0 0.0
  %3306 = vmatprep.mubr.f32.mxu0 0.0
  %3307 = vmatmul.mubr.f32.gmra.mrb[0].mxu0 %v3231
  %v3308 = vpop.f32.mrb[0].mxu0
  %v3309 = vadd.f32 0.0, %v3308
  %v3310 = vpop.f32.mrb[0].mxu0
  %3311 = vmatprep.mubr.f32.mxu0 0.0
  %3312 = vmatmul.mubr.f32.gmra.mrb[0].mxu0 %v3234
  %v3313 = vpop.f32.mrb[0].mxu0
  %v3314 = vadd.f32 0.0, %v3313
  %v3315 = vpop.f32.mrb[0].mxu0
  %3316 = vmatprep.mubr.f32.mxu0 0.0
  %3317 = vmatmul.mubr.f32.gmra.mrb[0].mxu0 %v3237
  %v3318 = vpop.f32.mrb[0].mxu0
  %v3319 = vadd.f32 0.0, %v3318
  %v3320 = vpop.f32.mrb[0].mxu0
  %3321 = vmatprep.mubr.f32.mxu0 0.0
  %3322 = vmatmul.mubr.f32.gmra.mrb[0].mxu0 %v3240
  %v3323 = vpop.f32.mrb[0].mxu0
  %v3324 = vadd.f32 0.0, %v3323
  %v3325 = vpop.f32.mrb[0].mxu0
  %3326 = vdwg.mxu0
  %v3327 = vadd.f32 %v3134, %v3309
  %v3328 = vadd.f32 %v3135, %v3314
  %v3329 = vadd.f32 %v3136, %v3319
  %v3330 = vadd.f32 %v3137, %v3324
  %s3331 = scalar_lea.vmem %s4, 480
  %v3332 = vld [vmem:[%s3331] sm:$0xff]
  %v3333 = vld [vmem:[%s3331 + $0x8] sm:$0xff]
  %v3334 = vld [vmem:[%s3331 + $0x10] sm:$0xff]
  %v3335 = vld [vmem:[%s3331 + $0x18] sm:$0xff]
  %3336 = vmatprep.subr.mxu0 0.0
  %3337 = vmatpush1.msra.mxu0 %v430
  %3338 = vmatprep.subr.mxu0 0.0
  %3339 = vmatpush1.msra.mxu0 %v431
  %3340 = vmatprep.subr.mxu0 0.0
  %3341 = vmatpush1.msra.mxu0 %v432
  %3342 = vmatprep.subr.mxu0 0.0
  %3343 = vmatpush1.msra.mxu0 %v433
  %3344 = vmatprep.subr.mxu0 0.0
  %3345 = vmatpush1.msra.mxu0 %v434
  %3346 = vmatprep.subr.mxu0 0.0
  %3347 = vmatpush1.msra.mxu0 %v435
  %3348 = vmatprep.subr.mxu0 0.0
  %3349 = vmatpush1.msra.mxu0 %v436
  %3350 = vmatprep.subr.mxu0 0.0
  %3351 = vmatpush1.msra.mxu0 %v437
  %3352 = vmatprep.subr.mxu0 0.0
  %3353 = vmatpush1.msra.mxu0 %v438
  %3354 = vmatprep.subr.mxu0 0.0
  %3355 = vmatpush1.msra.mxu0 %v439
  %3356 = vmatprep.subr.mxu0 0.0
  %3357 = vmatpush1.msra.mxu0 %v440
  %3358 = vmatprep.subr.mxu0 0.0
  %3359 = vmatpush1.msra.mxu0 %v441
  %3360 = vmatprep.subr.mxu0 0.0
  %3361 = vmatpush1.msra.mxu0 %v442
  %3362 = vmatprep.subr.mxu0 0.0
  %3363 = vmatpush1.msra.mxu0 %v443
  %3364 = vmatprep.subr.mxu0 0.0
  %3365 = vmatpush1.msra.mxu0 %v444
  %3366 = vmatprep.subr.mxu0 0.0
  %3367 = vmatpush1.msra.mxu0 %v445
  %3368 = vmatprep.subr.mxu0 0.0
  %3369 = vmatpush1.msra.mxu0 0.0
  %3370 = vmatprep.subr.mxu0 0.0
  %3371 = vmatpush1.msra.mxu0 0.0
  %3372 = vmatprep.subr.mxu0 0.0
  %3373 = vmatpush1.msra.mxu0 0.0
  %3374 = vmatprep.subr.mxu0 0.0
  %3375 = vmatpush1.msra.mxu0 0.0
  %3376 = vmatprep.subr.mxu0 0.0
  %3377 = vmatpush1.msra.mxu0 0.0
  %3378 = vmatprep.subr.mxu0 0.0
  %3379 = vmatpush1.msra.mxu0 0.0
  %3380 = vmatprep.subr.mxu0 0.0
  %3381 = vmatpush1.msra.mxu0 0.0
  %3382 = vmatprep.subr.mxu0 0.0
  %3383 = vmatpush1.msra.mxu0 0.0
  %3384 = vmatprep.subr.mxu0 0.0
  %3385 = vmatpush1.msra.mxu0 0.0
  %3386 = vmatprep.subr.mxu0 0.0
  %3387 = vmatpush1.msra.mxu0 0.0
  %3388 = vmatprep.subr.mxu0 0.0
  %3389 = vmatpush1.msra.mxu0 0.0
  %3390 = vmatprep.subr.mxu0 0.0
  %3391 = vmatpush1.msra.mxu0 0.0
  %3392 = vmatprep.subr.mxu0 0.0
  %3393 = vmatpush1.msra.mxu0 0.0
  %3394 = vmatprep.subr.mxu0 0.0
  %3395 = vmatpush1.msra.mxu0 0.0
  %3396 = vmatprep.subr.mxu0 0.0
  %3397 = vmatpush1.msra.mxu0 0.0
  %3398 = vmatprep.subr.mxu0 0.0
  %3399 = vmatpush1.msra.mxu0 0.0
  %3400 = vmatprep.mubr.f32.mxu0 0.0
  %3401 = vmatmul.mubr.f32.gmra.mrb[0].mxu0 %v3332
  %v3402 = vpop.f32.mrb[0].mxu0
  %v3403 = vadd.f32 0.0, %v3402
  %v3404 = vpop.f32.mrb[0].mxu0
  %3405 = vmatprep.mubr.f32.mxu0 0.0
  %3406 = vmatmul.mubr.f32.gmra.mrb[0].mxu0 %v3333
  %v3407 = vpop.f32.mrb[0].mxu0
  %v3408 = vadd.f32 0.0, %v3407
  %v3409 = vpop.f32.mrb[0].mxu0
  %3410 = vmatprep.mubr.f32.mxu0 0.0
  %3411 = vmatmul.mubr.f32.gmra.mrb[0].mxu0 %v3334
  %v3412 = vpop.f32.mrb[0].mxu0
  %v3413 = vadd.f32 0.0, %v3412
  %v3414 = vpop.f32.mrb[0].mxu0
  %3415 = vmatprep.mubr.f32.mxu0 0.0
  %3416 = vmatmul.mubr.f32.gmra.mrb[0].mxu0 %v3335
  %v3417 = vpop.f32.mrb[0].mxu0
  %v3418 = vadd.f32 0.0, %v3417
  %v3419 = vpop.f32.mrb[0].mxu0
  %3420 = vdwg.mxu0
  %s3421 = scalar_lea.vmem %s5, 120
  %v3422 = vld [vmem:[%s3421] sm:$0xff]
  %v3424 = vsel %vm256, %v3403, 0
  %v3427 = vsel %vm256, %v3408, 0
  %v3430 = vsel %vm256, %v3413, 0
  %v3433 = vsel %vm256, %v3418, 0
  %3435 = vmatprep.subr.mxu0 0.0
  %3436 = vmatpush1.msra.mxu0 %v3422
  %3437 = vmatprep.subr.mxu0 0.0
  %3438 = vmatpush1.msra.mxu0 0.0
  %3439 = vmatprep.subr.mxu0 0.0
  %3440 = vmatpush1.msra.mxu0 0.0
  %3441 = vmatprep.subr.mxu0 0.0
  %3442 = vmatpush1.msra.mxu0 0.0
  %3443 = vmatprep.subr.mxu0 0.0
  %3444 = vmatpush1.msra.mxu0 0.0
  %3445 = vmatprep.subr.mxu0 0.0
  %3446 = vmatpush1.msra.mxu0 0.0
  %3447 = vmatprep.subr.mxu0 0.0
  %3448 = vmatpush1.msra.mxu0 0.0
  %3449 = vmatprep.subr.mxu0 0.0
  %3450 = vmatpush1.msra.mxu0 0.0
  %3451 = vmatprep.subr.mxu0 0.0
  %3452 = vmatpush1.msra.mxu0 0.0
  %3453 = vmatprep.subr.mxu0 0.0
  %3454 = vmatpush1.msra.mxu0 0.0
  %3455 = vmatprep.subr.mxu0 0.0
  %3456 = vmatpush1.msra.mxu0 0.0
  %3457 = vmatprep.subr.mxu0 0.0
  %3458 = vmatpush1.msra.mxu0 0.0
  %3459 = vmatprep.subr.mxu0 0.0
  %3460 = vmatpush1.msra.mxu0 0.0
  %3461 = vmatprep.subr.mxu0 0.0
  %3462 = vmatpush1.msra.mxu0 0.0
  %3463 = vmatprep.subr.mxu0 0.0
  %3464 = vmatpush1.msra.mxu0 0.0
  %3465 = vmatprep.subr.mxu0 0.0
  %3466 = vmatpush1.msra.mxu0 0.0
  %3467 = vmatprep.subr.mxu0 0.0
  %3468 = vmatpush1.msra.mxu0 0.0
  %3469 = vmatprep.subr.mxu0 0.0
  %3470 = vmatpush1.msra.mxu0 0.0
  %3471 = vmatprep.subr.mxu0 0.0
  %3472 = vmatpush1.msra.mxu0 0.0
  %3473 = vmatprep.subr.mxu0 0.0
  %3474 = vmatpush1.msra.mxu0 0.0
  %3475 = vmatprep.subr.mxu0 0.0
  %3476 = vmatpush1.msra.mxu0 0.0
  %3477 = vmatprep.subr.mxu0 0.0
  %3478 = vmatpush1.msra.mxu0 0.0
  %3479 = vmatprep.subr.mxu0 0.0
  %3480 = vmatpush1.msra.mxu0 0.0
  %3481 = vmatprep.subr.mxu0 0.0
  %3482 = vmatpush1.msra.mxu0 0.0
  %3483 = vmatprep.subr.mxu0 0.0
  %3484 = vmatpush1.msra.mxu0 0.0
  %3485 = vmatprep.subr.mxu0 0.0
  %3486 = vmatpush1.msra.mxu0 0.0
  %3487 = vmatprep.subr.mxu0 0.0
  %3488 = vmatpush1.msra.mxu0 0.0
  %3489 = vmatprep.subr.mxu0 0.0
  %3490 = vmatpush1.msra.mxu0 0.0
  %3491 = vmatprep.subr.mxu0 0.0
  %3492 = vmatpush1.msra.mxu0 0.0
  %3493 = vmatprep.subr.mxu0 0.0
  %3494 = vmatpush1.msra.mxu0 0.0
  %3495 = vmatprep.subr.mxu0 0.0
  %3496 = vmatpush1.msra.mxu0 0.0
  %3497 = vmatprep.subr.mxu0 0.0
  %3498 = vmatpush1.msra.mxu0 0.0
  %3499 = vmatprep.mubr.f32.mxu0 0.0
  %3500 = vmatmul.mubr.f32.gmra.mrb[0].mxu0 %v3424
  %v3501 = vpop.f32.mrb[0].mxu0
  %v3502 = vadd.f32 0.0, %v3501
  %v3503 = vpop.f32.mrb[0].mxu0
  %3504 = vmatprep.mubr.f32.mxu0 0.0
  %3505 = vmatmul.mubr.f32.gmra.mrb[0].mxu0 %v3427
  %v3506 = vpop.f32.mrb[0].mxu0
  %v3507 = vadd.f32 0.0, %v3506
  %v3508 = vpop.f32.mrb[0].mxu0
  %3509 = vmatprep.mubr.f32.mxu0 0.0
  %3510 = vmatmul.mubr.f32.gmra.mrb[0].mxu0 %v3430
  %v3511 = vpop.f32.mrb[0].mxu0
  %v3512 = vadd.f32 0.0, %v3511
  %v3513 = vpop.f32.mrb[0].mxu0
  %3514 = vmatprep.mubr.f32.mxu0 0.0
  %3515 = vmatmul.mubr.f32.gmra.mrb[0].mxu0 %v3433
  %v3516 = vpop.f32.mrb[0].mxu0
  %v3517 = vadd.f32 0.0, %v3516
  %v3518 = vpop.f32.mrb[0].mxu0
  %3519 = vdwg.mxu0
  %v3520 = vadd.f32 %v3327, %v3502
  %v3521 = vadd.f32 %v3328, %v3507
  %v3522 = vadd.f32 %v3329, %v3512
  %v3523 = vadd.f32 %v3330, %v3517
  %vm3524 = vcmask 130048
  %v3525 = vsel %vm3524, %v3520, 0.0
  %v3526 = vsel %vm3524, %v3521, 0.0
  %v3527 = vadd.f32 %v3525, %v3526
  %v3528 = vsel %vm3524, %v3522, 0.0
  %v3529 = vadd.f32 %v3527, %v3528
  %v3530 = vsel %vm3524, %v3523, 0.0
  %v3531 = vadd.f32 %v3529, %v3530
  %v3532 = vrot.slane %v3531, 4
  %v3533 = vadd.f32 %v3531, %v3532
  %v3534 = vrot.slane %v3533, 2
  %v3535 = vadd.f32 %v3533, %v3534
  %v3536 = vrot.slane %v3535, 1
  %v3537 = vadd.f32 %v3535, %v3536
  %v3538 = vrcp.pop 32.0
  %v3539 = vmul.f32 %v3537, %v3538
  %v3540 = vsub.f32 %v3520, %v3539
  %v3541 = vsub.f32 %v3521, %v3539
  %v3542 = vsub.f32 %v3522, %v3539
  %v3543 = vsub.f32 %v3523, %v3539
  %v3544 = vmul.f32 %v3540, %v3540
  %v3545 = vmul.f32 %v3541, %v3541
  %v3546 = vmul.f32 %v3542, %v3542
  %v3547 = vmul.f32 %v3543, %v3543
  %v3548 = vsel %vm3524, %v3544, 0.0
  %v3549 = vsel %vm3524, %v3545, 0.0
  %v3550 = vadd.f32 %v3548, %v3549
  %v3551 = vsel %vm3524, %v3546, 0.0
  %v3552 = vadd.f32 %v3550, %v3551
  %v3553 = vsel %vm3524, %v3547, 0.0
  %v3554 = vadd.f32 %v3552, %v3553
  %v3555 = vrot.slane %v3554, 4
  %v3556 = vadd.f32 %v3554, %v3555
  %v3557 = vrot.slane %v3556, 2
  %v3558 = vadd.f32 %v3556, %v3557
  %v3559 = vrot.slane %v3558, 1
  %v3560 = vadd.f32 %v3558, %v3559
  %v3561 = vmul.f32 %v3560, %v3538
  %v3562 = vadd.f32 %v3561, 1e-05
  %v3563 = vrsqrt.pop %v3562
  %v3564 = vmul.f32 %v3540, %v3563
  %v3565 = vmul.f32 %v3541, %v3563
  %v3566 = vmul.f32 %v3542, %v3563
  %v3567 = vmul.f32 %v3543, %v3563
  %v3568 = vld [vmem:[%s6] sm:$0x1]
  %v3570 = vlaneseq
  %v3571 = vshrl.u32 %v3570, 7
  %v3572 = vsub.s32 0, %v3571
  %v3573 = vrot.slane %v3568, %v3572
  %v3575 = vmul.f32 %v3564, %v3573
  %v3576 = vmul.f32 %v3565, %v3573
  %v3577 = vmul.f32 %v3566, %v3573
  %v3578 = vmul.f32 %v3567, %v3573
  %v3579 = vld [vmem:[%s7] sm:$0x1]
  %v3581 = vlaneseq
  %v3582 = vshrl.u32 %v3581, 7
  %v3583 = vsub.s32 0, %v3582
  %v3584 = vrot.slane %v3579, %v3583
  %v3586 = vadd.f32 %v3575, %v3584
  %v3587 = vadd.f32 %v3576, %v3584
  %v3588 = vadd.f32 %v3577, %v3584
  %v3589 = vadd.f32 %v3578, %v3584
  %v3590 = vmax.f32 %v3586, 0.0
  %v3591 = vmax.f32 %v3587, 0.0
  %v3592 = vmax.f32 %v3588, 0.0
  %v3593 = vmax.f32 %v3589, 0.0
  %v3594 = vld [vmem:[%s8] sm:$0x3]
  %vm3595 = vcmask 261120
  %v3597 = vsel %vm3595, %v3594, 0
  %3599 = vmatprep.subr.mxu0 0.0
  %3600 = vmatpush1.msra.mxu0 %v3590
  %3601 = vmatprep.subr.mxu0 0.0
  %3602 = vmatpush1.msra.mxu0 %v3591
  %3603 = vmatprep.subr.mxu0 0.0
  %3604 = vmatpush1.msra.mxu0 %v3592
  %3605 = vmatprep.subr.mxu0 0.0
  %3606 = vmatpush1.msra.mxu0 %v3593
  %3607 = vmatprep.subr.mxu0 0.0
  %3608 = vmatpush1.msra.mxu0 0.0
  %3609 = vmatprep.subr.mxu0 0.0
  %3610 = vmatpush1.msra.mxu0 0.0
  %3611 = vmatprep.subr.mxu0 0.0
  %3612 = vmatpush1.msra.mxu0 0.0
  %3613 = vmatprep.subr.mxu0 0.0
  %3614 = vmatpush1.msra.mxu0 0.0
  %3615 = vmatprep.subr.mxu0 0.0
  %3616 = vmatpush1.msra.mxu0 0.0
  %3617 = vmatprep.subr.mxu0 0.0
  %3618 = vmatpush1.msra.mxu0 0.0
  %3619 = vmatprep.subr.mxu0 0.0
  %3620 = vmatpush1.msra.mxu0 0.0
  %3621 = vmatprep.subr.mxu0 0.0
  %3622 = vmatpush1.msra.mxu0 0.0
  %3623 = vmatprep.subr.mxu0 0.0
  %3624 = vmatpush1.msra.mxu0 0.0
  %3625 = vmatprep.subr.mxu0 0.0
  %3626 = vmatpush1.msra.mxu0 0.0
  %3627 = vmatprep.subr.mxu0 0.0
  %3628 = vmatpush1.msra.mxu0 0.0
  %3629 = vmatprep.subr.mxu0 0.0
  %3630 = vmatpush1.msra.mxu0 0.0
  %3631 = vmatprep.subr.mxu0 0.0
  %3632 = vmatpush1.msra.mxu0 0.0
  %3633 = vmatprep.subr.mxu0 0.0
  %3634 = vmatpush1.msra.mxu0 0.0
  %3635 = vmatprep.subr.mxu0 0.0
  %3636 = vmatpush1.msra.mxu0 0.0
  %3637 = vmatprep.subr.mxu0 0.0
  %3638 = vmatpush1.msra.mxu0 0.0
  %3639 = vmatprep.subr.mxu0 0.0
  %3640 = vmatpush1.msra.mxu0 0.0
  %3641 = vmatprep.subr.mxu0 0.0
  %3642 = vmatpush1.msra.mxu0 0.0
  %3643 = vmatprep.subr.mxu0 0.0
  %3644 = vmatpush1.msra.mxu0 0.0
  %3645 = vmatprep.subr.mxu0 0.0
  %3646 = vmatpush1.msra.mxu0 0.0
  %3647 = vmatprep.subr.mxu0 0.0
  %3648 = vmatpush1.msra.mxu0 0.0
  %3649 = vmatprep.subr.mxu0 0.0
  %3650 = vmatpush1.msra.mxu0 0.0
  %3651 = vmatprep.subr.mxu0 0.0
  %3652 = vmatpush1.msra.mxu0 0.0
  %3653 = vmatprep.subr.mxu0 0.0
  %3654 = vmatpush1.msra.mxu0 0.0
  %3655 = vmatprep.subr.mxu0 0.0
  %3656 = vmatpush1.msra.mxu0 0.0
  %3657 = vmatprep.subr.mxu0 0.0
  %3658 = vmatpush1.msra.mxu0 0.0
  %3659 = vmatprep.subr.mxu0 0.0
  %3660 = vmatpush1.msra.mxu0 0.0
  %3661 = vmatprep.subr.mxu0 0.0
  %3662 = vmatpush1.msra.mxu0 0.0
  %3663 = vmatprep.mubr.f32.mxu0 0.0
  %3664 = vmatmul.mubr.f32.gmra.mrb[0].mxu0 %v3597
  %v3665 = vpop.f32.mrb[0].mxu0
  %v3666 = vadd.f32 0.0, %v3665
  %v3667 = vpop.f32.mrb[0].mxu0
  %3668 = vdwg.mxu0
  %v3669 = vld [vmem:[%s9] sm:$0xff]
  %v3670 = vld [vmem:[%s9 + $0x8] sm:$0xff]
  %v3671 = vld [vmem:[%s10] sm:$0x1]
  %v3673 = vlaneseq
  %v3674 = vshrl.u32 %v3673, 7
  %v3675 = vsub.s32 0, %v3674
  %v3676 = vrot.slane %v3671, %v3675
  %v3679 = vsel %vm3524, %v3666, 0
  %3681 = vmatprep.subr.mxu0 0.0
  %3682 = vmatpush1.msra.mxu0 %v3669
  %3683 = vmatprep.subr.mxu0 0.0
  %3684 = vmatpush1.msra.mxu0 %v3670
  %3685 = vmatprep.subr.mxu0 0.0
  %3686 = vmatpush1.msra.mxu0 0.0
  %3687 = vmatprep.subr.mxu0 0.0
  %3688 = vmatpush1.msra.mxu0 0.0
  %3689 = vmatprep.subr.mxu0 0.0
  %3690 = vmatpush1.msra.mxu0 0.0
  %3691 = vmatprep.subr.mxu0 0.0
  %3692 = vmatpush1.msra.mxu0 0.0
  %3693 = vmatprep.subr.mxu0 0.0
  %3694 = vmatpush1.msra.mxu0 0.0
  %3695 = vmatprep.subr.mxu0 0.0
  %3696 = vmatpush1.msra.mxu0 0.0
  %3697 = vmatprep.subr.mxu0 0.0
  %3698 = vmatpush1.msra.mxu0 0.0
  %3699 = vmatprep.subr.mxu0 0.0
  %3700 = vmatpush1.msra.mxu0 0.0
  %3701 = vmatprep.subr.mxu0 0.0
  %3702 = vmatpush1.msra.mxu0 0.0
  %3703 = vmatprep.subr.mxu0 0.0
  %3704 = vmatpush1.msra.mxu0 0.0
  %3705 = vmatprep.subr.mxu0 0.0
  %3706 = vmatpush1.msra.mxu0 0.0
  %3707 = vmatprep.subr.mxu0 0.0
  %3708 = vmatpush1.msra.mxu0 0.0
  %3709 = vmatprep.subr.mxu0 0.0
  %3710 = vmatpush1.msra.mxu0 0.0
  %3711 = vmatprep.subr.mxu0 0.0
  %3712 = vmatpush1.msra.mxu0 0.0
  %3713 = vmatprep.subr.mxu0 0.0
  %3714 = vmatpush1.msra.mxu0 0.0
  %3715 = vmatprep.subr.mxu0 0.0
  %3716 = vmatpush1.msra.mxu0 0.0
  %3717 = vmatprep.subr.mxu0 0.0
  %3718 = vmatpush1.msra.mxu0 0.0
  %3719 = vmatprep.subr.mxu0 0.0
  %3720 = vmatpush1.msra.mxu0 0.0
  %3721 = vmatprep.subr.mxu0 0.0
  %3722 = vmatpush1.msra.mxu0 0.0
  %3723 = vmatprep.subr.mxu0 0.0
  %3724 = vmatpush1.msra.mxu0 0.0
  %3725 = vmatprep.subr.mxu0 0.0
  %3726 = vmatpush1.msra.mxu0 0.0
  %3727 = vmatprep.subr.mxu0 0.0
  %3728 = vmatpush1.msra.mxu0 0.0
  %3729 = vmatprep.subr.mxu0 0.0
  %3730 = vmatpush1.msra.mxu0 0.0
  %3731 = vmatprep.subr.mxu0 0.0
  %3732 = vmatpush1.msra.mxu0 0.0
  %3733 = vmatprep.subr.mxu0 0.0
  %3734 = vmatpush1.msra.mxu0 0.0
  %3735 = vmatprep.subr.mxu0 0.0
  %3736 = vmatpush1.msra.mxu0 0.0
  %3737 = vmatprep.subr.mxu0 0.0
  %3738 = vmatpush1.msra.mxu0 0.0
  %3739 = vmatprep.subr.mxu0 0.0
  %3740 = vmatpush1.msra.mxu0 0.0
  %3741 = vmatprep.subr.mxu0 0.0
  %3742 = vmatpush1.msra.mxu0 0.0
  %3743 = vmatprep.subr.mxu0 0.0
  %3744 = vmatpush1.msra.mxu0 0.0
  %3745 = vmatprep.mubr.f32.mxu0 0.0
  %3746 = vmatmul.mubr.f32.gmra.mrb[0].mxu0 %v3679
  %v3747 = vpop.f32.mrb[0].mxu0
  %v3748 = vadd.f32 %v3676, %v3747
  %v3749 = vpop.f32.mrb[0].mxu0
  %3750 = vdwg.mxu0
  %3751 = vst [vmem:[%s11] sm:$0x3] %v3748
  // Predicated region
  $region46: #{priori_forward.1} parent=0 // pred_check
    _
  $region47: #{priori_forward.1} parent=0 // pred_check_branch
    %3753 = sbr.rel (0) target = $region49
  $region48: #{priori_forward.1} parent=0 // pred_region
    _
  $region49: #{priori_forward.1} parent=0 // pred_fallthru
    _
  // Predicated region
  $region50: #{priori_forward.1} parent=0 // pred_check
    _
  $region51: #{priori_forward.1} parent=0 // pred_check_branch
    %3755 = sbr.rel (0) target = $region53
  $region52: #{priori_forward.1} parent=0 // pred_region
    _
  $region53: #{priori_forward.1} parent=0 // pred_fallthru
    _

</llo_original>
